<compile_context>
chip_gen: v7x
topology: tpu7x:2x2x1
jax: 0.10.0
libtpu: 0.0.40
codegen_flags: <defaults>
</compile_context>

<pallas_src>
import functools

import jax
import jax.numpy as jnp
from jax.experimental import pallas as pl
from jax.experimental.pallas import tpu as pltpu


def _round_up(a, b):
    return ((a + b - 1) // b) * b


def _make_mlp_kernel(num_layers, chunk):
    """Kernel closure: pointwise MLP over a lane-dense (1, TN) tile, chunked on lanes."""

    def kernel(x_ref, *refs):
        # refs = (w1, b1, w2, b2, ..., wL, bL, out_ref)
        out_ref = refs[-1]
        prefs = refs[:-1]
        num_chunks = x_ref.shape[1] // chunk          # static

        # Hoist the (tiny) parameter loads out of the chunk loop.
        ws = [prefs[2 * li][...] for li in range(num_layers)]
        bs = [prefs[2 * li + 1][...] for li in range(num_layers)]

        def process(c):
            off = pl.multiple_of(c * chunk, chunk)
            xv = x_ref[:, pl.ds(off, chunk)]                        # (1, C) lane-dense
            if num_layers == 1:
                y = ws[0] * xv + bs[0]                              # degenerate 1->1 MLP
            else:
                # First Linear (in_features == 1): VPU broadcast-FMA, no MXU.
                h = jnp.maximum(ws[0] * xv + bs[0], 0.0)            # (H1, C)
                # Middle HxH Linears: MXU.
                for li in range(1, num_layers - 1):
                    h = jnp.dot(ws[li], h,
                                preferred_element_type=jnp.float32,
                                precision=jax.lax.Precision.HIGHEST) + bs[li]
                    h = jnp.maximum(h, 0.0)                         # (H_li, C)
                # Last Linear (out_features == 1): weighted sublane reduction (VPU+XLU).
                y = jnp.sum(h * ws[-1], axis=0, keepdims=True) + bs[-1]   # (1, C)
            out_ref[:, pl.ds(off, chunk)] = y.astype(out_ref.dtype)

        if num_chunks == 1:
            process(0)
        else:
            @pl.loop(0, num_chunks)
            def _(c):
                process(c)

    return kernel


@functools.partial(jax.jit, static_argnames=("tn", "chunk"))
def _value_layer_pallas_flat(x2d, flat_params, *, tn, chunk):
    """x2d: (1, N_pad) f32 with N_pad % tn == 0.  flat_params: (w1, b1, ..., wL, bL)."""
    n_pad = x2d.shape[1]
    num_layers = len(flat_params) // 2
    kernel = _make_mlp_kernel(num_layers, chunk)

    # Params are tiny: full-array blocks with a constant block index -> DMA'd only once
    # (block index never changes across grid steps), no per-step re-fetch.
    param_specs = [pl.BlockSpec(p.shape, lambda i: (0, 0)) for p in flat_params]

    return pl.pallas_call(
        kernel,
        out_shape=jax.ShapeDtypeStruct((1, n_pad), jnp.float32),
        grid_spec=pltpu.PrefetchScalarGridSpec(
            num_scalar_prefetch=0,
            grid=(n_pad // tn,),
            in_specs=[pl.BlockSpec((1, tn), lambda i: (0, i))] + param_specs,
            out_specs=pl.BlockSpec((1, tn), lambda i: (0, i)),
        ),
        compiler_params=pltpu.CompilerParams(
            dimension_semantics=("parallel",)),   # megacore/2-TC shardable (v7x)
    )(x2d, *flat_params)


def _to_kernel_params(params):
    """(W(in,out), b(1,out)) pairs -> kernel layout.

    First/middle layers: W as (out, in), b as (out, 1)   (hidden dim on sublanes).
    Last layer:          W as (in, 1),  b as (1, 1)      (weighted sublane sum).
    """
    num_layers = len(params)
    flat = []
    for li, (w, b) in enumerate(params):
        w = jnp.asarray(w, jnp.float32)
        b = jnp.asarray(b, jnp.float32)
        if num_layers > 1 and li == num_layers - 1:
            flat.append(w.reshape(-1, 1))
            flat.append(b.reshape(1, 1))
        else:
            flat.append(w.T)
            flat.append(b.reshape(-1, 1))
    return flat


def init_value_layer_params(key, mlp_layers):
    """Deterministic init mimicking nn.Linear default (uniform +-1/sqrt(fan_in)).

    Returns list of (W, b) with W in (in, out) layout, b in (1, out)."""
    assert mlp_layers[0] == 1 and mlp_layers[-1] == 1
    params = []
    in_c = mlp_layers[0]
    for out_c in mlp_layers[1:]:
        key, kw, kb = jax.random.split(key, 3)
        bound = 1.0 / jnp.sqrt(jnp.float32(in_c))
        w = jax.random.uniform(kw, (in_c, out_c), jnp.float32, -bound, bound)
        b = jax.random.uniform(kb, (1, out_c), jnp.float32, -bound, bound)
        params.append((w, b))
        in_c = out_c
    return params


def value_layer_forward(x, params, *, tn=131072, chunk=4096, use_pallas=True):
    """Pallas implementation of ValueLayer.forward.

    x: arbitrary-shaped float array of timestamps.
    params: list of (W(in,out), b(1,out)) pairs.
    Returns: MLP applied pointwise, with all size-1 dims squeezed (torch .squeeze()).
    In production, small inputs (N < ~1e6) should use `use_pallas=False`
    (XLA fused elementwise beats any kernel-launch overhead at that size).
    """
    orig_shape = x.shape
    x_flat = jnp.reshape(x, (-1,)).astype(jnp.float32)
    n = x_flat.shape[0]

    if use_pallas:
        # Lane-dense tiling; shrink chunk / tile to what the problem actually needs.
        chunk_eff = max(128, _round_up(min(chunk, _round_up(n, 128)), 128))
        tn_eff = max(chunk_eff,
                     min(_round_up(tn, chunk_eff), _round_up(n, chunk_eff)))
        n_pad = _round_up(n, tn_eff)
        if n_pad != n:
            # Padded tail produces bias-derived garbage; it is sliced off below.
            x_flat = jnp.pad(x_flat, (0, n_pad - n))
        x2d = x_flat.reshape(1, n_pad)

        flat_params = tuple(_to_kernel_params(params))
        out2d = _value_layer_pallas_flat(x2d, flat_params,
                                         tn=int(tn_eff), chunk=int(chunk_eff))
        out_flat = out2d[0, :n]
    else:
        out_flat = _mlp_ref_flat(x_flat, params)

    out = out_flat.reshape(orig_shape)
    squeeze_axes = tuple(i for i, s in enumerate(out.shape) if s == 1)
    if squeeze_axes:
        out = jnp.squeeze(out, axis=squeeze_axes)
    return out


def _mlp_ref_flat(x_flat, params):
    h = x_flat.reshape(-1, 1)
    for li, (w, b) in enumerate(params):
        h = jnp.dot(h, w, precision=jax.lax.Precision.HIGHEST) + b
        if li < len(params) - 1:
            h = jnp.maximum(h, 0.0)
    return h.reshape(-1)


def value_layer_reference(x, params):
    """Plain-JAX reference of the same forward pass."""
    out = _mlp_ref_flat(jnp.reshape(x, (-1,)).astype(jnp.float32), params)
    out = out.reshape(x.shape)
    squeeze_axes = tuple(i for i, s in enumerate(out.shape) if s == 1)
    if squeeze_axes:
        out = jnp.squeeze(out, axis=squeeze_axes)
    return out


if __name__ == "__main__":
    key = jax.random.PRNGKey(0)
    k_param, k_x, k_x2 = jax.random.split(key, 3)

    # MLP consistent with the module: first=1, last=1, hidden layers.
    mlp_layers = [1, 32, 32, 1]
    params = init_value_layer_params(k_param, mlp_layers)

    # Timestamps like the module sees during init: shape (1, 2048), values in [-1, 1].
    x = jax.random.uniform(k_x, (1, 2048), jnp.float32, -1.0, 1.0)
    out = value_layer_forward(x, params)
    out = jax.block_until_ready(out)
    ref = value_layer_reference(x, params)
    assert out.shape == ref.shape == (2048,)
    assert jnp.allclose(out, ref, atol=2e-5, rtol=2e-5)

    # Second (still small) case exercising the multi-step grid + in-kernel chunk loop.
    x2 = jax.random.uniform(k_x2, (4, 4096), jnp.float32, -1.0, 1.0)
    out2 = value_layer_forward(x2, params, tn=8192, chunk=2048)
    out2 = jax.block_until_ready(out2)
    ref2 = value_layer_reference(x2, params)
    assert out2.shape == ref2.shape == (4, 4096)
    assert jnp.allclose(out2, ref2, atol=2e-5, rtol=2e-5)

    print("KERNEL_OK")
</pallas_src>

<mosaic_0001>
module attributes {stable_mosaic.version = 11 : i64} {
  func.func @kernel(%arg0: i32, %arg1: memref<1x2048xf32, #tpu.memory_space<vmem>>, %arg2: memref<32x1xf32, #tpu.memory_space<vmem>>, %arg3: memref<32x1xf32, #tpu.memory_space<vmem>>, %arg4: memref<32x32xf32, #tpu.memory_space<vmem>>, %arg5: memref<32x1xf32, #tpu.memory_space<vmem>>, %arg6: memref<32x1xf32, #tpu.memory_space<vmem>>, %arg7: memref<1x1xf32, #tpu.memory_space<vmem>>, %arg8: memref<1x2048xf32, #tpu.memory_space<vmem>>) attributes {dimension_semantics = [#tpu.dimension_semantics<parallel>], iteration_bounds = array<i64: 1>, scalar_prefetch = 0 : i64, scratch_operands = 0 : i64, tpu.core_type = #tpu.core_type<tc>, window_params = [{transform_indices = @transform_0, window_bounds = array<i64: 1, 2048>}, {pipeline_mode = #tpu.pipeline_mode<synchronous>, transform_indices = @transform_1, window_bounds = array<i64: 32, 1>}, {pipeline_mode = #tpu.pipeline_mode<synchronous>, transform_indices = @transform_2, window_bounds = array<i64: 32, 1>}, {pipeline_mode = #tpu.pipeline_mode<synchronous>, transform_indices = @transform_3, window_bounds = array<i64: 32, 32>}, {pipeline_mode = #tpu.pipeline_mode<synchronous>, transform_indices = @transform_4, window_bounds = array<i64: 32, 1>}, {pipeline_mode = #tpu.pipeline_mode<synchronous>, transform_indices = @transform_5, window_bounds = array<i64: 32, 1>}, {pipeline_mode = #tpu.pipeline_mode<synchronous>, transform_indices = @transform_6, window_bounds = array<i64: 1, 1>}, {transform_indices = @transform_7, window_bounds = array<i64: 1, 2048>}]} {
    %c0 = arith.constant 0 : index
    %c0_0 = arith.constant 0 : index
    %0 = vector.load %arg2[%c0, %c0_0] : memref<32x1xf32, #tpu.memory_space<vmem>>, vector<32x1xf32>
    %c0_1 = arith.constant 0 : index
    %c0_2 = arith.constant 0 : index
    %1 = vector.load %arg4[%c0_1, %c0_2] : memref<32x32xf32, #tpu.memory_space<vmem>>, vector<32x32xf32>
    %c0_3 = arith.constant 0 : index
    %c0_4 = arith.constant 0 : index
    %2 = vector.load %arg6[%c0_3, %c0_4] : memref<32x1xf32, #tpu.memory_space<vmem>>, vector<32x1xf32>
    %c0_5 = arith.constant 0 : index
    %c0_6 = arith.constant 0 : index
    %3 = vector.load %arg3[%c0_5, %c0_6] : memref<32x1xf32, #tpu.memory_space<vmem>>, vector<32x1xf32>
    %c0_7 = arith.constant 0 : index
    %c0_8 = arith.constant 0 : index
    %4 = vector.load %arg5[%c0_7, %c0_8] : memref<32x1xf32, #tpu.memory_space<vmem>>, vector<32x1xf32>
    %c0_9 = arith.constant 0 : index
    %c0_10 = arith.constant 0 : index
    %5 = vector.load %arg7[%c0_9, %c0_10] : memref<1x1xf32, #tpu.memory_space<vmem>>, vector<1x1xf32>
    %c0_i32 = arith.constant 0 : i32
    %6 = tpu.assume_multiple %c0_i32, 2048 : i32
    %c0_11 = arith.constant 0 : index
    %7 = arith.index_cast %6 : i32 to index
    %8 = vector.load %arg1[%c0_11, %7] : memref<1x2048xf32, #tpu.memory_space<vmem>>, vector<1x2048xf32>
    %9 = vector.broadcast %0 : vector<32x1xf32> to vector<32x2048xf32>
    %10 = vector.broadcast %8 : vector<1x2048xf32> to vector<32x2048xf32>
    %11 = arith.mulf %9, %10 : vector<32x2048xf32>
    %12 = vector.broadcast %3 : vector<32x1xf32> to vector<32x2048xf32>
    %13 = arith.addf %11, %12 : vector<32x2048xf32>
    %cst = arith.constant 0.000000e+00 : f32
    %14 = vector.broadcast %cst : f32 to vector<32x2048xf32>
    %15 = arith.maximumf %13, %14 : vector<32x2048xf32>
    %cst_12 = arith.constant dense<0.000000e+00> : vector<32x2048xf32>
    %16 = tpu.matmul %1, %15, %cst_12 {dimension_numbers = #tpu.dot_dimension_numbers<[1], [0], [0], [1], [0, 0, 1, 1], [], []>, precision = #tpu.contract_precision<fp32>} : vector<32x32xf32>, vector<32x2048xf32>, vector<32x2048xf32> -> vector<32x2048xf32>
    %17 = vector.broadcast %4 : vector<32x1xf32> to vector<32x2048xf32>
    %18 = arith.addf %16, %17 : vector<32x2048xf32>
    %cst_13 = arith.constant 0.000000e+00 : f32
    %19 = vector.broadcast %cst_13 : f32 to vector<32x2048xf32>
    %20 = arith.maximumf %18, %19 : vector<32x2048xf32>
    %21 = vector.broadcast %2 : vector<32x1xf32> to vector<32x2048xf32>
    %22 = arith.mulf %20, %21 : vector<32x2048xf32>
    %cst_14 = arith.constant dense<0.000000e+00> : vector<2048xf32>
    %23 = vector.multi_reduction <add>, %22, %cst_14 [0] : vector<32x2048xf32> to vector<2048xf32>
    %24 = vector.shape_cast %23 : vector<2048xf32> to vector<1x2048xf32>
    %25 = vector.broadcast %5 : vector<1x1xf32> to vector<1x2048xf32>
    %26 = arith.addf %24, %25 : vector<1x2048xf32>
    %c0_15 = arith.constant 0 : index
    %27 = arith.index_cast %6 : i32 to index
    %28 = vector.load %arg8[%c0_15, %27] : memref<1x2048xf32, #tpu.memory_space<vmem>>, vector<1x2048xf32>
    tpu.vector_store %arg8[%c0_15, %27], %26 {strides = array<i32>} : memref<1x2048xf32, #tpu.memory_space<vmem>>, vector<1x2048xf32>,
    return
  }
  func.func @transform_0(%arg0: i32) -> (i32, i32) {
    %c0_i32 = arith.constant 0 : i32
    %c0_i32_0 = arith.constant 0 : i32
    return %c0_i32, %arg0 : i32, i32
  }
  func.func @transform_1(%arg0: i32) -> (i32, i32) {
    %c0_i32 = arith.constant 0 : i32
    %c0_i32_0 = arith.constant 0 : i32
    %c0_i32_1 = arith.constant 0 : i32
    return %c0_i32, %c0_i32_0 : i32, i32
  }
  func.func @transform_2(%arg0: i32) -> (i32, i32) {
    %c0_i32 = arith.constant 0 : i32
    %c0_i32_0 = arith.constant 0 : i32
    %c0_i32_1 = arith.constant 0 : i32
    return %c0_i32, %c0_i32_0 : i32, i32
  }
  func.func @transform_3(%arg0: i32) -> (i32, i32) {
    %c0_i32 = arith.constant 0 : i32
    %c0_i32_0 = arith.constant 0 : i32
    %c0_i32_1 = arith.constant 0 : i32
    return %c0_i32, %c0_i32_0 : i32, i32
  }
  func.func @transform_4(%arg0: i32) -> (i32, i32) {
    %c0_i32 = arith.constant 0 : i32
    %c0_i32_0 = arith.constant 0 : i32
    %c0_i32_1 = arith.constant 0 : i32
    return %c0_i32, %c0_i32_0 : i32, i32
  }
  func.func @transform_5(%arg0: i32) -> (i32, i32) {
    %c0_i32 = arith.constant 0 : i32
    %c0_i32_0 = arith.constant 0 : i32
    %c0_i32_1 = arith.constant 0 : i32
    return %c0_i32, %c0_i32_0 : i32, i32
  }
  func.func @transform_6(%arg0: i32) -> (i32, i32) {
    %c0_i32 = arith.constant 0 : i32
    %c0_i32_0 = arith.constant 0 : i32
    %c0_i32_1 = arith.constant 0 : i32
    return %c0_i32, %c0_i32_0 : i32, i32
  }
  func.func @transform_7(%arg0: i32) -> (i32, i32) {
    %c0_i32 = arith.constant 0 : i32
    %c0_i32_0 = arith.constant 0 : i32
    return %c0_i32, %arg0 : i32, i32
  }
}

</mosaic_0001>

<llo_original>
// kernel: _value_layer_pallas_flat.1
$region0: #{_value_layer_pallas_flat.1}
  #allocation0 [shape = 'u32[]', space=smem, size = 0x4, offset = 0x4, fixed_abs, tag = 'smem constant byte address 0x4 - core index']
  #allocation1 [shape = 'u32[144,128]{1,0:T(1,128)}', space=vmem, size = 0x12000, scoped, tag = 'internal scratch']
  #allocation2 [shape = 'f32[1,1]{1,0:T(1,128)S(1)}', space=vmem, size = 0x200, scoped, tag = 'scoped memory for _value_layer_pallas_flat.1']
  %s0 = inlined_call_operand.vmem [shape: f32[1,2048], index: 0, kind: input, shape index: {}]
  %s1 = inlined_call_operand.vmem [shape: f32[32,1], index: 1, kind: input, shape index: {}]
  %s2 = inlined_call_operand.vmem [shape: f32[32,1], index: 2, kind: input, shape index: {}]
  %s3 = inlined_call_operand.vmem [shape: f32[32,32], index: 3, kind: input, shape index: {}]
  %s4 = inlined_call_operand.vmem [shape: f32[32,1], index: 4, kind: input, shape index: {}]
  %s5 = inlined_call_operand.vmem [shape: f32[32,1], index: 5, kind: input, shape index: {}]
  %s6 = inlined_call_operand.<no memory space> [shape: f32[1,1], index: 6, kind: input, shape index: {}]
  %s7 = inlined_call_operand.hbm [shape: f32[1,2048], index: 7, kind: output, shape index: {}]
  %s8 = sld [smem:[#allocation0]]
  $region38: #{_value_layer_pallas_flat.1} parent=0
    _
  %s10 = ssub.s32 1, %s8
  %s11 = scalar_select 0, %s10, %s8
  %v12 = vstv %s6
  %13 = vst [vmem:[#allocation2] sm:$0x1] %v12
  $region1: #{_value_layer_pallas_flat.1} parent=0
    #allocation3 [shape = 'u8[8192]{0}', space=vmem, size = 0x2000, scoped, tag = 'output window, operand 0, single buffered']
    #allocation4 [shape = 's32[1]{0}', space=sflag, size = 0x4, scoped, tag = 'scoped memory for _value_layer_pallas_flat.1']
    %14 = vsyncpa [#allocation4], 0
    // Predicated region
    $region2: #{_value_layer_pallas_flat.1} parent=1 // pred_check
      _
    $region3: #{_value_layer_pallas_flat.1} parent=1 // pred_check_branch
      %16 = sbr.rel (0) target = $region5
    $region4: #{_value_layer_pallas_flat.1} parent=1 // pred_region
      _
    $region5: #{_value_layer_pallas_flat.1} parent=1 // pred_fallthru
      _
    // Predicated region
    $region6: #{_value_layer_pallas_flat.1} parent=1 // pred_check
      _
    $region7: #{_value_layer_pallas_flat.1} parent=1 // pred_check_branch
      %18 = sbr.rel (0) target = $region9
    $region8: #{_value_layer_pallas_flat.1} parent=1 // pred_region
      _
    $region9: #{_value_layer_pallas_flat.1} parent=1 // pred_fallthru
      _
    // Predicated region
    $region10: #{_value_layer_pallas_flat.1} parent=1 // pred_check
      _
    $region11: #{_value_layer_pallas_flat.1} parent=1 // pred_check_branch
      %20 = sbr.rel (0) target = $region13
    $region12: #{_value_layer_pallas_flat.1} parent=1 // pred_region
      _
    $region13: #{_value_layer_pallas_flat.1} parent=1 // pred_fallthru
      _
    // Predicated region
    $region14: #{_value_layer_pallas_flat.1} parent=1 // pred_check
      _
    $region15: #{_value_layer_pallas_flat.1} parent=1 // pred_check_branch
      %22 = sbr.rel (0) target = $region17
    $region16: #{_value_layer_pallas_flat.1} parent=1 // pred_region
      _
    $region17: #{_value_layer_pallas_flat.1} parent=1 // pred_fallthru
      _
    // Predicated region
    $region18: #{_value_layer_pallas_flat.1} parent=1 // pred_check
      _
    $region19: #{_value_layer_pallas_flat.1} parent=1 // pred_check_branch
      %24 = sbr.rel (0) target = $region21
    $region20: #{_value_layer_pallas_flat.1} parent=1 // pred_region
      _
    $region21: #{_value_layer_pallas_flat.1} parent=1 // pred_fallthru
      _
    // Predicated region
    $region22: #{_value_layer_pallas_flat.1} parent=1 // pred_check
      _
    $region23: #{_value_layer_pallas_flat.1} parent=1 // pred_check_branch
      %26 = sbr.rel (0) target = $region25
    $region24: #{_value_layer_pallas_flat.1} parent=1 // pred_region
      _
    $region25: #{_value_layer_pallas_flat.1} parent=1 // pred_fallthru
      _
    // Predicated region
    $region26: #{_value_layer_pallas_flat.1} parent=1 // pred_check
      _
    $region27: #{_value_layer_pallas_flat.1} parent=1 // pred_check_branch
      %28 = sbr.rel (0) target = $region29
    $region28: #{_value_layer_pallas_flat.1} parent=1 // pred_region
      _
    $region29: #{_value_layer_pallas_flat.1} parent=1 // pred_fallthru
      _
    %v29 = vld [vmem:[%s1] sm:$0xff]
    %v30 = vld [vmem:[%s1 + $0x8] sm:$0xff]
    %v31 = vld [vmem:[%s1 + $0x10] sm:$0xff]
    %v32 = vld [vmem:[%s1 + $0x18] sm:$0xff]
    %v33 = vld [vmem:[%s3] sm:$0xff]
    %v34 = vld [vmem:[%s3 + $0x8] sm:$0xff]
    %v35 = vld [vmem:[%s3 + $0x10] sm:$0xff]
    %v36 = vld [vmem:[%s3 + $0x18] sm:$0xff]
    %v37 = vld [vmem:[%s5] sm:$0xff]
    %v38 = vld [vmem:[%s5 + $0x8] sm:$0xff]
    %v39 = vld [vmem:[%s5 + $0x10] sm:$0xff]
    %v40 = vld [vmem:[%s5 + $0x18] sm:$0xff]
    %v41 = vld [vmem:[%s2] sm:$0xff]
    %v42 = vld [vmem:[%s2 + $0x8] sm:$0xff]
    %v43 = vld [vmem:[%s2 + $0x10] sm:$0xff]
    %v44 = vld [vmem:[%s2 + $0x18] sm:$0xff]
    %v45 = vld [vmem:[%s4] sm:$0xff]
    %v46 = vld [vmem:[%s4 + $0x8] sm:$0xff]
    %v47 = vld [vmem:[%s4 + $0x10] sm:$0xff]
    %v48 = vld [vmem:[%s4 + $0x18] sm:$0xff]
    %v49 = vld [vmem:[#allocation2] sm:$0x1]
    %v50 = vld [vmem:[%s0] sm:$0xff]
    %v51 = vld [vmem:[%s0 + $0x8] sm:$0xff]
    %53 = vset.pattern.permute.xlu0 0
    %54 = vperm.xlu0 %53, %v29
    %v55 = vpop.permute.xlu0 %54
    %58 = vset.pattern.permute.xlu0 0
    %59 = vperm.xlu0 %58, %v30
    %v60 = vpop.permute.xlu0 %59
    %63 = vset.pattern.permute.xlu0 0
    %64 = vperm.xlu0 %63, %v31
    %v65 = vpop.permute.xlu0 %64
    %68 = vset.pattern.permute.xlu0 0
    %69 = vperm.xlu0 %68, %v32
    %v70 = vpop.permute.xlu0 %69
    %v74 = vlaneseq
    %v75 = vshrl.u32 %v74, 7
    %v76 = vsub.s32 0, %v75
    %v77 = vrot.slane %v50, %v76
    %v78 = vlaneseq
    %v79 = vshrl.u32 %v78, 7
    %v80 = vsub.s32 1, %v79
    %v81 = vrot.slane %v50, %v80
    %v82 = vlaneseq
    %v83 = vshrl.u32 %v82, 7
    %v84 = vsub.s32 2, %v83
    %v85 = vrot.slane %v50, %v84
    %v86 = vlaneseq
    %v87 = vshrl.u32 %v86, 7
    %v88 = vsub.s32 3, %v87
    %v89 = vrot.slane %v50, %v88
    %v90 = vlaneseq
    %v91 = vshrl.u32 %v90, 7
    %v92 = vsub.s32 4, %v91
    %v93 = vrot.slane %v50, %v92
    %v94 = vlaneseq
    %v95 = vshrl.u32 %v94, 7
    %v96 = vsub.s32 5, %v95
    %v97 = vrot.slane %v50, %v96
    %v98 = vlaneseq
    %v99 = vshrl.u32 %v98, 7
    %v100 = vsub.s32 6, %v99
    %v101 = vrot.slane %v50, %v100
    %v102 = vlaneseq
    %v103 = vshrl.u32 %v102, 7
    %v104 = vsub.s32 7, %v103
    %v105 = vrot.slane %v50, %v104
    %v106 = vlaneseq
    %v107 = vshrl.u32 %v106, 7
    %v108 = vsub.s32 0, %v107
    %v109 = vrot.slane %v51, %v108
    %v110 = vlaneseq
    %v111 = vshrl.u32 %v110, 7
    %v112 = vsub.s32 1, %v111
    %v113 = vrot.slane %v51, %v112
    %v114 = vlaneseq
    %v115 = vshrl.u32 %v114, 7
    %v116 = vsub.s32 2, %v115
    %v117 = vrot.slane %v51, %v116
    %v118 = vlaneseq
    %v119 = vshrl.u32 %v118, 7
    %v120 = vsub.s32 3, %v119
    %v121 = vrot.slane %v51, %v120
    %v122 = vlaneseq
    %v123 = vshrl.u32 %v122, 7
    %v124 = vsub.s32 4, %v123
    %v125 = vrot.slane %v51, %v124
    %v126 = vlaneseq
    %v127 = vshrl.u32 %v126, 7
    %v128 = vsub.s32 5, %v127
    %v129 = vrot.slane %v51, %v128
    %v130 = vlaneseq
    %v131 = vshrl.u32 %v130, 7
    %v132 = vsub.s32 6, %v131
    %v133 = vrot.slane %v51, %v132
    %v134 = vlaneseq
    %v135 = vshrl.u32 %v134, 7
    %v136 = vsub.s32 7, %v135
    %v137 = vrot.slane %v51, %v136
    %v154 = vmul.f32 %v55, %v77
    %v155 = vmul.f32 %v55, %v81
    %v156 = vmul.f32 %v55, %v85
    %v157 = vmul.f32 %v55, %v89
    %v158 = vmul.f32 %v55, %v93
    %v159 = vmul.f32 %v55, %v97
    %v160 = vmul.f32 %v55, %v101
    %v161 = vmul.f32 %v55, %v105
    %v162 = vmul.f32 %v55, %v109
    %v163 = vmul.f32 %v55, %v113
    %v164 = vmul.f32 %v55, %v117
    %v165 = vmul.f32 %v55, %v121
    %v166 = vmul.f32 %v55, %v125
    %v167 = vmul.f32 %v55, %v129
    %v168 = vmul.f32 %v55, %v133
    %v169 = vmul.f32 %v55, %v137
    %v170 = vmul.f32 %v60, %v77
    %v171 = vmul.f32 %v60, %v81
    %v172 = vmul.f32 %v60, %v85
    %v173 = vmul.f32 %v60, %v89
    %v174 = vmul.f32 %v60, %v93
    %v175 = vmul.f32 %v60, %v97
    %v176 = vmul.f32 %v60, %v101
    %v177 = vmul.f32 %v60, %v105
    %v178 = vmul.f32 %v60, %v109
    %v179 = vmul.f32 %v60, %v113
    %v180 = vmul.f32 %v60, %v117
    %v181 = vmul.f32 %v60, %v121
    %v182 = vmul.f32 %v60, %v125
    %v183 = vmul.f32 %v60, %v129
    %v184 = vmul.f32 %v60, %v133
    %v185 = vmul.f32 %v60, %v137
    %v186 = vmul.f32 %v65, %v77
    %v187 = vmul.f32 %v65, %v81
    %v188 = vmul.f32 %v65, %v85
    %v189 = vmul.f32 %v65, %v89
    %v190 = vmul.f32 %v65, %v93
    %v191 = vmul.f32 %v65, %v97
    %v192 = vmul.f32 %v65, %v101
    %v193 = vmul.f32 %v65, %v105
    %v194 = vmul.f32 %v65, %v109
    %v195 = vmul.f32 %v65, %v113
    %v196 = vmul.f32 %v65, %v117
    %v197 = vmul.f32 %v65, %v121
    %v198 = vmul.f32 %v65, %v125
    %v199 = vmul.f32 %v65, %v129
    %v200 = vmul.f32 %v65, %v133
    %v201 = vmul.f32 %v65, %v137
    %v202 = vmul.f32 %v70, %v77
    %v203 = vmul.f32 %v70, %v81
    %v204 = vmul.f32 %v70, %v85
    %v205 = vmul.f32 %v70, %v89
    %v206 = vmul.f32 %v70, %v93
    %v207 = vmul.f32 %v70, %v97
    %v208 = vmul.f32 %v70, %v101
    %v209 = vmul.f32 %v70, %v105
    %v210 = vmul.f32 %v70, %v109
    %v211 = vmul.f32 %v70, %v113
    %v212 = vmul.f32 %v70, %v117
    %v213 = vmul.f32 %v70, %v121
    %v214 = vmul.f32 %v70, %v125
    %v215 = vmul.f32 %v70, %v129
    %v216 = vmul.f32 %v70, %v133
    %v217 = vmul.f32 %v70, %v137
    %219 = vset.pattern.permute.xlu0 0
    %220 = vperm.xlu0 %219, %v41
    %v221 = vpop.permute.xlu0 %220
    %224 = vset.pattern.permute.xlu0 0
    %225 = vperm.xlu0 %224, %v42
    %v226 = vpop.permute.xlu0 %225
    %229 = vset.pattern.permute.xlu0 0
    %230 = vperm.xlu0 %229, %v43
    %v231 = vpop.permute.xlu0 %230
    %234 = vset.pattern.permute.xlu0 0
    %235 = vperm.xlu0 %234, %v44
    %v236 = vpop.permute.xlu0 %235
    %v238 = vadd.f32 %v154, %v221
    %v239 = vadd.f32 %v155, %v221
    %v240 = vadd.f32 %v156, %v221
    %v241 = vadd.f32 %v157, %v221
    %v242 = vadd.f32 %v158, %v221
    %v243 = vadd.f32 %v159, %v221
    %v244 = vadd.f32 %v160, %v221
    %v245 = vadd.f32 %v161, %v221
    %v246 = vadd.f32 %v162, %v221
    %v247 = vadd.f32 %v163, %v221
    %v248 = vadd.f32 %v164, %v221
    %v249 = vadd.f32 %v165, %v221
    %v250 = vadd.f32 %v166, %v221
    %v251 = vadd.f32 %v167, %v221
    %v252 = vadd.f32 %v168, %v221
    %v253 = vadd.f32 %v169, %v221
    %v254 = vadd.f32 %v170, %v226
    %v255 = vadd.f32 %v171, %v226
    %v256 = vadd.f32 %v172, %v226
    %v257 = vadd.f32 %v173, %v226
    %v258 = vadd.f32 %v174, %v226
    %v259 = vadd.f32 %v175, %v226
    %v260 = vadd.f32 %v176, %v226
    %v261 = vadd.f32 %v177, %v226
    %v262 = vadd.f32 %v178, %v226
    %v263 = vadd.f32 %v179, %v226
    %v264 = vadd.f32 %v180, %v226
    %v265 = vadd.f32 %v181, %v226
    %v266 = vadd.f32 %v182, %v226
    %v267 = vadd.f32 %v183, %v226
    %v268 = vadd.f32 %v184, %v226
    %v269 = vadd.f32 %v185, %v226
    %v270 = vadd.f32 %v186, %v231
    %v271 = vadd.f32 %v187, %v231
    %v272 = vadd.f32 %v188, %v231
    %v273 = vadd.f32 %v189, %v231
    %v274 = vadd.f32 %v190, %v231
    %v275 = vadd.f32 %v191, %v231
    %v276 = vadd.f32 %v192, %v231
    %v277 = vadd.f32 %v193, %v231
    %v278 = vadd.f32 %v194, %v231
    %v279 = vadd.f32 %v195, %v231
    %v280 = vadd.f32 %v196, %v231
    %v281 = vadd.f32 %v197, %v231
    %v282 = vadd.f32 %v198, %v231
    %v283 = vadd.f32 %v199, %v231
    %v284 = vadd.f32 %v200, %v231
    %v285 = vadd.f32 %v201, %v231
    %v286 = vadd.f32 %v202, %v236
    %v287 = vadd.f32 %v203, %v236
    %v288 = vadd.f32 %v204, %v236
    %v289 = vadd.f32 %v205, %v236
    %v290 = vadd.f32 %v206, %v236
    %v291 = vadd.f32 %v207, %v236
    %v292 = vadd.f32 %v208, %v236
    %v293 = vadd.f32 %v209, %v236
    %v294 = vadd.f32 %v210, %v236
    %v295 = vadd.f32 %v211, %v236
    %v296 = vadd.f32 %v212, %v236
    %v297 = vadd.f32 %v213, %v236
    %v298 = vadd.f32 %v214, %v236
    %v299 = vadd.f32 %v215, %v236
    %v300 = vadd.f32 %v216, %v236
    %v301 = vadd.f32 %v217, %v236
    %v302 = vmax.f32 %v238, 0.0
    %v303 = vmax.f32 %v239, 0.0
    %v304 = vmax.f32 %v240, 0.0
    %v305 = vmax.f32 %v241, 0.0
    %v306 = vmax.f32 %v242, 0.0
    %v307 = vmax.f32 %v243, 0.0
    %v308 = vmax.f32 %v244, 0.0
    %v309 = vmax.f32 %v245, 0.0
    %v310 = vmax.f32 %v246, 0.0
    %v311 = vmax.f32 %v247, 0.0
    %v312 = vmax.f32 %v248, 0.0
    %v313 = vmax.f32 %v249, 0.0
    %v314 = vmax.f32 %v250, 0.0
    %v315 = vmax.f32 %v251, 0.0
    %v316 = vmax.f32 %v252, 0.0
    %v317 = vmax.f32 %v253, 0.0
    %v318 = vmax.f32 %v254, 0.0
    %v319 = vmax.f32 %v255, 0.0
    %v320 = vmax.f32 %v256, 0.0
    %v321 = vmax.f32 %v257, 0.0
    %v322 = vmax.f32 %v258, 0.0
    %v323 = vmax.f32 %v259, 0.0
    %v324 = vmax.f32 %v260, 0.0
    %v325 = vmax.f32 %v261, 0.0
    %v326 = vmax.f32 %v262, 0.0
    %v327 = vmax.f32 %v263, 0.0
    %v328 = vmax.f32 %v264, 0.0
    %v329 = vmax.f32 %v265, 0.0
    %v330 = vmax.f32 %v266, 0.0
    %v331 = vmax.f32 %v267, 0.0
    %v332 = vmax.f32 %v268, 0.0
    %v333 = vmax.f32 %v269, 0.0
    %v334 = vmax.f32 %v270, 0.0
    %v335 = vmax.f32 %v271, 0.0
    %v336 = vmax.f32 %v272, 0.0
    %v337 = vmax.f32 %v273, 0.0
    %v338 = vmax.f32 %v274, 0.0
    %v339 = vmax.f32 %v275, 0.0
    %v340 = vmax.f32 %v276, 0.0
    %v341 = vmax.f32 %v277, 0.0
    %v342 = vmax.f32 %v278, 0.0
    %v343 = vmax.f32 %v279, 0.0
    %v344 = vmax.f32 %v280, 0.0
    %v345 = vmax.f32 %v281, 0.0
    %v346 = vmax.f32 %v282, 0.0
    %v347 = vmax.f32 %v283, 0.0
    %v348 = vmax.f32 %v284, 0.0
    %v349 = vmax.f32 %v285, 0.0
    %v350 = vmax.f32 %v286, 0.0
    %v351 = vmax.f32 %v287, 0.0
    %v352 = vmax.f32 %v288, 0.0
    %v353 = vmax.f32 %v289, 0.0
    %v354 = vmax.f32 %v290, 0.0
    %v355 = vmax.f32 %v291, 0.0
    %v356 = vmax.f32 %v292, 0.0
    %v357 = vmax.f32 %v293, 0.0
    %v358 = vmax.f32 %v294, 0.0
    %v359 = vmax.f32 %v295, 0.0
    %v360 = vmax.f32 %v296, 0.0
    %v361 = vmax.f32 %v297, 0.0
    %v362 = vmax.f32 %v298, 0.0
    %v363 = vmax.f32 %v299, 0.0
    %v364 = vmax.f32 %v300, 0.0
    %v365 = vmax.f32 %v301, 0.0
    %367 = vset.pattern.permute.xlu0 0
    %368 = vperm.xlu0 %367, %v45
    %v369 = vpop.permute.xlu0 %368
    %372 = vset.pattern.permute.xlu0 0
    %373 = vperm.xlu0 %372, %v46
    %v374 = vpop.permute.xlu0 %373
    %377 = vset.pattern.permute.xlu0 0
    %378 = vperm.xlu0 %377, %v47
    %v379 = vpop.permute.xlu0 %378
    %382 = vset.pattern.permute.xlu0 0
    %383 = vperm.xlu0 %382, %v48
    %v384 = vpop.permute.xlu0 %383
    %vm386 = vcmask 261120
    %v388 = vsel %vm386, %v33, 0
    %v391 = vsel %vm386, %v34, 0
    %v394 = vsel %vm386, %v35, 0
    %v397 = vsel %vm386, %v36, 0
    %v399 = vand.u32 %v303, 4294901760
    %400 = vmatprep.subr.mxu0 %v399
    %v401 = vand.u32 %v302, 4294901760
    %402 = vmatpush1.msra.mxu0 %v401
    %v403 = vand.u32 %v319, 4294901760
    %404 = vmatprep.subr.mxu0 %v403
    %v405 = vand.u32 %v318, 4294901760
    %406 = vmatpush1.msra.mxu0 %v405
    %v407 = vand.u32 %v335, 4294901760
    %408 = vmatprep.subr.mxu0 %v407
    %v409 = vand.u32 %v334, 4294901760
    %410 = vmatpush1.msra.mxu0 %v409
    %v411 = vand.u32 %v351, 4294901760
    %412 = vmatprep.subr.mxu0 %v411
    %v413 = vand.u32 %v350, 4294901760
    %414 = vmatpush1.msra.mxu0 %v413
    %415 = vmatprep.subr.mxu0 0.0
    %416 = vmatpush1.msra.mxu0 0.0
    %417 = vmatprep.subr.mxu0 0.0
    %418 = vmatpush1.msra.mxu0 0.0
    %419 = vmatprep.subr.mxu0 0.0
    %420 = vmatpush1.msra.mxu0 0.0
    %421 = vmatprep.subr.mxu0 0.0
    %422 = vmatpush1.msra.mxu0 0.0
    %423 = vmatprep.subr.mxu0 0.0
    %424 = vmatpush1.msra.mxu0 0.0
    %425 = vmatprep.subr.mxu0 0.0
    %426 = vmatpush1.msra.mxu0 0.0
    %427 = vmatprep.subr.mxu0 0.0
    %428 = vmatpush1.msra.mxu0 0.0
    %429 = vmatprep.subr.mxu0 0.0
    %430 = vmatpush1.msra.mxu0 0.0
    %431 = vmatprep.subr.mxu0 0.0
    %432 = vmatpush1.msra.mxu0 0.0
    %433 = vmatprep.subr.mxu0 0.0
    %434 = vmatpush1.msra.mxu0 0.0
    %435 = vmatprep.subr.mxu0 0.0
    %436 = vmatpush1.msra.mxu0 0.0
    %437 = vmatprep.subr.mxu0 0.0
    %438 = vmatpush1.msra.mxu0 0.0
    %439 = vmatprep.subr.mxu0 0.0
    %440 = vmatpush1.msra.mxu0 0.0
    %441 = vmatprep.subr.mxu0 0.0
    %442 = vmatpush1.msra.mxu0 0.0
    %443 = vmatprep.subr.mxu0 0.0
    %444 = vmatpush1.msra.mxu0 0.0
    %445 = vmatprep.subr.mxu0 0.0
    %446 = vmatpush1.msra.mxu0 0.0
    %447 = vmatprep.subr.mxu0 0.0
    %448 = vmatpush1.msra.mxu0 0.0
    %449 = vmatprep.subr.mxu0 0.0
    %450 = vmatpush1.msra.mxu0 0.0
    %451 = vmatprep.subr.mxu0 0.0
    %452 = vmatpush1.msra.mxu0 0.0
    %453 = vmatprep.subr.mxu0 0.0
    %454 = vmatpush1.msra.mxu0 0.0
    %455 = vmatprep.subr.mxu0 0.0
    %456 = vmatpush1.msra.mxu0 0.0
    %457 = vmatprep.subr.mxu0 0.0
    %458 = vmatpush1.msra.mxu0 0.0
    %459 = vmatprep.subr.mxu0 0.0
    %460 = vmatpush1.msra.mxu0 0.0
    %461 = vmatprep.subr.mxu0 0.0
    %462 = vmatpush1.msra.mxu0 0.0
    %463 = vmatprep.subr.mxu0 0.0
    %464 = vmatpush1.msra.mxu0 0.0
    %465 = vmatprep.subr.mxu0 0.0
    %466 = vmatpush1.msra.mxu0 0.0
    %467 = vmatprep.subr.mxu0 0.0
    %468 = vmatpush1.msra.mxu0 0.0
    %469 = vmatprep.subr.mxu0 0.0
    %470 = vmatpush1.msra.mxu0 0.0
    %471 = vmatprep.mubr.f32.mxu0 0.0
    %v472 = vand.u32 %v388, 4294901760
    %v473 = vsub.f32 %v388, %v472
    %v474 = vand.u32 %v473, 4294901760
    %v475 = vsub.f32 %v473, %v474
    %v476 = vand.u32 %v475, 4294901760
    %477 = vmatmul.mubr.f32.gmra.mrb[0].mxu0 %v476
    %v478 = vpop.f32.mrb[0].mxu0
    %v479 = vadd.f32 %v369, %v478
    %v480 = vpop.f32.mrb[0].mxu0
    %v481 = vadd.f32 %v369, %v480
    %482 = vmatprep.mubr.f32.mxu0 0.0
    %v483 = vand.u32 %v391, 4294901760
    %v484 = vsub.f32 %v391, %v483
    %v485 = vand.u32 %v484, 4294901760
    %v486 = vsub.f32 %v484, %v485
    %v487 = vand.u32 %v486, 4294901760
    %488 = vmatmul.mubr.f32.gmra.mrb[0].mxu0 %v487
    %v489 = vpop.f32.mrb[0].mxu0
    %v490 = vadd.f32 %v374, %v489
    %v491 = vpop.f32.mrb[0].mxu0
    %v492 = vadd.f32 %v374, %v491
    %493 = vmatprep.mubr.f32.mxu0 0.0
    %v494 = vand.u32 %v394, 4294901760
    %v495 = vsub.f32 %v394, %v494
    %v496 = vand.u32 %v495, 4294901760
    %v497 = vsub.f32 %v495, %v496
    %v498 = vand.u32 %v497, 4294901760
    %499 = vmatmul.mubr.f32.gmra.mrb[0].mxu0 %v498
    %v500 = vpop.f32.mrb[0].mxu0
    %v501 = vadd.f32 %v379, %v500
    %v502 = vpop.f32.mrb[0].mxu0
    %v503 = vadd.f32 %v379, %v502
    %504 = vmatprep.mubr.f32.mxu0 0.0
    %v505 = vand.u32 %v397, 4294901760
    %v506 = vsub.f32 %v397, %v505
    %v507 = vand.u32 %v506, 4294901760
    %v508 = vsub.f32 %v506, %v507
    %v509 = vand.u32 %v508, 4294901760
    %510 = vmatmul.mubr.f32.gmra.mrb[0].mxu0 %v509
    %v511 = vpop.f32.mrb[0].mxu0
    %v512 = vadd.f32 %v384, %v511
    %v513 = vpop.f32.mrb[0].mxu0
    %v514 = vadd.f32 %v384, %v513
    %515 = vdwg.mxu0
    %v516 = vand.u32 %v303, 4294901760
    %v517 = vsub.f32 %v303, %v516
    %v518 = vand.u32 %v517, 4294901760
    %v519 = vsub.f32 %v517, %v518
    %v520 = vand.u32 %v519, 4294901760
    %521 = vmatprep.subr.mxu0 %v520
    %v522 = vand.u32 %v302, 4294901760
    %v523 = vsub.f32 %v302, %v522
    %v524 = vand.u32 %v523, 4294901760
    %v525 = vsub.f32 %v523, %v524
    %v526 = vand.u32 %v525, 4294901760
    %527 = vmatpush1.msra.mxu0 %v526
    %v528 = vand.u32 %v319, 4294901760
    %v529 = vsub.f32 %v319, %v528
    %v530 = vand.u32 %v529, 4294901760
    %v531 = vsub.f32 %v529, %v530
    %v532 = vand.u32 %v531, 4294901760
    %533 = vmatprep.subr.mxu0 %v532
    %v534 = vand.u32 %v318, 4294901760
    %v535 = vsub.f32 %v318, %v534
    %v536 = vand.u32 %v535, 4294901760
    %v537 = vsub.f32 %v535, %v536
    %v538 = vand.u32 %v537, 4294901760
    %539 = vmatpush1.msra.mxu0 %v538
    %v540 = vand.u32 %v335, 4294901760
    %v541 = vsub.f32 %v335, %v540
    %v542 = vand.u32 %v541, 4294901760
    %v543 = vsub.f32 %v541, %v542
    %v544 = vand.u32 %v543, 4294901760
    %545 = vmatprep.subr.mxu0 %v544
    %v546 = vand.u32 %v334, 4294901760
    %v547 = vsub.f32 %v334, %v546
    %v548 = vand.u32 %v547, 4294901760
    %v549 = vsub.f32 %v547, %v548
    %v550 = vand.u32 %v549, 4294901760
    %551 = vmatpush1.msra.mxu0 %v550
    %v552 = vand.u32 %v351, 4294901760
    %v553 = vsub.f32 %v351, %v552
    %v554 = vand.u32 %v553, 4294901760
    %v555 = vsub.f32 %v553, %v554
    %v556 = vand.u32 %v555, 4294901760
    %557 = vmatprep.subr.mxu0 %v556
    %v558 = vand.u32 %v350, 4294901760
    %v559 = vsub.f32 %v350, %v558
    %v560 = vand.u32 %v559, 4294901760
    %v561 = vsub.f32 %v559, %v560
    %v562 = vand.u32 %v561, 4294901760
    %563 = vmatpush1.msra.mxu0 %v562
    %564 = vmatprep.subr.mxu0 0.0
    %565 = vmatpush1.msra.mxu0 0.0
    %566 = vmatprep.subr.mxu0 0.0
    %567 = vmatpush1.msra.mxu0 0.0
    %568 = vmatprep.subr.mxu0 0.0
    %569 = vmatpush1.msra.mxu0 0.0
    %570 = vmatprep.subr.mxu0 0.0
    %571 = vmatpush1.msra.mxu0 0.0
    %572 = vmatprep.subr.mxu0 0.0
    %573 = vmatpush1.msra.mxu0 0.0
    %574 = vmatprep.subr.mxu0 0.0
    %575 = vmatpush1.msra.mxu0 0.0
    %576 = vmatprep.subr.mxu0 0.0
    %577 = vmatpush1.msra.mxu0 0.0
    %578 = vmatprep.subr.mxu0 0.0
    %579 = vmatpush1.msra.mxu0 0.0
    %580 = vmatprep.subr.mxu0 0.0
    %581 = vmatpush1.msra.mxu0 0.0
    %582 = vmatprep.subr.mxu0 0.0
    %583 = vmatpush1.msra.mxu0 0.0
    %584 = vmatprep.subr.mxu0 0.0
    %585 = vmatpush1.msra.mxu0 0.0
    %586 = vmatprep.subr.mxu0 0.0
    %587 = vmatpush1.msra.mxu0 0.0
    %588 = vmatprep.subr.mxu0 0.0
    %589 = vmatpush1.msra.mxu0 0.0
    %590 = vmatprep.subr.mxu0 0.0
    %591 = vmatpush1.msra.mxu0 0.0
    %592 = vmatprep.subr.mxu0 0.0
    %593 = vmatpush1.msra.mxu0 0.0
    %594 = vmatprep.subr.mxu0 0.0
    %595 = vmatpush1.msra.mxu0 0.0
    %596 = vmatprep.subr.mxu0 0.0
    %597 = vmatpush1.msra.mxu0 0.0
    %598 = vmatprep.subr.mxu0 0.0
    %599 = vmatpush1.msra.mxu0 0.0
    %600 = vmatprep.subr.mxu0 0.0
    %601 = vmatpush1.msra.mxu0 0.0
    %602 = vmatprep.subr.mxu0 0.0
    %603 = vmatpush1.msra.mxu0 0.0
    %604 = vmatprep.subr.mxu0 0.0
    %605 = vmatpush1.msra.mxu0 0.0
    %606 = vmatprep.subr.mxu0 0.0
    %607 = vmatpush1.msra.mxu0 0.0
    %608 = vmatprep.subr.mxu0 0.0
    %609 = vmatpush1.msra.mxu0 0.0
    %610 = vmatprep.subr.mxu0 0.0
    %611 = vmatpush1.msra.mxu0 0.0
    %612 = vmatprep.subr.mxu0 0.0
    %613 = vmatpush1.msra.mxu0 0.0
    %614 = vmatprep.subr.mxu0 0.0
    %615 = vmatpush1.msra.mxu0 0.0
    %616 = vmatprep.subr.mxu0 0.0
    %617 = vmatpush1.msra.mxu0 0.0
    %618 = vmatprep.subr.mxu0 0.0
    %619 = vmatpush1.msra.mxu0 0.0
    %620 = vmatprep.mubr.f32.mxu0 0.0
    %v621 = vand.u32 %v388, 4294901760
    %622 = vmatmul.mubr.f32.gmra.mrb[0].mxu0 %v621
    %v623 = vpop.f32.mrb[0].mxu0
    %v624 = vadd.f32 %v479, %v623
    %v625 = vpop.f32.mrb[0].mxu0
    %v626 = vadd.f32 %v481, %v625
    %627 = vmatprep.mubr.f32.mxu0 0.0
    %v628 = vand.u32 %v391, 4294901760
    %629 = vmatmul.mubr.f32.gmra.mrb[0].mxu0 %v628
    %v630 = vpop.f32.mrb[0].mxu0
    %v631 = vadd.f32 %v490, %v630
    %v632 = vpop.f32.mrb[0].mxu0
    %v633 = vadd.f32 %v492, %v632
    %634 = vmatprep.mubr.f32.mxu0 0.0
    %v635 = vand.u32 %v394, 4294901760
    %636 = vmatmul.mubr.f32.gmra.mrb[0].mxu0 %v635
    %v637 = vpop.f32.mrb[0].mxu0
    %v638 = vadd.f32 %v501, %v637
    %v639 = vpop.f32.mrb[0].mxu0
    %v640 = vadd.f32 %v503, %v639
    %641 = vmatprep.mubr.f32.mxu0 0.0
    %v642 = vand.u32 %v397, 4294901760
    %643 = vmatmul.mubr.f32.gmra.mrb[0].mxu0 %v642
    %v644 = vpop.f32.mrb[0].mxu0
    %v645 = vadd.f32 %v512, %v644
    %v646 = vpop.f32.mrb[0].mxu0
    %v647 = vadd.f32 %v514, %v646
    %648 = vdwg.mxu0
    %v649 = vand.u32 %v303, 4294901760
    %v650 = vsub.f32 %v303, %v649
    %651 = vmatprep.subr.mxu0 %v650
    %v652 = vand.u32 %v302, 4294901760
    %v653 = vsub.f32 %v302, %v652
    %654 = vmatpush1.msra.mxu0 %v653
    %v655 = vand.u32 %v319, 4294901760
    %v656 = vsub.f32 %v319, %v655
    %657 = vmatprep.subr.mxu0 %v656
    %v658 = vand.u32 %v318, 4294901760
    %v659 = vsub.f32 %v318, %v658
    %660 = vmatpush1.msra.mxu0 %v659
    %v661 = vand.u32 %v335, 4294901760
    %v662 = vsub.f32 %v335, %v661
    %663 = vmatprep.subr.mxu0 %v662
    %v664 = vand.u32 %v334, 4294901760
    %v665 = vsub.f32 %v334, %v664
    %666 = vmatpush1.msra.mxu0 %v665
    %v667 = vand.u32 %v351, 4294901760
    %v668 = vsub.f32 %v351, %v667
    %669 = vmatprep.subr.mxu0 %v668
    %v670 = vand.u32 %v350, 4294901760
    %v671 = vsub.f32 %v350, %v670
    %672 = vmatpush1.msra.mxu0 %v671
    %673 = vmatprep.subr.mxu0 0.0
    %674 = vmatpush1.msra.mxu0 0.0
    %675 = vmatprep.subr.mxu0 0.0
    %676 = vmatpush1.msra.mxu0 0.0
    %677 = vmatprep.subr.mxu0 0.0
    %678 = vmatpush1.msra.mxu0 0.0
    %679 = vmatprep.subr.mxu0 0.0
    %680 = vmatpush1.msra.mxu0 0.0
    %681 = vmatprep.subr.mxu0 0.0
    %682 = vmatpush1.msra.mxu0 0.0
    %683 = vmatprep.subr.mxu0 0.0
    %684 = vmatpush1.msra.mxu0 0.0
    %685 = vmatprep.subr.mxu0 0.0
    %686 = vmatpush1.msra.mxu0 0.0
    %687 = vmatprep.subr.mxu0 0.0
    %688 = vmatpush1.msra.mxu0 0.0
    %689 = vmatprep.subr.mxu0 0.0
    %690 = vmatpush1.msra.mxu0 0.0
    %691 = vmatprep.subr.mxu0 0.0
    %692 = vmatpush1.msra.mxu0 0.0
    %693 = vmatprep.subr.mxu0 0.0
    %694 = vmatpush1.msra.mxu0 0.0
    %695 = vmatprep.subr.mxu0 0.0
    %696 = vmatpush1.msra.mxu0 0.0
    %697 = vmatprep.subr.mxu0 0.0
    %698 = vmatpush1.msra.mxu0 0.0
    %699 = vmatprep.subr.mxu0 0.0
    %700 = vmatpush1.msra.mxu0 0.0
    %701 = vmatprep.subr.mxu0 0.0
    %702 = vmatpush1.msra.mxu0 0.0
    %703 = vmatprep.subr.mxu0 0.0
    %704 = vmatpush1.msra.mxu0 0.0
    %705 = vmatprep.subr.mxu0 0.0
    %706 = vmatpush1.msra.mxu0 0.0
    %707 = vmatprep.subr.mxu0 0.0
    %708 = vmatpush1.msra.mxu0 0.0
    %709 = vmatprep.subr.mxu0 0.0
    %710 = vmatpush1.msra.mxu0 0.0
    %711 = vmatprep.subr.mxu0 0.0
    %712 = vmatpush1.msra.mxu0 0.0
    %713 = vmatprep.subr.mxu0 0.0
    %714 = vmatpush1.msra.mxu0 0.0
    %715 = vmatprep.subr.mxu0 0.0
    %716 = vmatpush1.msra.mxu0 0.0
    %717 = vmatprep.subr.mxu0 0.0
    %718 = vmatpush1.msra.mxu0 0.0
    %719 = vmatprep.subr.mxu0 0.0
    %720 = vmatpush1.msra.mxu0 0.0
    %721 = vmatprep.subr.mxu0 0.0
    %722 = vmatpush1.msra.mxu0 0.0
    %723 = vmatprep.subr.mxu0 0.0
    %724 = vmatpush1.msra.mxu0 0.0
    %725 = vmatprep.subr.mxu0 0.0
    %726 = vmatpush1.msra.mxu0 0.0
    %727 = vmatprep.subr.mxu0 0.0
    %728 = vmatpush1.msra.mxu0 0.0
    %729 = vmatprep.mubr.f32.mxu0 0.0
    %v730 = vand.u32 %v388, 4294901760
    %v731 = vsub.f32 %v388, %v730
    %732 = vmatmul.mubr.f32.gmra.mrb[0].mxu0 %v731
    %v733 = vpop.f32.mrb[0].mxu0
    %v734 = vadd.f32 %v624, %v733
    %v735 = vpop.f32.mrb[0].mxu0
    %v736 = vadd.f32 %v626, %v735
    %737 = vmatprep.mubr.f32.mxu0 0.0
    %v738 = vand.u32 %v391, 4294901760
    %v739 = vsub.f32 %v391, %v738
    %740 = vmatmul.mubr.f32.gmra.mrb[0].mxu0 %v739
    %v741 = vpop.f32.mrb[0].mxu0
    %v742 = vadd.f32 %v631, %v741
    %v743 = vpop.f32.mrb[0].mxu0
    %v744 = vadd.f32 %v633, %v743
    %745 = vmatprep.mubr.f32.mxu0 0.0
    %v746 = vand.u32 %v394, 4294901760
    %v747 = vsub.f32 %v394, %v746
    %748 = vmatmul.mubr.f32.gmra.mrb[0].mxu0 %v747
    %v749 = vpop.f32.mrb[0].mxu0
    %v750 = vadd.f32 %v638, %v749
    %v751 = vpop.f32.mrb[0].mxu0
    %v752 = vadd.f32 %v640, %v751
    %753 = vmatprep.mubr.f32.mxu0 0.0
    %v754 = vand.u32 %v397, 4294901760
    %v755 = vsub.f32 %v397, %v754
    %756 = vmatmul.mubr.f32.gmra.mrb[0].mxu0 %v755
    %v757 = vpop.f32.mrb[0].mxu0
    %v758 = vadd.f32 %v645, %v757
    %v759 = vpop.f32.mrb[0].mxu0
    %v760 = vadd.f32 %v647, %v759
    %761 = vdwg.mxu0
    %v762 = vand.u32 %v303, 4294901760
    %763 = vmatprep.subr.mxu0 %v762
    %v764 = vand.u32 %v302, 4294901760
    %765 = vmatpush1.msra.mxu0 %v764
    %v766 = vand.u32 %v319, 4294901760
    %767 = vmatprep.subr.mxu0 %v766
    %v768 = vand.u32 %v318, 4294901760
    %769 = vmatpush1.msra.mxu0 %v768
    %v770 = vand.u32 %v335, 4294901760
    %771 = vmatprep.subr.mxu0 %v770
    %v772 = vand.u32 %v334, 4294901760
    %773 = vmatpush1.msra.mxu0 %v772
    %v774 = vand.u32 %v351, 4294901760
    %775 = vmatprep.subr.mxu0 %v774
    %v776 = vand.u32 %v350, 4294901760
    %777 = vmatpush1.msra.mxu0 %v776
    %778 = vmatprep.subr.mxu0 0.0
    %779 = vmatpush1.msra.mxu0 0.0
    %780 = vmatprep.subr.mxu0 0.0
    %781 = vmatpush1.msra.mxu0 0.0
    %782 = vmatprep.subr.mxu0 0.0
    %783 = vmatpush1.msra.mxu0 0.0
    %784 = vmatprep.subr.mxu0 0.0
    %785 = vmatpush1.msra.mxu0 0.0
    %786 = vmatprep.subr.mxu0 0.0
    %787 = vmatpush1.msra.mxu0 0.0
    %788 = vmatprep.subr.mxu0 0.0
    %789 = vmatpush1.msra.mxu0 0.0
    %790 = vmatprep.subr.mxu0 0.0
    %791 = vmatpush1.msra.mxu0 0.0
    %792 = vmatprep.subr.mxu0 0.0
    %793 = vmatpush1.msra.mxu0 0.0
    %794 = vmatprep.subr.mxu0 0.0
    %795 = vmatpush1.msra.mxu0 0.0
    %796 = vmatprep.subr.mxu0 0.0
    %797 = vmatpush1.msra.mxu0 0.0
    %798 = vmatprep.subr.mxu0 0.0
    %799 = vmatpush1.msra.mxu0 0.0
    %800 = vmatprep.subr.mxu0 0.0
    %801 = vmatpush1.msra.mxu0 0.0
    %802 = vmatprep.subr.mxu0 0.0
    %803 = vmatpush1.msra.mxu0 0.0
    %804 = vmatprep.subr.mxu0 0.0
    %805 = vmatpush1.msra.mxu0 0.0
    %806 = vmatprep.subr.mxu0 0.0
    %807 = vmatpush1.msra.mxu0 0.0
    %808 = vmatprep.subr.mxu0 0.0
    %809 = vmatpush1.msra.mxu0 0.0
    %810 = vmatprep.subr.mxu0 0.0
    %811 = vmatpush1.msra.mxu0 0.0
    %812 = vmatprep.subr.mxu0 0.0
    %813 = vmatpush1.msra.mxu0 0.0
    %814 = vmatprep.subr.mxu0 0.0
    %815 = vmatpush1.msra.mxu0 0.0
    %816 = vmatprep.subr.mxu0 0.0
    %817 = vmatpush1.msra.mxu0 0.0
    %818 = vmatprep.subr.mxu0 0.0
    %819 = vmatpush1.msra.mxu0 0.0
    %820 = vmatprep.subr.mxu0 0.0
    %821 = vmatpush1.msra.mxu0 0.0
    %822 = vmatprep.subr.mxu0 0.0
    %823 = vmatpush1.msra.mxu0 0.0
    %824 = vmatprep.subr.mxu0 0.0
    %825 = vmatpush1.msra.mxu0 0.0
    %826 = vmatprep.subr.mxu0 0.0
    %827 = vmatpush1.msra.mxu0 0.0
    %828 = vmatprep.subr.mxu0 0.0
    %829 = vmatpush1.msra.mxu0 0.0
    %830 = vmatprep.subr.mxu0 0.0
    %831 = vmatpush1.msra.mxu0 0.0
    %832 = vmatprep.subr.mxu0 0.0
    %833 = vmatpush1.msra.mxu0 0.0
    %834 = vmatprep.mubr.f32.mxu0 0.0
    %v835 = vand.u32 %v388, 4294901760
    %v836 = vsub.f32 %v388, %v835
    %v837 = vand.u32 %v836, 4294901760
    %838 = vmatmul.mubr.f32.gmra.mrb[0].mxu0 %v837
    %v839 = vpop.f32.mrb[0].mxu0
    %v840 = vadd.f32 %v734, %v839
    %v841 = vpop.f32.mrb[0].mxu0
    %v842 = vadd.f32 %v736, %v841
    %843 = vmatprep.mubr.f32.mxu0 0.0
    %v844 = vand.u32 %v391, 4294901760
    %v845 = vsub.f32 %v391, %v844
    %v846 = vand.u32 %v845, 4294901760
    %847 = vmatmul.mubr.f32.gmra.mrb[0].mxu0 %v846
    %v848 = vpop.f32.mrb[0].mxu0
    %v849 = vadd.f32 %v742, %v848
    %v850 = vpop.f32.mrb[0].mxu0
    %v851 = vadd.f32 %v744, %v850
    %852 = vmatprep.mubr.f32.mxu0 0.0
    %v853 = vand.u32 %v394, 4294901760
    %v854 = vsub.f32 %v394, %v853
    %v855 = vand.u32 %v854, 4294901760
    %856 = vmatmul.mubr.f32.gmra.mrb[0].mxu0 %v855
    %v857 = vpop.f32.mrb[0].mxu0
    %v858 = vadd.f32 %v750, %v857
    %v859 = vpop.f32.mrb[0].mxu0
    %v860 = vadd.f32 %v752, %v859
    %861 = vmatprep.mubr.f32.mxu0 0.0
    %v862 = vand.u32 %v397, 4294901760
    %v863 = vsub.f32 %v397, %v862
    %v864 = vand.u32 %v863, 4294901760
    %865 = vmatmul.mubr.f32.gmra.mrb[0].mxu0 %v864
    %v866 = vpop.f32.mrb[0].mxu0
    %v867 = vadd.f32 %v758, %v866
    %v868 = vpop.f32.mrb[0].mxu0
    %v869 = vadd.f32 %v760, %v868
    %870 = vdwg.mxu0
    %v871 = vand.u32 %v303, 4294901760
    %v872 = vsub.f32 %v303, %v871
    %v873 = vand.u32 %v872, 4294901760
    %874 = vmatprep.subr.mxu0 %v873
    %v875 = vand.u32 %v302, 4294901760
    %v876 = vsub.f32 %v302, %v875
    %v877 = vand.u32 %v876, 4294901760
    %878 = vmatpush1.msra.mxu0 %v877
    %v879 = vand.u32 %v319, 4294901760
    %v880 = vsub.f32 %v319, %v879
    %v881 = vand.u32 %v880, 4294901760
    %882 = vmatprep.subr.mxu0 %v881
    %v883 = vand.u32 %v318, 4294901760
    %v884 = vsub.f32 %v318, %v883
    %v885 = vand.u32 %v884, 4294901760
    %886 = vmatpush1.msra.mxu0 %v885
    %v887 = vand.u32 %v335, 4294901760
    %v888 = vsub.f32 %v335, %v887
    %v889 = vand.u32 %v888, 4294901760
    %890 = vmatprep.subr.mxu0 %v889
    %v891 = vand.u32 %v334, 4294901760
    %v892 = vsub.f32 %v334, %v891
    %v893 = vand.u32 %v892, 4294901760
    %894 = vmatpush1.msra.mxu0 %v893
    %v895 = vand.u32 %v351, 4294901760
    %v896 = vsub.f32 %v351, %v895
    %v897 = vand.u32 %v896, 4294901760
    %898 = vmatprep.subr.mxu0 %v897
    %v899 = vand.u32 %v350, 4294901760
    %v900 = vsub.f32 %v350, %v899
    %v901 = vand.u32 %v900, 4294901760
    %902 = vmatpush1.msra.mxu0 %v901
    %903 = vmatprep.subr.mxu0 0.0
    %904 = vmatpush1.msra.mxu0 0.0
    %905 = vmatprep.subr.mxu0 0.0
    %906 = vmatpush1.msra.mxu0 0.0
    %907 = vmatprep.subr.mxu0 0.0
    %908 = vmatpush1.msra.mxu0 0.0
    %909 = vmatprep.subr.mxu0 0.0
    %910 = vmatpush1.msra.mxu0 0.0
    %911 = vmatprep.subr.mxu0 0.0
    %912 = vmatpush1.msra.mxu0 0.0
    %913 = vmatprep.subr.mxu0 0.0
    %914 = vmatpush1.msra.mxu0 0.0
    %915 = vmatprep.subr.mxu0 0.0
    %916 = vmatpush1.msra.mxu0 0.0
    %917 = vmatprep.subr.mxu0 0.0
    %918 = vmatpush1.msra.mxu0 0.0
    %919 = vmatprep.subr.mxu0 0.0
    %920 = vmatpush1.msra.mxu0 0.0
    %921 = vmatprep.subr.mxu0 0.0
    %922 = vmatpush1.msra.mxu0 0.0
    %923 = vmatprep.subr.mxu0 0.0
    %924 = vmatpush1.msra.mxu0 0.0
    %925 = vmatprep.subr.mxu0 0.0
    %926 = vmatpush1.msra.mxu0 0.0
    %927 = vmatprep.subr.mxu0 0.0
    %928 = vmatpush1.msra.mxu0 0.0
    %929 = vmatprep.subr.mxu0 0.0
    %930 = vmatpush1.msra.mxu0 0.0
    %931 = vmatprep.subr.mxu0 0.0
    %932 = vmatpush1.msra.mxu0 0.0
    %933 = vmatprep.subr.mxu0 0.0
    %934 = vmatpush1.msra.mxu0 0.0
    %935 = vmatprep.subr.mxu0 0.0
    %936 = vmatpush1.msra.mxu0 0.0
    %937 = vmatprep.subr.mxu0 0.0
    %938 = vmatpush1.msra.mxu0 0.0
    %939 = vmatprep.subr.mxu0 0.0
    %940 = vmatpush1.msra.mxu0 0.0
    %941 = vmatprep.subr.mxu0 0.0
    %942 = vmatpush1.msra.mxu0 0.0
    %943 = vmatprep.subr.mxu0 0.0
    %944 = vmatpush1.msra.mxu0 0.0
    %945 = vmatprep.subr.mxu0 0.0
    %946 = vmatpush1.msra.mxu0 0.0
    %947 = vmatprep.subr.mxu0 0.0
    %948 = vmatpush1.msra.mxu0 0.0
    %949 = vmatprep.subr.mxu0 0.0
    %950 = vmatpush1.msra.mxu0 0.0
    %951 = vmatprep.subr.mxu0 0.0
    %952 = vmatpush1.msra.mxu0 0.0
    %953 = vmatprep.subr.mxu0 0.0
    %954 = vmatpush1.msra.mxu0 0.0
    %955 = vmatprep.subr.mxu0 0.0
    %956 = vmatpush1.msra.mxu0 0.0
    %957 = vmatprep.subr.mxu0 0.0
    %958 = vmatpush1.msra.mxu0 0.0
    %959 = vmatprep.mubr.f32.mxu0 0.0
    %v960 = vand.u32 %v388, 4294901760
    %961 = vmatmul.mubr.f32.gmra.mrb[0].mxu0 %v960
    %v962 = vpop.f32.mrb[0].mxu0
    %v963 = vadd.f32 %v840, %v962
    %v964 = vpop.f32.mrb[0].mxu0
    %v965 = vadd.f32 %v842, %v964
    %966 = vmatprep.mubr.f32.mxu0 0.0
    %v967 = vand.u32 %v391, 4294901760
    %968 = vmatmul.mubr.f32.gmra.mrb[0].mxu0 %v967
    %v969 = vpop.f32.mrb[0].mxu0
    %v970 = vadd.f32 %v849, %v969
    %v971 = vpop.f32.mrb[0].mxu0
    %v972 = vadd.f32 %v851, %v971
    %973 = vmatprep.mubr.f32.mxu0 0.0
    %v974 = vand.u32 %v394, 4294901760
    %975 = vmatmul.mubr.f32.gmra.mrb[0].mxu0 %v974
    %v976 = vpop.f32.mrb[0].mxu0
    %v977 = vadd.f32 %v858, %v976
    %v978 = vpop.f32.mrb[0].mxu0
    %v979 = vadd.f32 %v860, %v978
    %980 = vmatprep.mubr.f32.mxu0 0.0
    %v981 = vand.u32 %v397, 4294901760
    %982 = vmatmul.mubr.f32.gmra.mrb[0].mxu0 %v981
    %v983 = vpop.f32.mrb[0].mxu0
    %v984 = vadd.f32 %v867, %v983
    %v985 = vpop.f32.mrb[0].mxu0
    %v986 = vadd.f32 %v869, %v985
    %987 = vdwg.mxu0
    %v988 = vand.u32 %v303, 4294901760
    %989 = vmatprep.subr.mxu0 %v988
    %v990 = vand.u32 %v302, 4294901760
    %991 = vmatpush1.msra.mxu0 %v990
    %v992 = vand.u32 %v319, 4294901760
    %993 = vmatprep.subr.mxu0 %v992
    %v994 = vand.u32 %v318, 4294901760
    %995 = vmatpush1.msra.mxu0 %v994
    %v996 = vand.u32 %v335, 4294901760
    %997 = vmatprep.subr.mxu0 %v996
    %v998 = vand.u32 %v334, 4294901760
    %999 = vmatpush1.msra.mxu0 %v998
    %v1000 = vand.u32 %v351, 4294901760
    %1001 = vmatprep.subr.mxu0 %v1000
    %v1002 = vand.u32 %v350, 4294901760
    %1003 = vmatpush1.msra.mxu0 %v1002
    %1004 = vmatprep.subr.mxu0 0.0
    %1005 = vmatpush1.msra.mxu0 0.0
    %1006 = vmatprep.subr.mxu0 0.0
    %1007 = vmatpush1.msra.mxu0 0.0
    %1008 = vmatprep.subr.mxu0 0.0
    %1009 = vmatpush1.msra.mxu0 0.0
    %1010 = vmatprep.subr.mxu0 0.0
    %1011 = vmatpush1.msra.mxu0 0.0
    %1012 = vmatprep.subr.mxu0 0.0
    %1013 = vmatpush1.msra.mxu0 0.0
    %1014 = vmatprep.subr.mxu0 0.0
    %1015 = vmatpush1.msra.mxu0 0.0
    %1016 = vmatprep.subr.mxu0 0.0
    %1017 = vmatpush1.msra.mxu0 0.0
    %1018 = vmatprep.subr.mxu0 0.0
    %1019 = vmatpush1.msra.mxu0 0.0
    %1020 = vmatprep.subr.mxu0 0.0
    %1021 = vmatpush1.msra.mxu0 0.0
    %1022 = vmatprep.subr.mxu0 0.0
    %1023 = vmatpush1.msra.mxu0 0.0
    %1024 = vmatprep.subr.mxu0 0.0
    %1025 = vmatpush1.msra.mxu0 0.0
    %1026 = vmatprep.subr.mxu0 0.0
    %1027 = vmatpush1.msra.mxu0 0.0
    %1028 = vmatprep.subr.mxu0 0.0
    %1029 = vmatpush1.msra.mxu0 0.0
    %1030 = vmatprep.subr.mxu0 0.0
    %1031 = vmatpush1.msra.mxu0 0.0
    %1032 = vmatprep.subr.mxu0 0.0
    %1033 = vmatpush1.msra.mxu0 0.0
    %1034 = vmatprep.subr.mxu0 0.0
    %1035 = vmatpush1.msra.mxu0 0.0
    %1036 = vmatprep.subr.mxu0 0.0
    %1037 = vmatpush1.msra.mxu0 0.0
    %1038 = vmatprep.subr.mxu0 0.0
    %1039 = vmatpush1.msra.mxu0 0.0
    %1040 = vmatprep.subr.mxu0 0.0
    %1041 = vmatpush1.msra.mxu0 0.0
    %1042 = vmatprep.subr.mxu0 0.0
    %1043 = vmatpush1.msra.mxu0 0.0
    %1044 = vmatprep.subr.mxu0 0.0
    %1045 = vmatpush1.msra.mxu0 0.0
    %1046 = vmatprep.subr.mxu0 0.0
    %1047 = vmatpush1.msra.mxu0 0.0
    %1048 = vmatprep.subr.mxu0 0.0
    %1049 = vmatpush1.msra.mxu0 0.0
    %1050 = vmatprep.subr.mxu0 0.0
    %1051 = vmatpush1.msra.mxu0 0.0
    %1052 = vmatprep.subr.mxu0 0.0
    %1053 = vmatpush1.msra.mxu0 0.0
    %1054 = vmatprep.subr.mxu0 0.0
    %1055 = vmatpush1.msra.mxu0 0.0
    %1056 = vmatprep.subr.mxu0 0.0
    %1057 = vmatpush1.msra.mxu0 0.0
    %1058 = vmatprep.subr.mxu0 0.0
    %1059 = vmatpush1.msra.mxu0 0.0
    %1060 = vmatprep.mubr.f32.mxu0 0.0
    %v1061 = vand.u32 %v388, 4294901760
    %1062 = vmatmul.mubr.f32.gmra.mrb[0].mxu0 %v1061
    %v1063 = vpop.f32.mrb[0].mxu0
    %v1064 = vadd.f32 %v963, %v1063
    %v1065 = vpop.f32.mrb[0].mxu0
    %v1066 = vadd.f32 %v965, %v1065
    %1067 = vmatprep.mubr.f32.mxu0 0.0
    %v1068 = vand.u32 %v391, 4294901760
    %1069 = vmatmul.mubr.f32.gmra.mrb[0].mxu0 %v1068
    %v1070 = vpop.f32.mrb[0].mxu0
    %v1071 = vadd.f32 %v970, %v1070
    %v1072 = vpop.f32.mrb[0].mxu0
    %v1073 = vadd.f32 %v972, %v1072
    %1074 = vmatprep.mubr.f32.mxu0 0.0
    %v1075 = vand.u32 %v394, 4294901760
    %1076 = vmatmul.mubr.f32.gmra.mrb[0].mxu0 %v1075
    %v1077 = vpop.f32.mrb[0].mxu0
    %v1078 = vadd.f32 %v977, %v1077
    %v1079 = vpop.f32.mrb[0].mxu0
    %v1080 = vadd.f32 %v979, %v1079
    %1081 = vmatprep.mubr.f32.mxu0 0.0
    %v1082 = vand.u32 %v397, 4294901760
    %1083 = vmatmul.mubr.f32.gmra.mrb[0].mxu0 %v1082
    %v1084 = vpop.f32.mrb[0].mxu0
    %v1085 = vadd.f32 %v984, %v1084
    %v1086 = vpop.f32.mrb[0].mxu0
    %v1087 = vadd.f32 %v986, %v1086
    %1088 = vdwg.mxu0
    %v1089 = vand.u32 %v305, 4294901760
    %1090 = vmatprep.subr.mxu0 %v1089
    %v1091 = vand.u32 %v304, 4294901760
    %1092 = vmatpush1.msra.mxu0 %v1091
    %v1093 = vand.u32 %v321, 4294901760
    %1094 = vmatprep.subr.mxu0 %v1093
    %v1095 = vand.u32 %v320, 4294901760
    %1096 = vmatpush1.msra.mxu0 %v1095
    %v1097 = vand.u32 %v337, 4294901760
    %1098 = vmatprep.subr.mxu0 %v1097
    %v1099 = vand.u32 %v336, 4294901760
    %1100 = vmatpush1.msra.mxu0 %v1099
    %v1101 = vand.u32 %v353, 4294901760
    %1102 = vmatprep.subr.mxu0 %v1101
    %v1103 = vand.u32 %v352, 4294901760
    %1104 = vmatpush1.msra.mxu0 %v1103
    %1105 = vmatprep.subr.mxu0 0.0
    %1106 = vmatpush1.msra.mxu0 0.0
    %1107 = vmatprep.subr.mxu0 0.0
    %1108 = vmatpush1.msra.mxu0 0.0
    %1109 = vmatprep.subr.mxu0 0.0
    %1110 = vmatpush1.msra.mxu0 0.0
    %1111 = vmatprep.subr.mxu0 0.0
    %1112 = vmatpush1.msra.mxu0 0.0
    %1113 = vmatprep.subr.mxu0 0.0
    %1114 = vmatpush1.msra.mxu0 0.0
    %1115 = vmatprep.subr.mxu0 0.0
    %1116 = vmatpush1.msra.mxu0 0.0
    %1117 = vmatprep.subr.mxu0 0.0
    %1118 = vmatpush1.msra.mxu0 0.0
    %1119 = vmatprep.subr.mxu0 0.0
    %1120 = vmatpush1.msra.mxu0 0.0
    %1121 = vmatprep.subr.mxu0 0.0
    %1122 = vmatpush1.msra.mxu0 0.0
    %1123 = vmatprep.subr.mxu0 0.0
    %1124 = vmatpush1.msra.mxu0 0.0
    %1125 = vmatprep.subr.mxu0 0.0
    %1126 = vmatpush1.msra.mxu0 0.0
    %1127 = vmatprep.subr.mxu0 0.0
    %1128 = vmatpush1.msra.mxu0 0.0
    %1129 = vmatprep.subr.mxu0 0.0
    %1130 = vmatpush1.msra.mxu0 0.0
    %1131 = vmatprep.subr.mxu0 0.0
    %1132 = vmatpush1.msra.mxu0 0.0
    %1133 = vmatprep.subr.mxu0 0.0
    %1134 = vmatpush1.msra.mxu0 0.0
    %1135 = vmatprep.subr.mxu0 0.0
    %1136 = vmatpush1.msra.mxu0 0.0
    %1137 = vmatprep.subr.mxu0 0.0
    %1138 = vmatpush1.msra.mxu0 0.0
    %1139 = vmatprep.subr.mxu0 0.0
    %1140 = vmatpush1.msra.mxu0 0.0
    %1141 = vmatprep.subr.mxu0 0.0
    %1142 = vmatpush1.msra.mxu0 0.0
    %1143 = vmatprep.subr.mxu0 0.0
    %1144 = vmatpush1.msra.mxu0 0.0
    %1145 = vmatprep.subr.mxu0 0.0
    %1146 = vmatpush1.msra.mxu0 0.0
    %1147 = vmatprep.subr.mxu0 0.0
    %1148 = vmatpush1.msra.mxu0 0.0
    %1149 = vmatprep.subr.mxu0 0.0
    %1150 = vmatpush1.msra.mxu0 0.0
    %1151 = vmatprep.subr.mxu0 0.0
    %1152 = vmatpush1.msra.mxu0 0.0
    %1153 = vmatprep.subr.mxu0 0.0
    %1154 = vmatpush1.msra.mxu0 0.0
    %1155 = vmatprep.subr.mxu0 0.0
    %1156 = vmatpush1.msra.mxu0 0.0
    %1157 = vmatprep.subr.mxu0 0.0
    %1158 = vmatpush1.msra.mxu0 0.0
    %1159 = vmatprep.subr.mxu0 0.0
    %1160 = vmatpush1.msra.mxu0 0.0
    %1161 = vmatprep.mubr.f32.mxu0 0.0
    %v1162 = vand.u32 %v388, 4294901760
    %v1163 = vsub.f32 %v388, %v1162
    %v1164 = vand.u32 %v1163, 4294901760
    %v1165 = vsub.f32 %v1163, %v1164
    %v1166 = vand.u32 %v1165, 4294901760
    %1167 = vmatmul.mubr.f32.gmra.mrb[0].mxu0 %v1166
    %v1168 = vpop.f32.mrb[0].mxu0
    %v1169 = vadd.f32 %v369, %v1168
    %v1170 = vpop.f32.mrb[0].mxu0
    %v1171 = vadd.f32 %v369, %v1170
    %1172 = vmatprep.mubr.f32.mxu0 0.0
    %v1173 = vand.u32 %v391, 4294901760
    %v1174 = vsub.f32 %v391, %v1173
    %v1175 = vand.u32 %v1174, 4294901760
    %v1176 = vsub.f32 %v1174, %v1175
    %v1177 = vand.u32 %v1176, 4294901760
    %1178 = vmatmul.mubr.f32.gmra.mrb[0].mxu0 %v1177
    %v1179 = vpop.f32.mrb[0].mxu0
    %v1180 = vadd.f32 %v374, %v1179
    %v1181 = vpop.f32.mrb[0].mxu0
    %v1182 = vadd.f32 %v374, %v1181
    %1183 = vmatprep.mubr.f32.mxu0 0.0
    %v1184 = vand.u32 %v394, 4294901760
    %v1185 = vsub.f32 %v394, %v1184
    %v1186 = vand.u32 %v1185, 4294901760
    %v1187 = vsub.f32 %v1185, %v1186
    %v1188 = vand.u32 %v1187, 4294901760
    %1189 = vmatmul.mubr.f32.gmra.mrb[0].mxu0 %v1188
    %v1190 = vpop.f32.mrb[0].mxu0
    %v1191 = vadd.f32 %v379, %v1190
    %v1192 = vpop.f32.mrb[0].mxu0
    %v1193 = vadd.f32 %v379, %v1192
    %1194 = vmatprep.mubr.f32.mxu0 0.0
    %v1195 = vand.u32 %v397, 4294901760
    %v1196 = vsub.f32 %v397, %v1195
    %v1197 = vand.u32 %v1196, 4294901760
    %v1198 = vsub.f32 %v1196, %v1197
    %v1199 = vand.u32 %v1198, 4294901760
    %1200 = vmatmul.mubr.f32.gmra.mrb[0].mxu0 %v1199
    %v1201 = vpop.f32.mrb[0].mxu0
    %v1202 = vadd.f32 %v384, %v1201
    %v1203 = vpop.f32.mrb[0].mxu0
    %v1204 = vadd.f32 %v384, %v1203
    %1205 = vdwg.mxu0
    %v1206 = vand.u32 %v305, 4294901760
    %v1207 = vsub.f32 %v305, %v1206
    %v1208 = vand.u32 %v1207, 4294901760
    %v1209 = vsub.f32 %v1207, %v1208
    %v1210 = vand.u32 %v1209, 4294901760
    %1211 = vmatprep.subr.mxu0 %v1210
    %v1212 = vand.u32 %v304, 4294901760
    %v1213 = vsub.f32 %v304, %v1212
    %v1214 = vand.u32 %v1213, 4294901760
    %v1215 = vsub.f32 %v1213, %v1214
    %v1216 = vand.u32 %v1215, 4294901760
    %1217 = vmatpush1.msra.mxu0 %v1216
    %v1218 = vand.u32 %v321, 4294901760
    %v1219 = vsub.f32 %v321, %v1218
    %v1220 = vand.u32 %v1219, 4294901760
    %v1221 = vsub.f32 %v1219, %v1220
    %v1222 = vand.u32 %v1221, 4294901760
    %1223 = vmatprep.subr.mxu0 %v1222
    %v1224 = vand.u32 %v320, 4294901760
    %v1225 = vsub.f32 %v320, %v1224
    %v1226 = vand.u32 %v1225, 4294901760
    %v1227 = vsub.f32 %v1225, %v1226
    %v1228 = vand.u32 %v1227, 4294901760
    %1229 = vmatpush1.msra.mxu0 %v1228
    %v1230 = vand.u32 %v337, 4294901760
    %v1231 = vsub.f32 %v337, %v1230
    %v1232 = vand.u32 %v1231, 4294901760
    %v1233 = vsub.f32 %v1231, %v1232
    %v1234 = vand.u32 %v1233, 4294901760
    %1235 = vmatprep.subr.mxu0 %v1234
    %v1236 = vand.u32 %v336, 4294901760
    %v1237 = vsub.f32 %v336, %v1236
    %v1238 = vand.u32 %v1237, 4294901760
    %v1239 = vsub.f32 %v1237, %v1238
    %v1240 = vand.u32 %v1239, 4294901760
    %1241 = vmatpush1.msra.mxu0 %v1240
    %v1242 = vand.u32 %v353, 4294901760
    %v1243 = vsub.f32 %v353, %v1242
    %v1244 = vand.u32 %v1243, 4294901760
    %v1245 = vsub.f32 %v1243, %v1244
    %v1246 = vand.u32 %v1245, 4294901760
    %1247 = vmatprep.subr.mxu0 %v1246
    %v1248 = vand.u32 %v352, 4294901760
    %v1249 = vsub.f32 %v352, %v1248
    %v1250 = vand.u32 %v1249, 4294901760
    %v1251 = vsub.f32 %v1249, %v1250
    %v1252 = vand.u32 %v1251, 4294901760
    %1253 = vmatpush1.msra.mxu0 %v1252
    %1254 = vmatprep.subr.mxu0 0.0
    %1255 = vmatpush1.msra.mxu0 0.0
    %1256 = vmatprep.subr.mxu0 0.0
    %1257 = vmatpush1.msra.mxu0 0.0
    %1258 = vmatprep.subr.mxu0 0.0
    %1259 = vmatpush1.msra.mxu0 0.0
    %1260 = vmatprep.subr.mxu0 0.0
    %1261 = vmatpush1.msra.mxu0 0.0
    %1262 = vmatprep.subr.mxu0 0.0
    %1263 = vmatpush1.msra.mxu0 0.0
    %1264 = vmatprep.subr.mxu0 0.0
    %1265 = vmatpush1.msra.mxu0 0.0
    %1266 = vmatprep.subr.mxu0 0.0
    %1267 = vmatpush1.msra.mxu0 0.0
    %1268 = vmatprep.subr.mxu0 0.0
    %1269 = vmatpush1.msra.mxu0 0.0
    %1270 = vmatprep.subr.mxu0 0.0
    %1271 = vmatpush1.msra.mxu0 0.0
    %1272 = vmatprep.subr.mxu0 0.0
    %1273 = vmatpush1.msra.mxu0 0.0
    %1274 = vmatprep.subr.mxu0 0.0
    %1275 = vmatpush1.msra.mxu0 0.0
    %1276 = vmatprep.subr.mxu0 0.0
    %1277 = vmatpush1.msra.mxu0 0.0
    %1278 = vmatprep.subr.mxu0 0.0
    %1279 = vmatpush1.msra.mxu0 0.0
    %1280 = vmatprep.subr.mxu0 0.0
    %1281 = vmatpush1.msra.mxu0 0.0
    %1282 = vmatprep.subr.mxu0 0.0
    %1283 = vmatpush1.msra.mxu0 0.0
    %1284 = vmatprep.subr.mxu0 0.0
    %1285 = vmatpush1.msra.mxu0 0.0
    %1286 = vmatprep.subr.mxu0 0.0
    %1287 = vmatpush1.msra.mxu0 0.0
    %1288 = vmatprep.subr.mxu0 0.0
    %1289 = vmatpush1.msra.mxu0 0.0
    %1290 = vmatprep.subr.mxu0 0.0
    %1291 = vmatpush1.msra.mxu0 0.0
    %1292 = vmatprep.subr.mxu0 0.0
    %1293 = vmatpush1.msra.mxu0 0.0
    %1294 = vmatprep.subr.mxu0 0.0
    %1295 = vmatpush1.msra.mxu0 0.0
    %1296 = vmatprep.subr.mxu0 0.0
    %1297 = vmatpush1.msra.mxu0 0.0
    %1298 = vmatprep.subr.mxu0 0.0
    %1299 = vmatpush1.msra.mxu0 0.0
    %1300 = vmatprep.subr.mxu0 0.0
    %1301 = vmatpush1.msra.mxu0 0.0
    %1302 = vmatprep.subr.mxu0 0.0
    %1303 = vmatpush1.msra.mxu0 0.0
    %1304 = vmatprep.subr.mxu0 0.0
    %1305 = vmatpush1.msra.mxu0 0.0
    %1306 = vmatprep.subr.mxu0 0.0
    %1307 = vmatpush1.msra.mxu0 0.0
    %1308 = vmatprep.subr.mxu0 0.0
    %1309 = vmatpush1.msra.mxu0 0.0
    %1310 = vmatprep.mubr.f32.mxu0 0.0
    %v1311 = vand.u32 %v388, 4294901760
    %1312 = vmatmul.mubr.f32.gmra.mrb[0].mxu0 %v1311
    %v1313 = vpop.f32.mrb[0].mxu0
    %v1314 = vadd.f32 %v1169, %v1313
    %v1315 = vpop.f32.mrb[0].mxu0
    %v1316 = vadd.f32 %v1171, %v1315
    %1317 = vmatprep.mubr.f32.mxu0 0.0
    %v1318 = vand.u32 %v391, 4294901760
    %1319 = vmatmul.mubr.f32.gmra.mrb[0].mxu0 %v1318
    %v1320 = vpop.f32.mrb[0].mxu0
    %v1321 = vadd.f32 %v1180, %v1320
    %v1322 = vpop.f32.mrb[0].mxu0
    %v1323 = vadd.f32 %v1182, %v1322
    %1324 = vmatprep.mubr.f32.mxu0 0.0
    %v1325 = vand.u32 %v394, 4294901760
    %1326 = vmatmul.mubr.f32.gmra.mrb[0].mxu0 %v1325
    %v1327 = vpop.f32.mrb[0].mxu0
    %v1328 = vadd.f32 %v1191, %v1327
    %v1329 = vpop.f32.mrb[0].mxu0
    %v1330 = vadd.f32 %v1193, %v1329
    %1331 = vmatprep.mubr.f32.mxu0 0.0
    %v1332 = vand.u32 %v397, 4294901760
    %1333 = vmatmul.mubr.f32.gmra.mrb[0].mxu0 %v1332
    %v1334 = vpop.f32.mrb[0].mxu0
    %v1335 = vadd.f32 %v1202, %v1334
    %v1336 = vpop.f32.mrb[0].mxu0
    %v1337 = vadd.f32 %v1204, %v1336
    %1338 = vdwg.mxu0
    %v1339 = vand.u32 %v305, 4294901760
    %v1340 = vsub.f32 %v305, %v1339
    %1341 = vmatprep.subr.mxu0 %v1340
    %v1342 = vand.u32 %v304, 4294901760
    %v1343 = vsub.f32 %v304, %v1342
    %1344 = vmatpush1.msra.mxu0 %v1343
    %v1345 = vand.u32 %v321, 4294901760
    %v1346 = vsub.f32 %v321, %v1345
    %1347 = vmatprep.subr.mxu0 %v1346
    %v1348 = vand.u32 %v320, 4294901760
    %v1349 = vsub.f32 %v320, %v1348
    %1350 = vmatpush1.msra.mxu0 %v1349
    %v1351 = vand.u32 %v337, 4294901760
    %v1352 = vsub.f32 %v337, %v1351
    %1353 = vmatprep.subr.mxu0 %v1352
    %v1354 = vand.u32 %v336, 4294901760
    %v1355 = vsub.f32 %v336, %v1354
    %1356 = vmatpush1.msra.mxu0 %v1355
    %v1357 = vand.u32 %v353, 4294901760
    %v1358 = vsub.f32 %v353, %v1357
    %1359 = vmatprep.subr.mxu0 %v1358
    %v1360 = vand.u32 %v352, 4294901760
    %v1361 = vsub.f32 %v352, %v1360
    %1362 = vmatpush1.msra.mxu0 %v1361
    %1363 = vmatprep.subr.mxu0 0.0
    %1364 = vmatpush1.msra.mxu0 0.0
    %1365 = vmatprep.subr.mxu0 0.0
    %1366 = vmatpush1.msra.mxu0 0.0
    %1367 = vmatprep.subr.mxu0 0.0
    %1368 = vmatpush1.msra.mxu0 0.0
    %1369 = vmatprep.subr.mxu0 0.0
    %1370 = vmatpush1.msra.mxu0 0.0
    %1371 = vmatprep.subr.mxu0 0.0
    %1372 = vmatpush1.msra.mxu0 0.0
    %1373 = vmatprep.subr.mxu0 0.0
    %1374 = vmatpush1.msra.mxu0 0.0
    %1375 = vmatprep.subr.mxu0 0.0
    %1376 = vmatpush1.msra.mxu0 0.0
    %1377 = vmatprep.subr.mxu0 0.0
    %1378 = vmatpush1.msra.mxu0 0.0
    %1379 = vmatprep.subr.mxu0 0.0
    %1380 = vmatpush1.msra.mxu0 0.0
    %1381 = vmatprep.subr.mxu0 0.0
    %1382 = vmatpush1.msra.mxu0 0.0
    %1383 = vmatprep.subr.mxu0 0.0
    %1384 = vmatpush1.msra.mxu0 0.0
    %1385 = vmatprep.subr.mxu0 0.0
    %1386 = vmatpush1.msra.mxu0 0.0
    %1387 = vmatprep.subr.mxu0 0.0
    %1388 = vmatpush1.msra.mxu0 0.0
    %1389 = vmatprep.subr.mxu0 0.0
    %1390 = vmatpush1.msra.mxu0 0.0
    %1391 = vmatprep.subr.mxu0 0.0
    %1392 = vmatpush1.msra.mxu0 0.0
    %1393 = vmatprep.subr.mxu0 0.0
    %1394 = vmatpush1.msra.mxu0 0.0
    %1395 = vmatprep.subr.mxu0 0.0
    %1396 = vmatpush1.msra.mxu0 0.0
    %1397 = vmatprep.subr.mxu0 0.0
    %1398 = vmatpush1.msra.mxu0 0.0
    %1399 = vmatprep.subr.mxu0 0.0
    %1400 = vmatpush1.msra.mxu0 0.0
    %1401 = vmatprep.subr.mxu0 0.0
    %1402 = vmatpush1.msra.mxu0 0.0
    %1403 = vmatprep.subr.mxu0 0.0
    %1404 = vmatpush1.msra.mxu0 0.0
    %1405 = vmatprep.subr.mxu0 0.0
    %1406 = vmatpush1.msra.mxu0 0.0
    %1407 = vmatprep.subr.mxu0 0.0
    %1408 = vmatpush1.msra.mxu0 0.0
    %1409 = vmatprep.subr.mxu0 0.0
    %1410 = vmatpush1.msra.mxu0 0.0
    %1411 = vmatprep.subr.mxu0 0.0
    %1412 = vmatpush1.msra.mxu0 0.0
    %1413 = vmatprep.subr.mxu0 0.0
    %1414 = vmatpush1.msra.mxu0 0.0
    %1415 = vmatprep.subr.mxu0 0.0
    %1416 = vmatpush1.msra.mxu0 0.0
    %1417 = vmatprep.subr.mxu0 0.0
    %1418 = vmatpush1.msra.mxu0 0.0
    %1419 = vmatprep.mubr.f32.mxu0 0.0
    %v1420 = vand.u32 %v388, 4294901760
    %v1421 = vsub.f32 %v388, %v1420
    %1422 = vmatmul.mubr.f32.gmra.mrb[0].mxu0 %v1421
    %v1423 = vpop.f32.mrb[0].mxu0
    %v1424 = vadd.f32 %v1314, %v1423
    %v1425 = vpop.f32.mrb[0].mxu0
    %v1426 = vadd.f32 %v1316, %v1425
    %1427 = vmatprep.mubr.f32.mxu0 0.0
    %v1428 = vand.u32 %v391, 4294901760
    %v1429 = vsub.f32 %v391, %v1428
    %1430 = vmatmul.mubr.f32.gmra.mrb[0].mxu0 %v1429
    %v1431 = vpop.f32.mrb[0].mxu0
    %v1432 = vadd.f32 %v1321, %v1431
    %v1433 = vpop.f32.mrb[0].mxu0
    %v1434 = vadd.f32 %v1323, %v1433
    %1435 = vmatprep.mubr.f32.mxu0 0.0
    %v1436 = vand.u32 %v394, 4294901760
    %v1437 = vsub.f32 %v394, %v1436
    %1438 = vmatmul.mubr.f32.gmra.mrb[0].mxu0 %v1437
    %v1439 = vpop.f32.mrb[0].mxu0
    %v1440 = vadd.f32 %v1328, %v1439
    %v1441 = vpop.f32.mrb[0].mxu0
    %v1442 = vadd.f32 %v1330, %v1441
    %1443 = vmatprep.mubr.f32.mxu0 0.0
    %v1444 = vand.u32 %v397, 4294901760
    %v1445 = vsub.f32 %v397, %v1444
    %1446 = vmatmul.mubr.f32.gmra.mrb[0].mxu0 %v1445
    %v1447 = vpop.f32.mrb[0].mxu0
    %v1448 = vadd.f32 %v1335, %v1447
    %v1449 = vpop.f32.mrb[0].mxu0
    %v1450 = vadd.f32 %v1337, %v1449
    %1451 = vdwg.mxu0
    %v1452 = vand.u32 %v305, 4294901760
    %1453 = vmatprep.subr.mxu0 %v1452
    %v1454 = vand.u32 %v304, 4294901760
    %1455 = vmatpush1.msra.mxu0 %v1454
    %v1456 = vand.u32 %v321, 4294901760
    %1457 = vmatprep.subr.mxu0 %v1456
    %v1458 = vand.u32 %v320, 4294901760
    %1459 = vmatpush1.msra.mxu0 %v1458
    %v1460 = vand.u32 %v337, 4294901760
    %1461 = vmatprep.subr.mxu0 %v1460
    %v1462 = vand.u32 %v336, 4294901760
    %1463 = vmatpush1.msra.mxu0 %v1462
    %v1464 = vand.u32 %v353, 4294901760
    %1465 = vmatprep.subr.mxu0 %v1464
    %v1466 = vand.u32 %v352, 4294901760
    %1467 = vmatpush1.msra.mxu0 %v1466
    %1468 = vmatprep.subr.mxu0 0.0
    %1469 = vmatpush1.msra.mxu0 0.0
    %1470 = vmatprep.subr.mxu0 0.0
    %1471 = vmatpush1.msra.mxu0 0.0
    %1472 = vmatprep.subr.mxu0 0.0
    %1473 = vmatpush1.msra.mxu0 0.0
    %1474 = vmatprep.subr.mxu0 0.0
    %1475 = vmatpush1.msra.mxu0 0.0
    %1476 = vmatprep.subr.mxu0 0.0
    %1477 = vmatpush1.msra.mxu0 0.0
    %1478 = vmatprep.subr.mxu0 0.0
    %1479 = vmatpush1.msra.mxu0 0.0
    %1480 = vmatprep.subr.mxu0 0.0
    %1481 = vmatpush1.msra.mxu0 0.0
    %1482 = vmatprep.subr.mxu0 0.0
    %1483 = vmatpush1.msra.mxu0 0.0
    %1484 = vmatprep.subr.mxu0 0.0
    %1485 = vmatpush1.msra.mxu0 0.0
    %1486 = vmatprep.subr.mxu0 0.0
    %1487 = vmatpush1.msra.mxu0 0.0
    %1488 = vmatprep.subr.mxu0 0.0
    %1489 = vmatpush1.msra.mxu0 0.0
    %1490 = vmatprep.subr.mxu0 0.0
    %1491 = vmatpush1.msra.mxu0 0.0
    %1492 = vmatprep.subr.mxu0 0.0
    %1493 = vmatpush1.msra.mxu0 0.0
    %1494 = vmatprep.subr.mxu0 0.0
    %1495 = vmatpush1.msra.mxu0 0.0
    %1496 = vmatprep.subr.mxu0 0.0
    %1497 = vmatpush1.msra.mxu0 0.0
    %1498 = vmatprep.subr.mxu0 0.0
    %1499 = vmatpush1.msra.mxu0 0.0
    %1500 = vmatprep.subr.mxu0 0.0
    %1501 = vmatpush1.msra.mxu0 0.0
    %1502 = vmatprep.subr.mxu0 0.0
    %1503 = vmatpush1.msra.mxu0 0.0
    %1504 = vmatprep.subr.mxu0 0.0
    %1505 = vmatpush1.msra.mxu0 0.0
    %1506 = vmatprep.subr.mxu0 0.0
    %1507 = vmatpush1.msra.mxu0 0.0
    %1508 = vmatprep.subr.mxu0 0.0
    %1509 = vmatpush1.msra.mxu0 0.0
    %1510 = vmatprep.subr.mxu0 0.0
    %1511 = vmatpush1.msra.mxu0 0.0
    %1512 = vmatprep.subr.mxu0 0.0
    %1513 = vmatpush1.msra.mxu0 0.0
    %1514 = vmatprep.subr.mxu0 0.0
    %1515 = vmatpush1.msra.mxu0 0.0
    %1516 = vmatprep.subr.mxu0 0.0
    %1517 = vmatpush1.msra.mxu0 0.0
    %1518 = vmatprep.subr.mxu0 0.0
    %1519 = vmatpush1.msra.mxu0 0.0
    %1520 = vmatprep.subr.mxu0 0.0
    %1521 = vmatpush1.msra.mxu0 0.0
    %1522 = vmatprep.subr.mxu0 0.0
    %1523 = vmatpush1.msra.mxu0 0.0
    %1524 = vmatprep.mubr.f32.mxu0 0.0
    %v1525 = vand.u32 %v388, 4294901760
    %v1526 = vsub.f32 %v388, %v1525
    %v1527 = vand.u32 %v1526, 4294901760
    %1528 = vmatmul.mubr.f32.gmra.mrb[0].mxu0 %v1527
    %v1529 = vpop.f32.mrb[0].mxu0
    %v1530 = vadd.f32 %v1424, %v1529
    %v1531 = vpop.f32.mrb[0].mxu0
    %v1532 = vadd.f32 %v1426, %v1531
    %1533 = vmatprep.mubr.f32.mxu0 0.0
    %v1534 = vand.u32 %v391, 4294901760
    %v1535 = vsub.f32 %v391, %v1534
    %v1536 = vand.u32 %v1535, 4294901760
    %1537 = vmatmul.mubr.f32.gmra.mrb[0].mxu0 %v1536
    %v1538 = vpop.f32.mrb[0].mxu0
    %v1539 = vadd.f32 %v1432, %v1538
    %v1540 = vpop.f32.mrb[0].mxu0
    %v1541 = vadd.f32 %v1434, %v1540
    %1542 = vmatprep.mubr.f32.mxu0 0.0
    %v1543 = vand.u32 %v394, 4294901760
    %v1544 = vsub.f32 %v394, %v1543
    %v1545 = vand.u32 %v1544, 4294901760
    %1546 = vmatmul.mubr.f32.gmra.mrb[0].mxu0 %v1545
    %v1547 = vpop.f32.mrb[0].mxu0
    %v1548 = vadd.f32 %v1440, %v1547
    %v1549 = vpop.f32.mrb[0].mxu0
    %v1550 = vadd.f32 %v1442, %v1549
    %1551 = vmatprep.mubr.f32.mxu0 0.0
    %v1552 = vand.u32 %v397, 4294901760
    %v1553 = vsub.f32 %v397, %v1552
    %v1554 = vand.u32 %v1553, 4294901760
    %1555 = vmatmul.mubr.f32.gmra.mrb[0].mxu0 %v1554
    %v1556 = vpop.f32.mrb[0].mxu0
    %v1557 = vadd.f32 %v1448, %v1556
    %v1558 = vpop.f32.mrb[0].mxu0
    %v1559 = vadd.f32 %v1450, %v1558
    %1560 = vdwg.mxu0
    %v1561 = vand.u32 %v305, 4294901760
    %v1562 = vsub.f32 %v305, %v1561
    %v1563 = vand.u32 %v1562, 4294901760
    %1564 = vmatprep.subr.mxu0 %v1563
    %v1565 = vand.u32 %v304, 4294901760
    %v1566 = vsub.f32 %v304, %v1565
    %v1567 = vand.u32 %v1566, 4294901760
    %1568 = vmatpush1.msra.mxu0 %v1567
    %v1569 = vand.u32 %v321, 4294901760
    %v1570 = vsub.f32 %v321, %v1569
    %v1571 = vand.u32 %v1570, 4294901760
    %1572 = vmatprep.subr.mxu0 %v1571
    %v1573 = vand.u32 %v320, 4294901760
    %v1574 = vsub.f32 %v320, %v1573
    %v1575 = vand.u32 %v1574, 4294901760
    %1576 = vmatpush1.msra.mxu0 %v1575
    %v1577 = vand.u32 %v337, 4294901760
    %v1578 = vsub.f32 %v337, %v1577
    %v1579 = vand.u32 %v1578, 4294901760
    %1580 = vmatprep.subr.mxu0 %v1579
    %v1581 = vand.u32 %v336, 4294901760
    %v1582 = vsub.f32 %v336, %v1581
    %v1583 = vand.u32 %v1582, 4294901760
    %1584 = vmatpush1.msra.mxu0 %v1583
    %v1585 = vand.u32 %v353, 4294901760
    %v1586 = vsub.f32 %v353, %v1585
    %v1587 = vand.u32 %v1586, 4294901760
    %1588 = vmatprep.subr.mxu0 %v1587
    %v1589 = vand.u32 %v352, 4294901760
    %v1590 = vsub.f32 %v352, %v1589
    %v1591 = vand.u32 %v1590, 4294901760
    %1592 = vmatpush1.msra.mxu0 %v1591
    %1593 = vmatprep.subr.mxu0 0.0
    %1594 = vmatpush1.msra.mxu0 0.0
    %1595 = vmatprep.subr.mxu0 0.0
    %1596 = vmatpush1.msra.mxu0 0.0
    %1597 = vmatprep.subr.mxu0 0.0
    %1598 = vmatpush1.msra.mxu0 0.0
    %1599 = vmatprep.subr.mxu0 0.0
    %1600 = vmatpush1.msra.mxu0 0.0
    %1601 = vmatprep.subr.mxu0 0.0
    %1602 = vmatpush1.msra.mxu0 0.0
    %1603 = vmatprep.subr.mxu0 0.0
    %1604 = vmatpush1.msra.mxu0 0.0
    %1605 = vmatprep.subr.mxu0 0.0
    %1606 = vmatpush1.msra.mxu0 0.0
    %1607 = vmatprep.subr.mxu0 0.0
    %1608 = vmatpush1.msra.mxu0 0.0
    %1609 = vmatprep.subr.mxu0 0.0
    %1610 = vmatpush1.msra.mxu0 0.0
    %1611 = vmatprep.subr.mxu0 0.0
    %1612 = vmatpush1.msra.mxu0 0.0
    %1613 = vmatprep.subr.mxu0 0.0
    %1614 = vmatpush1.msra.mxu0 0.0
    %1615 = vmatprep.subr.mxu0 0.0
    %1616 = vmatpush1.msra.mxu0 0.0
    %1617 = vmatprep.subr.mxu0 0.0
    %1618 = vmatpush1.msra.mxu0 0.0
    %1619 = vmatprep.subr.mxu0 0.0
    %1620 = vmatpush1.msra.mxu0 0.0
    %1621 = vmatprep.subr.mxu0 0.0
    %1622 = vmatpush1.msra.mxu0 0.0
    %1623 = vmatprep.subr.mxu0 0.0
    %1624 = vmatpush1.msra.mxu0 0.0
    %1625 = vmatprep.subr.mxu0 0.0
    %1626 = vmatpush1.msra.mxu0 0.0
    %1627 = vmatprep.subr.mxu0 0.0
    %1628 = vmatpush1.msra.mxu0 0.0
    %1629 = vmatprep.subr.mxu0 0.0
    %1630 = vmatpush1.msra.mxu0 0.0
    %1631 = vmatprep.subr.mxu0 0.0
    %1632 = vmatpush1.msra.mxu0 0.0
    %1633 = vmatprep.subr.mxu0 0.0
    %1634 = vmatpush1.msra.mxu0 0.0
    %1635 = vmatprep.subr.mxu0 0.0
    %1636 = vmatpush1.msra.mxu0 0.0
    %1637 = vmatprep.subr.mxu0 0.0
    %1638 = vmatpush1.msra.mxu0 0.0
    %1639 = vmatprep.subr.mxu0 0.0
    %1640 = vmatpush1.msra.mxu0 0.0
    %1641 = vmatprep.subr.mxu0 0.0
    %1642 = vmatpush1.msra.mxu0 0.0
    %1643 = vmatprep.subr.mxu0 0.0
    %1644 = vmatpush1.msra.mxu0 0.0
    %1645 = vmatprep.subr.mxu0 0.0
    %1646 = vmatpush1.msra.mxu0 0.0
    %1647 = vmatprep.subr.mxu0 0.0
    %1648 = vmatpush1.msra.mxu0 0.0
    %1649 = vmatprep.mubr.f32.mxu0 0.0
    %v1650 = vand.u32 %v388, 4294901760
    %1651 = vmatmul.mubr.f32.gmra.mrb[0].mxu0 %v1650
    %v1652 = vpop.f32.mrb[0].mxu0
    %v1653 = vadd.f32 %v1530, %v1652
    %v1654 = vpop.f32.mrb[0].mxu0
    %v1655 = vadd.f32 %v1532, %v1654
    %1656 = vmatprep.mubr.f32.mxu0 0.0
    %v1657 = vand.u32 %v391, 4294901760
    %1658 = vmatmul.mubr.f32.gmra.mrb[0].mxu0 %v1657
    %v1659 = vpop.f32.mrb[0].mxu0
    %v1660 = vadd.f32 %v1539, %v1659
    %v1661 = vpop.f32.mrb[0].mxu0
    %v1662 = vadd.f32 %v1541, %v1661
    %1663 = vmatprep.mubr.f32.mxu0 0.0
    %v1664 = vand.u32 %v394, 4294901760
    %1665 = vmatmul.mubr.f32.gmra.mrb[0].mxu0 %v1664
    %v1666 = vpop.f32.mrb[0].mxu0
    %v1667 = vadd.f32 %v1548, %v1666
    %v1668 = vpop.f32.mrb[0].mxu0
    %v1669 = vadd.f32 %v1550, %v1668
    %1670 = vmatprep.mubr.f32.mxu0 0.0
    %v1671 = vand.u32 %v397, 4294901760
    %1672 = vmatmul.mubr.f32.gmra.mrb[0].mxu0 %v1671
    %v1673 = vpop.f32.mrb[0].mxu0
    %v1674 = vadd.f32 %v1557, %v1673
    %v1675 = vpop.f32.mrb[0].mxu0
    %v1676 = vadd.f32 %v1559, %v1675
    %1677 = vdwg.mxu0
    %v1678 = vand.u32 %v305, 4294901760
    %1679 = vmatprep.subr.mxu0 %v1678
    %v1680 = vand.u32 %v304, 4294901760
    %1681 = vmatpush1.msra.mxu0 %v1680
    %v1682 = vand.u32 %v321, 4294901760
    %1683 = vmatprep.subr.mxu0 %v1682
    %v1684 = vand.u32 %v320, 4294901760
    %1685 = vmatpush1.msra.mxu0 %v1684
    %v1686 = vand.u32 %v337, 4294901760
    %1687 = vmatprep.subr.mxu0 %v1686
    %v1688 = vand.u32 %v336, 4294901760
    %1689 = vmatpush1.msra.mxu0 %v1688
    %v1690 = vand.u32 %v353, 4294901760
    %1691 = vmatprep.subr.mxu0 %v1690
    %v1692 = vand.u32 %v352, 4294901760
    %1693 = vmatpush1.msra.mxu0 %v1692
    %1694 = vmatprep.subr.mxu0 0.0
    %1695 = vmatpush1.msra.mxu0 0.0
    %1696 = vmatprep.subr.mxu0 0.0
    %1697 = vmatpush1.msra.mxu0 0.0
    %1698 = vmatprep.subr.mxu0 0.0
    %1699 = vmatpush1.msra.mxu0 0.0
    %1700 = vmatprep.subr.mxu0 0.0
    %1701 = vmatpush1.msra.mxu0 0.0
    %1702 = vmatprep.subr.mxu0 0.0
    %1703 = vmatpush1.msra.mxu0 0.0
    %1704 = vmatprep.subr.mxu0 0.0
    %1705 = vmatpush1.msra.mxu0 0.0
    %1706 = vmatprep.subr.mxu0 0.0
    %1707 = vmatpush1.msra.mxu0 0.0
    %1708 = vmatprep.subr.mxu0 0.0
    %1709 = vmatpush1.msra.mxu0 0.0
    %1710 = vmatprep.subr.mxu0 0.0
    %1711 = vmatpush1.msra.mxu0 0.0
    %1712 = vmatprep.subr.mxu0 0.0
    %1713 = vmatpush1.msra.mxu0 0.0
    %1714 = vmatprep.subr.mxu0 0.0
    %1715 = vmatpush1.msra.mxu0 0.0
    %1716 = vmatprep.subr.mxu0 0.0
    %1717 = vmatpush1.msra.mxu0 0.0
    %1718 = vmatprep.subr.mxu0 0.0
    %1719 = vmatpush1.msra.mxu0 0.0
    %1720 = vmatprep.subr.mxu0 0.0
    %1721 = vmatpush1.msra.mxu0 0.0
    %1722 = vmatprep.subr.mxu0 0.0
    %1723 = vmatpush1.msra.mxu0 0.0
    %1724 = vmatprep.subr.mxu0 0.0
    %1725 = vmatpush1.msra.mxu0 0.0
    %1726 = vmatprep.subr.mxu0 0.0
    %1727 = vmatpush1.msra.mxu0 0.0
    %1728 = vmatprep.subr.mxu0 0.0
    %1729 = vmatpush1.msra.mxu0 0.0
    %1730 = vmatprep.subr.mxu0 0.0
    %1731 = vmatpush1.msra.mxu0 0.0
    %1732 = vmatprep.subr.mxu0 0.0
    %1733 = vmatpush1.msra.mxu0 0.0
    %1734 = vmatprep.subr.mxu0 0.0
    %1735 = vmatpush1.msra.mxu0 0.0
    %1736 = vmatprep.subr.mxu0 0.0
    %1737 = vmatpush1.msra.mxu0 0.0
    %1738 = vmatprep.subr.mxu0 0.0
    %1739 = vmatpush1.msra.mxu0 0.0
    %1740 = vmatprep.subr.mxu0 0.0
    %1741 = vmatpush1.msra.mxu0 0.0
    %1742 = vmatprep.subr.mxu0 0.0
    %1743 = vmatpush1.msra.mxu0 0.0
    %1744 = vmatprep.subr.mxu0 0.0
    %1745 = vmatpush1.msra.mxu0 0.0
    %1746 = vmatprep.subr.mxu0 0.0
    %1747 = vmatpush1.msra.mxu0 0.0
    %1748 = vmatprep.subr.mxu0 0.0
    %1749 = vmatpush1.msra.mxu0 0.0
    %1750 = vmatprep.mubr.f32.mxu0 0.0
    %v1751 = vand.u32 %v388, 4294901760
    %1752 = vmatmul.mubr.f32.gmra.mrb[0].mxu0 %v1751
    %v1753 = vpop.f32.mrb[0].mxu0
    %v1754 = vadd.f32 %v1653, %v1753
    %v1755 = vpop.f32.mrb[0].mxu0
    %v1756 = vadd.f32 %v1655, %v1755
    %1757 = vmatprep.mubr.f32.mxu0 0.0
    %v1758 = vand.u32 %v391, 4294901760
    %1759 = vmatmul.mubr.f32.gmra.mrb[0].mxu0 %v1758
    %v1760 = vpop.f32.mrb[0].mxu0
    %v1761 = vadd.f32 %v1660, %v1760
    %v1762 = vpop.f32.mrb[0].mxu0
    %v1763 = vadd.f32 %v1662, %v1762
    %1764 = vmatprep.mubr.f32.mxu0 0.0
    %v1765 = vand.u32 %v394, 4294901760
    %1766 = vmatmul.mubr.f32.gmra.mrb[0].mxu0 %v1765
    %v1767 = vpop.f32.mrb[0].mxu0
    %v1768 = vadd.f32 %v1667, %v1767
    %v1769 = vpop.f32.mrb[0].mxu0
    %v1770 = vadd.f32 %v1669, %v1769
    %1771 = vmatprep.mubr.f32.mxu0 0.0
    %v1772 = vand.u32 %v397, 4294901760
    %1773 = vmatmul.mubr.f32.gmra.mrb[0].mxu0 %v1772
    %v1774 = vpop.f32.mrb[0].mxu0
    %v1775 = vadd.f32 %v1674, %v1774
    %v1776 = vpop.f32.mrb[0].mxu0
    %v1777 = vadd.f32 %v1676, %v1776
    %1778 = vdwg.mxu0
    %v1779 = vand.u32 %v307, 4294901760
    %1780 = vmatprep.subr.mxu0 %v1779
    %v1781 = vand.u32 %v306, 4294901760
    %1782 = vmatpush1.msra.mxu0 %v1781
    %v1783 = vand.u32 %v323, 4294901760
    %1784 = vmatprep.subr.mxu0 %v1783
    %v1785 = vand.u32 %v322, 4294901760
    %1786 = vmatpush1.msra.mxu0 %v1785
    %v1787 = vand.u32 %v339, 4294901760
    %1788 = vmatprep.subr.mxu0 %v1787
    %v1789 = vand.u32 %v338, 4294901760
    %1790 = vmatpush1.msra.mxu0 %v1789
    %v1791 = vand.u32 %v355, 4294901760
    %1792 = vmatprep.subr.mxu0 %v1791
    %v1793 = vand.u32 %v354, 4294901760
    %1794 = vmatpush1.msra.mxu0 %v1793
    %1795 = vmatprep.subr.mxu0 0.0
    %1796 = vmatpush1.msra.mxu0 0.0
    %1797 = vmatprep.subr.mxu0 0.0
    %1798 = vmatpush1.msra.mxu0 0.0
    %1799 = vmatprep.subr.mxu0 0.0
    %1800 = vmatpush1.msra.mxu0 0.0
    %1801 = vmatprep.subr.mxu0 0.0
    %1802 = vmatpush1.msra.mxu0 0.0
    %1803 = vmatprep.subr.mxu0 0.0
    %1804 = vmatpush1.msra.mxu0 0.0
    %1805 = vmatprep.subr.mxu0 0.0
    %1806 = vmatpush1.msra.mxu0 0.0
    %1807 = vmatprep.subr.mxu0 0.0
    %1808 = vmatpush1.msra.mxu0 0.0
    %1809 = vmatprep.subr.mxu0 0.0
    %1810 = vmatpush1.msra.mxu0 0.0
    %1811 = vmatprep.subr.mxu0 0.0
    %1812 = vmatpush1.msra.mxu0 0.0
    %1813 = vmatprep.subr.mxu0 0.0
    %1814 = vmatpush1.msra.mxu0 0.0
    %1815 = vmatprep.subr.mxu0 0.0
    %1816 = vmatpush1.msra.mxu0 0.0
    %1817 = vmatprep.subr.mxu0 0.0
    %1818 = vmatpush1.msra.mxu0 0.0
    %1819 = vmatprep.subr.mxu0 0.0
    %1820 = vmatpush1.msra.mxu0 0.0
    %1821 = vmatprep.subr.mxu0 0.0
    %1822 = vmatpush1.msra.mxu0 0.0
    %1823 = vmatprep.subr.mxu0 0.0
    %1824 = vmatpush1.msra.mxu0 0.0
    %1825 = vmatprep.subr.mxu0 0.0
    %1826 = vmatpush1.msra.mxu0 0.0
    %1827 = vmatprep.subr.mxu0 0.0
    %1828 = vmatpush1.msra.mxu0 0.0
    %1829 = vmatprep.subr.mxu0 0.0
    %1830 = vmatpush1.msra.mxu0 0.0
    %1831 = vmatprep.subr.mxu0 0.0
    %1832 = vmatpush1.msra.mxu0 0.0
    %1833 = vmatprep.subr.mxu0 0.0
    %1834 = vmatpush1.msra.mxu0 0.0
    %1835 = vmatprep.subr.mxu0 0.0
    %1836 = vmatpush1.msra.mxu0 0.0
    %1837 = vmatprep.subr.mxu0 0.0
    %1838 = vmatpush1.msra.mxu0 0.0
    %1839 = vmatprep.subr.mxu0 0.0
    %1840 = vmatpush1.msra.mxu0 0.0
    %1841 = vmatprep.subr.mxu0 0.0
    %1842 = vmatpush1.msra.mxu0 0.0
    %1843 = vmatprep.subr.mxu0 0.0
    %1844 = vmatpush1.msra.mxu0 0.0
    %1845 = vmatprep.subr.mxu0 0.0
    %1846 = vmatpush1.msra.mxu0 0.0
    %1847 = vmatprep.subr.mxu0 0.0
    %1848 = vmatpush1.msra.mxu0 0.0
    %1849 = vmatprep.subr.mxu0 0.0
    %1850 = vmatpush1.msra.mxu0 0.0
    %1851 = vmatprep.mubr.f32.mxu0 0.0
    %v1852 = vand.u32 %v388, 4294901760
    %v1853 = vsub.f32 %v388, %v1852
    %v1854 = vand.u32 %v1853, 4294901760
    %v1855 = vsub.f32 %v1853, %v1854
    %v1856 = vand.u32 %v1855, 4294901760
    %1857 = vmatmul.mubr.f32.gmra.mrb[0].mxu0 %v1856
    %v1858 = vpop.f32.mrb[0].mxu0
    %v1859 = vadd.f32 %v369, %v1858
    %v1860 = vpop.f32.mrb[0].mxu0
    %v1861 = vadd.f32 %v369, %v1860
    %1862 = vmatprep.mubr.f32.mxu0 0.0
    %v1863 = vand.u32 %v391, 4294901760
    %v1864 = vsub.f32 %v391, %v1863
    %v1865 = vand.u32 %v1864, 4294901760
    %v1866 = vsub.f32 %v1864, %v1865
    %v1867 = vand.u32 %v1866, 4294901760
    %1868 = vmatmul.mubr.f32.gmra.mrb[0].mxu0 %v1867
    %v1869 = vpop.f32.mrb[0].mxu0
    %v1870 = vadd.f32 %v374, %v1869
    %v1871 = vpop.f32.mrb[0].mxu0
    %v1872 = vadd.f32 %v374, %v1871
    %1873 = vmatprep.mubr.f32.mxu0 0.0
    %v1874 = vand.u32 %v394, 4294901760
    %v1875 = vsub.f32 %v394, %v1874
    %v1876 = vand.u32 %v1875, 4294901760
    %v1877 = vsub.f32 %v1875, %v1876
    %v1878 = vand.u32 %v1877, 4294901760
    %1879 = vmatmul.mubr.f32.gmra.mrb[0].mxu0 %v1878
    %v1880 = vpop.f32.mrb[0].mxu0
    %v1881 = vadd.f32 %v379, %v1880
    %v1882 = vpop.f32.mrb[0].mxu0
    %v1883 = vadd.f32 %v379, %v1882
    %1884 = vmatprep.mubr.f32.mxu0 0.0
    %v1885 = vand.u32 %v397, 4294901760
    %v1886 = vsub.f32 %v397, %v1885
    %v1887 = vand.u32 %v1886, 4294901760
    %v1888 = vsub.f32 %v1886, %v1887
    %v1889 = vand.u32 %v1888, 4294901760
    %1890 = vmatmul.mubr.f32.gmra.mrb[0].mxu0 %v1889
    %v1891 = vpop.f32.mrb[0].mxu0
    %v1892 = vadd.f32 %v384, %v1891
    %v1893 = vpop.f32.mrb[0].mxu0
    %v1894 = vadd.f32 %v384, %v1893
    %1895 = vdwg.mxu0
    %v1896 = vand.u32 %v307, 4294901760
    %v1897 = vsub.f32 %v307, %v1896
    %v1898 = vand.u32 %v1897, 4294901760
    %v1899 = vsub.f32 %v1897, %v1898
    %v1900 = vand.u32 %v1899, 4294901760
    %1901 = vmatprep.subr.mxu0 %v1900
    %v1902 = vand.u32 %v306, 4294901760
    %v1903 = vsub.f32 %v306, %v1902
    %v1904 = vand.u32 %v1903, 4294901760
    %v1905 = vsub.f32 %v1903, %v1904
    %v1906 = vand.u32 %v1905, 4294901760
    %1907 = vmatpush1.msra.mxu0 %v1906
    %v1908 = vand.u32 %v323, 4294901760
    %v1909 = vsub.f32 %v323, %v1908
    %v1910 = vand.u32 %v1909, 4294901760
    %v1911 = vsub.f32 %v1909, %v1910
    %v1912 = vand.u32 %v1911, 4294901760
    %1913 = vmatprep.subr.mxu0 %v1912
    %v1914 = vand.u32 %v322, 4294901760
    %v1915 = vsub.f32 %v322, %v1914
    %v1916 = vand.u32 %v1915, 4294901760
    %v1917 = vsub.f32 %v1915, %v1916
    %v1918 = vand.u32 %v1917, 4294901760
    %1919 = vmatpush1.msra.mxu0 %v1918
    %v1920 = vand.u32 %v339, 4294901760
    %v1921 = vsub.f32 %v339, %v1920
    %v1922 = vand.u32 %v1921, 4294901760
    %v1923 = vsub.f32 %v1921, %v1922
    %v1924 = vand.u32 %v1923, 4294901760
    %1925 = vmatprep.subr.mxu0 %v1924
    %v1926 = vand.u32 %v338, 4294901760
    %v1927 = vsub.f32 %v338, %v1926
    %v1928 = vand.u32 %v1927, 4294901760
    %v1929 = vsub.f32 %v1927, %v1928
    %v1930 = vand.u32 %v1929, 4294901760
    %1931 = vmatpush1.msra.mxu0 %v1930
    %v1932 = vand.u32 %v355, 4294901760
    %v1933 = vsub.f32 %v355, %v1932
    %v1934 = vand.u32 %v1933, 4294901760
    %v1935 = vsub.f32 %v1933, %v1934
    %v1936 = vand.u32 %v1935, 4294901760
    %1937 = vmatprep.subr.mxu0 %v1936
    %v1938 = vand.u32 %v354, 4294901760
    %v1939 = vsub.f32 %v354, %v1938
    %v1940 = vand.u32 %v1939, 4294901760
    %v1941 = vsub.f32 %v1939, %v1940
    %v1942 = vand.u32 %v1941, 4294901760
    %1943 = vmatpush1.msra.mxu0 %v1942
    %1944 = vmatprep.subr.mxu0 0.0
    %1945 = vmatpush1.msra.mxu0 0.0
    %1946 = vmatprep.subr.mxu0 0.0
    %1947 = vmatpush1.msra.mxu0 0.0
    %1948 = vmatprep.subr.mxu0 0.0
    %1949 = vmatpush1.msra.mxu0 0.0
    %1950 = vmatprep.subr.mxu0 0.0
    %1951 = vmatpush1.msra.mxu0 0.0
    %1952 = vmatprep.subr.mxu0 0.0
    %1953 = vmatpush1.msra.mxu0 0.0
    %1954 = vmatprep.subr.mxu0 0.0
    %1955 = vmatpush1.msra.mxu0 0.0
    %1956 = vmatprep.subr.mxu0 0.0
    %1957 = vmatpush1.msra.mxu0 0.0
    %1958 = vmatprep.subr.mxu0 0.0
    %1959 = vmatpush1.msra.mxu0 0.0
    %1960 = vmatprep.subr.mxu0 0.0
    %1961 = vmatpush1.msra.mxu0 0.0
    %1962 = vmatprep.subr.mxu0 0.0
    %1963 = vmatpush1.msra.mxu0 0.0
    %1964 = vmatprep.subr.mxu0 0.0
    %1965 = vmatpush1.msra.mxu0 0.0
    %1966 = vmatprep.subr.mxu0 0.0
    %1967 = vmatpush1.msra.mxu0 0.0
    %1968 = vmatprep.subr.mxu0 0.0
    %1969 = vmatpush1.msra.mxu0 0.0
    %1970 = vmatprep.subr.mxu0 0.0
    %1971 = vmatpush1.msra.mxu0 0.0
    %1972 = vmatprep.subr.mxu0 0.0
    %1973 = vmatpush1.msra.mxu0 0.0
    %1974 = vmatprep.subr.mxu0 0.0
    %1975 = vmatpush1.msra.mxu0 0.0
    %1976 = vmatprep.subr.mxu0 0.0
    %1977 = vmatpush1.msra.mxu0 0.0
    %1978 = vmatprep.subr.mxu0 0.0
    %1979 = vmatpush1.msra.mxu0 0.0
    %1980 = vmatprep.subr.mxu0 0.0
    %1981 = vmatpush1.msra.mxu0 0.0
    %1982 = vmatprep.subr.mxu0 0.0
    %1983 = vmatpush1.msra.mxu0 0.0
    %1984 = vmatprep.subr.mxu0 0.0
    %1985 = vmatpush1.msra.mxu0 0.0
    %1986 = vmatprep.subr.mxu0 0.0
    %1987 = vmatpush1.msra.mxu0 0.0
    %1988 = vmatprep.subr.mxu0 0.0
    %1989 = vmatpush1.msra.mxu0 0.0
    %1990 = vmatprep.subr.mxu0 0.0
    %1991 = vmatpush1.msra.mxu0 0.0
    %1992 = vmatprep.subr.mxu0 0.0
    %1993 = vmatpush1.msra.mxu0 0.0
    %1994 = vmatprep.subr.mxu0 0.0
    %1995 = vmatpush1.msra.mxu0 0.0
    %1996 = vmatprep.subr.mxu0 0.0
    %1997 = vmatpush1.msra.mxu0 0.0
    %1998 = vmatprep.subr.mxu0 0.0
    %1999 = vmatpush1.msra.mxu0 0.0
    %2000 = vmatprep.mubr.f32.mxu0 0.0
    %v2001 = vand.u32 %v388, 4294901760
    %2002 = vmatmul.mubr.f32.gmra.mrb[0].mxu0 %v2001
    %v2003 = vpop.f32.mrb[0].mxu0
    %v2004 = vadd.f32 %v1859, %v2003
    %v2005 = vpop.f32.mrb[0].mxu0
    %v2006 = vadd.f32 %v1861, %v2005
    %2007 = vmatprep.mubr.f32.mxu0 0.0
    %v2008 = vand.u32 %v391, 4294901760
    %2009 = vmatmul.mubr.f32.gmra.mrb[0].mxu0 %v2008
    %v2010 = vpop.f32.mrb[0].mxu0
    %v2011 = vadd.f32 %v1870, %v2010
    %v2012 = vpop.f32.mrb[0].mxu0
    %v2013 = vadd.f32 %v1872, %v2012
    %2014 = vmatprep.mubr.f32.mxu0 0.0
    %v2015 = vand.u32 %v394, 4294901760
    %2016 = vmatmul.mubr.f32.gmra.mrb[0].mxu0 %v2015
    %v2017 = vpop.f32.mrb[0].mxu0
    %v2018 = vadd.f32 %v1881, %v2017
    %v2019 = vpop.f32.mrb[0].mxu0
    %v2020 = vadd.f32 %v1883, %v2019
    %2021 = vmatprep.mubr.f32.mxu0 0.0
    %v2022 = vand.u32 %v397, 4294901760
    %2023 = vmatmul.mubr.f32.gmra.mrb[0].mxu0 %v2022
    %v2024 = vpop.f32.mrb[0].mxu0
    %v2025 = vadd.f32 %v1892, %v2024
    %v2026 = vpop.f32.mrb[0].mxu0
    %v2027 = vadd.f32 %v1894, %v2026
    %2028 = vdwg.mxu0
    %v2029 = vand.u32 %v307, 4294901760
    %v2030 = vsub.f32 %v307, %v2029
    %2031 = vmatprep.subr.mxu0 %v2030
    %v2032 = vand.u32 %v306, 4294901760
    %v2033 = vsub.f32 %v306, %v2032
    %2034 = vmatpush1.msra.mxu0 %v2033
    %v2035 = vand.u32 %v323, 4294901760
    %v2036 = vsub.f32 %v323, %v2035
    %2037 = vmatprep.subr.mxu0 %v2036
    %v2038 = vand.u32 %v322, 4294901760
    %v2039 = vsub.f32 %v322, %v2038
    %2040 = vmatpush1.msra.mxu0 %v2039
    %v2041 = vand.u32 %v339, 4294901760
    %v2042 = vsub.f32 %v339, %v2041
    %2043 = vmatprep.subr.mxu0 %v2042
    %v2044 = vand.u32 %v338, 4294901760
    %v2045 = vsub.f32 %v338, %v2044
    %2046 = vmatpush1.msra.mxu0 %v2045
    %v2047 = vand.u32 %v355, 4294901760
    %v2048 = vsub.f32 %v355, %v2047
    %2049 = vmatprep.subr.mxu0 %v2048
    %v2050 = vand.u32 %v354, 4294901760
    %v2051 = vsub.f32 %v354, %v2050
    %2052 = vmatpush1.msra.mxu0 %v2051
    %2053 = vmatprep.subr.mxu0 0.0
    %2054 = vmatpush1.msra.mxu0 0.0
    %2055 = vmatprep.subr.mxu0 0.0
    %2056 = vmatpush1.msra.mxu0 0.0
    %2057 = vmatprep.subr.mxu0 0.0
    %2058 = vmatpush1.msra.mxu0 0.0
    %2059 = vmatprep.subr.mxu0 0.0
    %2060 = vmatpush1.msra.mxu0 0.0
    %2061 = vmatprep.subr.mxu0 0.0
    %2062 = vmatpush1.msra.mxu0 0.0
    %2063 = vmatprep.subr.mxu0 0.0
    %2064 = vmatpush1.msra.mxu0 0.0
    %2065 = vmatprep.subr.mxu0 0.0
    %2066 = vmatpush1.msra.mxu0 0.0
    %2067 = vmatprep.subr.mxu0 0.0
    %2068 = vmatpush1.msra.mxu0 0.0
    %2069 = vmatprep.subr.mxu0 0.0
    %2070 = vmatpush1.msra.mxu0 0.0
    %2071 = vmatprep.subr.mxu0 0.0
    %2072 = vmatpush1.msra.mxu0 0.0
    %2073 = vmatprep.subr.mxu0 0.0
    %2074 = vmatpush1.msra.mxu0 0.0
    %2075 = vmatprep.subr.mxu0 0.0
    %2076 = vmatpush1.msra.mxu0 0.0
    %2077 = vmatprep.subr.mxu0 0.0
    %2078 = vmatpush1.msra.mxu0 0.0
    %2079 = vmatprep.subr.mxu0 0.0
    %2080 = vmatpush1.msra.mxu0 0.0
    %2081 = vmatprep.subr.mxu0 0.0
    %2082 = vmatpush1.msra.mxu0 0.0
    %2083 = vmatprep.subr.mxu0 0.0
    %2084 = vmatpush1.msra.mxu0 0.0
    %2085 = vmatprep.subr.mxu0 0.0
    %2086 = vmatpush1.msra.mxu0 0.0
    %2087 = vmatprep.subr.mxu0 0.0
    %2088 = vmatpush1.msra.mxu0 0.0
    %2089 = vmatprep.subr.mxu0 0.0
    %2090 = vmatpush1.msra.mxu0 0.0
    %2091 = vmatprep.subr.mxu0 0.0
    %2092 = vmatpush1.msra.mxu0 0.0
    %2093 = vmatprep.subr.mxu0 0.0
    %2094 = vmatpush1.msra.mxu0 0.0
    %2095 = vmatprep.subr.mxu0 0.0
    %2096 = vmatpush1.msra.mxu0 0.0
    %2097 = vmatprep.subr.mxu0 0.0
    %2098 = vmatpush1.msra.mxu0 0.0
    %2099 = vmatprep.subr.mxu0 0.0
    %2100 = vmatpush1.msra.mxu0 0.0
    %2101 = vmatprep.subr.mxu0 0.0
    %2102 = vmatpush1.msra.mxu0 0.0
    %2103 = vmatprep.subr.mxu0 0.0
    %2104 = vmatpush1.msra.mxu0 0.0
    %2105 = vmatprep.subr.mxu0 0.0
    %2106 = vmatpush1.msra.mxu0 0.0
    %2107 = vmatprep.subr.mxu0 0.0
    %2108 = vmatpush1.msra.mxu0 0.0
    %2109 = vmatprep.mubr.f32.mxu0 0.0
    %v2110 = vand.u32 %v388, 4294901760
    %v2111 = vsub.f32 %v388, %v2110
    %2112 = vmatmul.mubr.f32.gmra.mrb[0].mxu0 %v2111
    %v2113 = vpop.f32.mrb[0].mxu0
    %v2114 = vadd.f32 %v2004, %v2113
    %v2115 = vpop.f32.mrb[0].mxu0
    %v2116 = vadd.f32 %v2006, %v2115
    %2117 = vmatprep.mubr.f32.mxu0 0.0
    %v2118 = vand.u32 %v391, 4294901760
    %v2119 = vsub.f32 %v391, %v2118
    %2120 = vmatmul.mubr.f32.gmra.mrb[0].mxu0 %v2119
    %v2121 = vpop.f32.mrb[0].mxu0
    %v2122 = vadd.f32 %v2011, %v2121
    %v2123 = vpop.f32.mrb[0].mxu0
    %v2124 = vadd.f32 %v2013, %v2123
    %2125 = vmatprep.mubr.f32.mxu0 0.0
    %v2126 = vand.u32 %v394, 4294901760
    %v2127 = vsub.f32 %v394, %v2126
    %2128 = vmatmul.mubr.f32.gmra.mrb[0].mxu0 %v2127
    %v2129 = vpop.f32.mrb[0].mxu0
    %v2130 = vadd.f32 %v2018, %v2129
    %v2131 = vpop.f32.mrb[0].mxu0
    %v2132 = vadd.f32 %v2020, %v2131
    %2133 = vmatprep.mubr.f32.mxu0 0.0
    %v2134 = vand.u32 %v397, 4294901760
    %v2135 = vsub.f32 %v397, %v2134
    %2136 = vmatmul.mubr.f32.gmra.mrb[0].mxu0 %v2135
    %v2137 = vpop.f32.mrb[0].mxu0
    %v2138 = vadd.f32 %v2025, %v2137
    %v2139 = vpop.f32.mrb[0].mxu0
    %v2140 = vadd.f32 %v2027, %v2139
    %2141 = vdwg.mxu0
    %v2142 = vand.u32 %v307, 4294901760
    %2143 = vmatprep.subr.mxu0 %v2142
    %v2144 = vand.u32 %v306, 4294901760
    %2145 = vmatpush1.msra.mxu0 %v2144
    %v2146 = vand.u32 %v323, 4294901760
    %2147 = vmatprep.subr.mxu0 %v2146
    %v2148 = vand.u32 %v322, 4294901760
    %2149 = vmatpush1.msra.mxu0 %v2148
    %v2150 = vand.u32 %v339, 4294901760
    %2151 = vmatprep.subr.mxu0 %v2150
    %v2152 = vand.u32 %v338, 4294901760
    %2153 = vmatpush1.msra.mxu0 %v2152
    %v2154 = vand.u32 %v355, 4294901760
    %2155 = vmatprep.subr.mxu0 %v2154
    %v2156 = vand.u32 %v354, 4294901760
    %2157 = vmatpush1.msra.mxu0 %v2156
    %2158 = vmatprep.subr.mxu0 0.0
    %2159 = vmatpush1.msra.mxu0 0.0
    %2160 = vmatprep.subr.mxu0 0.0
    %2161 = vmatpush1.msra.mxu0 0.0
    %2162 = vmatprep.subr.mxu0 0.0
    %2163 = vmatpush1.msra.mxu0 0.0
    %2164 = vmatprep.subr.mxu0 0.0
    %2165 = vmatpush1.msra.mxu0 0.0
    %2166 = vmatprep.subr.mxu0 0.0
    %2167 = vmatpush1.msra.mxu0 0.0
    %2168 = vmatprep.subr.mxu0 0.0
    %2169 = vmatpush1.msra.mxu0 0.0
    %2170 = vmatprep.subr.mxu0 0.0
    %2171 = vmatpush1.msra.mxu0 0.0
    %2172 = vmatprep.subr.mxu0 0.0
    %2173 = vmatpush1.msra.mxu0 0.0
    %2174 = vmatprep.subr.mxu0 0.0
    %2175 = vmatpush1.msra.mxu0 0.0
    %2176 = vmatprep.subr.mxu0 0.0
    %2177 = vmatpush1.msra.mxu0 0.0
    %2178 = vmatprep.subr.mxu0 0.0
    %2179 = vmatpush1.msra.mxu0 0.0
    %2180 = vmatprep.subr.mxu0 0.0
    %2181 = vmatpush1.msra.mxu0 0.0
    %2182 = vmatprep.subr.mxu0 0.0
    %2183 = vmatpush1.msra.mxu0 0.0
    %2184 = vmatprep.subr.mxu0 0.0
    %2185 = vmatpush1.msra.mxu0 0.0
    %2186 = vmatprep.subr.mxu0 0.0
    %2187 = vmatpush1.msra.mxu0 0.0
    %2188 = vmatprep.subr.mxu0 0.0
    %2189 = vmatpush1.msra.mxu0 0.0
    %2190 = vmatprep.subr.mxu0 0.0
    %2191 = vmatpush1.msra.mxu0 0.0
    %2192 = vmatprep.subr.mxu0 0.0
    %2193 = vmatpush1.msra.mxu0 0.0
    %2194 = vmatprep.subr.mxu0 0.0
    %2195 = vmatpush1.msra.mxu0 0.0
    %2196 = vmatprep.subr.mxu0 0.0
    %2197 = vmatpush1.msra.mxu0 0.0
    %2198 = vmatprep.subr.mxu0 0.0
    %2199 = vmatpush1.msra.mxu0 0.0
    %2200 = vmatprep.subr.mxu0 0.0
    %2201 = vmatpush1.msra.mxu0 0.0
    %2202 = vmatprep.subr.mxu0 0.0
    %2203 = vmatpush1.msra.mxu0 0.0
    %2204 = vmatprep.subr.mxu0 0.0
    %2205 = vmatpush1.msra.mxu0 0.0
    %2206 = vmatprep.subr.mxu0 0.0
    %2207 = vmatpush1.msra.mxu0 0.0
    %2208 = vmatprep.subr.mxu0 0.0
    %2209 = vmatpush1.msra.mxu0 0.0
    %2210 = vmatprep.subr.mxu0 0.0
    %2211 = vmatpush1.msra.mxu0 0.0
    %2212 = vmatprep.subr.mxu0 0.0
    %2213 = vmatpush1.msra.mxu0 0.0
    %2214 = vmatprep.mubr.f32.mxu0 0.0
    %v2215 = vand.u32 %v388, 4294901760
    %v2216 = vsub.f32 %v388, %v2215
    %v2217 = vand.u32 %v2216, 4294901760
    %2218 = vmatmul.mubr.f32.gmra.mrb[0].mxu0 %v2217
    %v2219 = vpop.f32.mrb[0].mxu0
    %v2220 = vadd.f32 %v2114, %v2219
    %v2221 = vpop.f32.mrb[0].mxu0
    %v2222 = vadd.f32 %v2116, %v2221
    %2223 = vmatprep.mubr.f32.mxu0 0.0
    %v2224 = vand.u32 %v391, 4294901760
    %v2225 = vsub.f32 %v391, %v2224
    %v2226 = vand.u32 %v2225, 4294901760
    %2227 = vmatmul.mubr.f32.gmra.mrb[0].mxu0 %v2226
    %v2228 = vpop.f32.mrb[0].mxu0
    %v2229 = vadd.f32 %v2122, %v2228
    %v2230 = vpop.f32.mrb[0].mxu0
    %v2231 = vadd.f32 %v2124, %v2230
    %2232 = vmatprep.mubr.f32.mxu0 0.0
    %v2233 = vand.u32 %v394, 4294901760
    %v2234 = vsub.f32 %v394, %v2233
    %v2235 = vand.u32 %v2234, 4294901760
    %2236 = vmatmul.mubr.f32.gmra.mrb[0].mxu0 %v2235
    %v2237 = vpop.f32.mrb[0].mxu0
    %v2238 = vadd.f32 %v2130, %v2237
    %v2239 = vpop.f32.mrb[0].mxu0
    %v2240 = vadd.f32 %v2132, %v2239
    %2241 = vmatprep.mubr.f32.mxu0 0.0
    %v2242 = vand.u32 %v397, 4294901760
    %v2243 = vsub.f32 %v397, %v2242
    %v2244 = vand.u32 %v2243, 4294901760
    %2245 = vmatmul.mubr.f32.gmra.mrb[0].mxu0 %v2244
    %v2246 = vpop.f32.mrb[0].mxu0
    %v2247 = vadd.f32 %v2138, %v2246
    %v2248 = vpop.f32.mrb[0].mxu0
    %v2249 = vadd.f32 %v2140, %v2248
    %2250 = vdwg.mxu0
    %v2251 = vand.u32 %v307, 4294901760
    %v2252 = vsub.f32 %v307, %v2251
    %v2253 = vand.u32 %v2252, 4294901760
    %2254 = vmatprep.subr.mxu0 %v2253
    %v2255 = vand.u32 %v306, 4294901760
    %v2256 = vsub.f32 %v306, %v2255
    %v2257 = vand.u32 %v2256, 4294901760
    %2258 = vmatpush1.msra.mxu0 %v2257
    %v2259 = vand.u32 %v323, 4294901760
    %v2260 = vsub.f32 %v323, %v2259
    %v2261 = vand.u32 %v2260, 4294901760
    %2262 = vmatprep.subr.mxu0 %v2261
    %v2263 = vand.u32 %v322, 4294901760
    %v2264 = vsub.f32 %v322, %v2263
    %v2265 = vand.u32 %v2264, 4294901760
    %2266 = vmatpush1.msra.mxu0 %v2265
    %v2267 = vand.u32 %v339, 4294901760
    %v2268 = vsub.f32 %v339, %v2267
    %v2269 = vand.u32 %v2268, 4294901760
    %2270 = vmatprep.subr.mxu0 %v2269
    %v2271 = vand.u32 %v338, 4294901760
    %v2272 = vsub.f32 %v338, %v2271
    %v2273 = vand.u32 %v2272, 4294901760
    %2274 = vmatpush1.msra.mxu0 %v2273
    %v2275 = vand.u32 %v355, 4294901760
    %v2276 = vsub.f32 %v355, %v2275
    %v2277 = vand.u32 %v2276, 4294901760
    %2278 = vmatprep.subr.mxu0 %v2277
    %v2279 = vand.u32 %v354, 4294901760
    %v2280 = vsub.f32 %v354, %v2279
    %v2281 = vand.u32 %v2280, 4294901760
    %2282 = vmatpush1.msra.mxu0 %v2281
    %2283 = vmatprep.subr.mxu0 0.0
    %2284 = vmatpush1.msra.mxu0 0.0
    %2285 = vmatprep.subr.mxu0 0.0
    %2286 = vmatpush1.msra.mxu0 0.0
    %2287 = vmatprep.subr.mxu0 0.0
    %2288 = vmatpush1.msra.mxu0 0.0
    %2289 = vmatprep.subr.mxu0 0.0
    %2290 = vmatpush1.msra.mxu0 0.0
    %2291 = vmatprep.subr.mxu0 0.0
    %2292 = vmatpush1.msra.mxu0 0.0
    %2293 = vmatprep.subr.mxu0 0.0
    %2294 = vmatpush1.msra.mxu0 0.0
    %2295 = vmatprep.subr.mxu0 0.0
    %2296 = vmatpush1.msra.mxu0 0.0
    %2297 = vmatprep.subr.mxu0 0.0
    %2298 = vmatpush1.msra.mxu0 0.0
    %2299 = vmatprep.subr.mxu0 0.0
    %2300 = vmatpush1.msra.mxu0 0.0
    %2301 = vmatprep.subr.mxu0 0.0
    %2302 = vmatpush1.msra.mxu0 0.0
    %2303 = vmatprep.subr.mxu0 0.0
    %2304 = vmatpush1.msra.mxu0 0.0
    %2305 = vmatprep.subr.mxu0 0.0
    %2306 = vmatpush1.msra.mxu0 0.0
    %2307 = vmatprep.subr.mxu0 0.0
    %2308 = vmatpush1.msra.mxu0 0.0
    %2309 = vmatprep.subr.mxu0 0.0
    %2310 = vmatpush1.msra.mxu0 0.0
    %2311 = vmatprep.subr.mxu0 0.0
    %2312 = vmatpush1.msra.mxu0 0.0
    %2313 = vmatprep.subr.mxu0 0.0
    %2314 = vmatpush1.msra.mxu0 0.0
    %2315 = vmatprep.subr.mxu0 0.0
    %2316 = vmatpush1.msra.mxu0 0.0
    %2317 = vmatprep.subr.mxu0 0.0
    %2318 = vmatpush1.msra.mxu0 0.0
    %2319 = vmatprep.subr.mxu0 0.0
    %2320 = vmatpush1.msra.mxu0 0.0
    %2321 = vmatprep.subr.mxu0 0.0
    %2322 = vmatpush1.msra.mxu0 0.0
    %2323 = vmatprep.subr.mxu0 0.0
    %2324 = vmatpush1.msra.mxu0 0.0
    %2325 = vmatprep.subr.mxu0 0.0
    %2326 = vmatpush1.msra.mxu0 0.0
    %2327 = vmatprep.subr.mxu0 0.0
    %2328 = vmatpush1.msra.mxu0 0.0
    %2329 = vmatprep.subr.mxu0 0.0
    %2330 = vmatpush1.msra.mxu0 0.0
    %2331 = vmatprep.subr.mxu0 0.0
    %2332 = vmatpush1.msra.mxu0 0.0
    %2333 = vmatprep.subr.mxu0 0.0
    %2334 = vmatpush1.msra.mxu0 0.0
    %2335 = vmatprep.subr.mxu0 0.0
    %2336 = vmatpush1.msra.mxu0 0.0
    %2337 = vmatprep.subr.mxu0 0.0
    %2338 = vmatpush1.msra.mxu0 0.0
    %2339 = vmatprep.mubr.f32.mxu0 0.0
    %v2340 = vand.u32 %v388, 4294901760
    %2341 = vmatmul.mubr.f32.gmra.mrb[0].mxu0 %v2340
    %v2342 = vpop.f32.mrb[0].mxu0
    %v2343 = vadd.f32 %v2220, %v2342
    %v2344 = vpop.f32.mrb[0].mxu0
    %v2345 = vadd.f32 %v2222, %v2344
    %2346 = vmatprep.mubr.f32.mxu0 0.0
    %v2347 = vand.u32 %v391, 4294901760
    %2348 = vmatmul.mubr.f32.gmra.mrb[0].mxu0 %v2347
    %v2349 = vpop.f32.mrb[0].mxu0
    %v2350 = vadd.f32 %v2229, %v2349
    %v2351 = vpop.f32.mrb[0].mxu0
    %v2352 = vadd.f32 %v2231, %v2351
    %2353 = vmatprep.mubr.f32.mxu0 0.0
    %v2354 = vand.u32 %v394, 4294901760
    %2355 = vmatmul.mubr.f32.gmra.mrb[0].mxu0 %v2354
    %v2356 = vpop.f32.mrb[0].mxu0
    %v2357 = vadd.f32 %v2238, %v2356
    %v2358 = vpop.f32.mrb[0].mxu0
    %v2359 = vadd.f32 %v2240, %v2358
    %2360 = vmatprep.mubr.f32.mxu0 0.0
    %v2361 = vand.u32 %v397, 4294901760
    %2362 = vmatmul.mubr.f32.gmra.mrb[0].mxu0 %v2361
    %v2363 = vpop.f32.mrb[0].mxu0
    %v2364 = vadd.f32 %v2247, %v2363
    %v2365 = vpop.f32.mrb[0].mxu0
    %v2366 = vadd.f32 %v2249, %v2365
    %2367 = vdwg.mxu0
    %v2368 = vand.u32 %v307, 4294901760
    %2369 = vmatprep.subr.mxu0 %v2368
    %v2370 = vand.u32 %v306, 4294901760
    %2371 = vmatpush1.msra.mxu0 %v2370
    %v2372 = vand.u32 %v323, 4294901760
    %2373 = vmatprep.subr.mxu0 %v2372
    %v2374 = vand.u32 %v322, 4294901760
    %2375 = vmatpush1.msra.mxu0 %v2374
    %v2376 = vand.u32 %v339, 4294901760
    %2377 = vmatprep.subr.mxu0 %v2376
    %v2378 = vand.u32 %v338, 4294901760
    %2379 = vmatpush1.msra.mxu0 %v2378
    %v2380 = vand.u32 %v355, 4294901760
    %2381 = vmatprep.subr.mxu0 %v2380
    %v2382 = vand.u32 %v354, 4294901760
    %2383 = vmatpush1.msra.mxu0 %v2382
    %2384 = vmatprep.subr.mxu0 0.0
    %2385 = vmatpush1.msra.mxu0 0.0
    %2386 = vmatprep.subr.mxu0 0.0
    %2387 = vmatpush1.msra.mxu0 0.0
    %2388 = vmatprep.subr.mxu0 0.0
    %2389 = vmatpush1.msra.mxu0 0.0
    %2390 = vmatprep.subr.mxu0 0.0
    %2391 = vmatpush1.msra.mxu0 0.0
    %2392 = vmatprep.subr.mxu0 0.0
    %2393 = vmatpush1.msra.mxu0 0.0
    %2394 = vmatprep.subr.mxu0 0.0
    %2395 = vmatpush1.msra.mxu0 0.0
    %2396 = vmatprep.subr.mxu0 0.0
    %2397 = vmatpush1.msra.mxu0 0.0
    %2398 = vmatprep.subr.mxu0 0.0
    %2399 = vmatpush1.msra.mxu0 0.0
    %2400 = vmatprep.subr.mxu0 0.0
    %2401 = vmatpush1.msra.mxu0 0.0
    %2402 = vmatprep.subr.mxu0 0.0
    %2403 = vmatpush1.msra.mxu0 0.0
    %2404 = vmatprep.subr.mxu0 0.0
    %2405 = vmatpush1.msra.mxu0 0.0
    %2406 = vmatprep.subr.mxu0 0.0
    %2407 = vmatpush1.msra.mxu0 0.0
    %2408 = vmatprep.subr.mxu0 0.0
    %2409 = vmatpush1.msra.mxu0 0.0
    %2410 = vmatprep.subr.mxu0 0.0
    %2411 = vmatpush1.msra.mxu0 0.0
    %2412 = vmatprep.subr.mxu0 0.0
    %2413 = vmatpush1.msra.mxu0 0.0
    %2414 = vmatprep.subr.mxu0 0.0
    %2415 = vmatpush1.msra.mxu0 0.0
    %2416 = vmatprep.subr.mxu0 0.0
    %2417 = vmatpush1.msra.mxu0 0.0
    %2418 = vmatprep.subr.mxu0 0.0
    %2419 = vmatpush1.msra.mxu0 0.0
    %2420 = vmatprep.subr.mxu0 0.0
    %2421 = vmatpush1.msra.mxu0 0.0
    %2422 = vmatprep.subr.mxu0 0.0
    %2423 = vmatpush1.msra.mxu0 0.0
    %2424 = vmatprep.subr.mxu0 0.0
    %2425 = vmatpush1.msra.mxu0 0.0
    %2426 = vmatprep.subr.mxu0 0.0
    %2427 = vmatpush1.msra.mxu0 0.0
    %2428 = vmatprep.subr.mxu0 0.0
    %2429 = vmatpush1.msra.mxu0 0.0
    %2430 = vmatprep.subr.mxu0 0.0
    %2431 = vmatpush1.msra.mxu0 0.0
    %2432 = vmatprep.subr.mxu0 0.0
    %2433 = vmatpush1.msra.mxu0 0.0
    %2434 = vmatprep.subr.mxu0 0.0
    %2435 = vmatpush1.msra.mxu0 0.0
    %2436 = vmatprep.subr.mxu0 0.0
    %2437 = vmatpush1.msra.mxu0 0.0
    %2438 = vmatprep.subr.mxu0 0.0
    %2439 = vmatpush1.msra.mxu0 0.0
    %2440 = vmatprep.mubr.f32.mxu0 0.0
    %v2441 = vand.u32 %v388, 4294901760
    %2442 = vmatmul.mubr.f32.gmra.mrb[0].mxu0 %v2441
    %v2443 = vpop.f32.mrb[0].mxu0
    %v2444 = vadd.f32 %v2343, %v2443
    %v2445 = vpop.f32.mrb[0].mxu0
    %v2446 = vadd.f32 %v2345, %v2445
    %2447 = vmatprep.mubr.f32.mxu0 0.0
    %v2448 = vand.u32 %v391, 4294901760
    %2449 = vmatmul.mubr.f32.gmra.mrb[0].mxu0 %v2448
    %v2450 = vpop.f32.mrb[0].mxu0
    %v2451 = vadd.f32 %v2350, %v2450
    %v2452 = vpop.f32.mrb[0].mxu0
    %v2453 = vadd.f32 %v2352, %v2452
    %2454 = vmatprep.mubr.f32.mxu0 0.0
    %v2455 = vand.u32 %v394, 4294901760
    %2456 = vmatmul.mubr.f32.gmra.mrb[0].mxu0 %v2455
    %v2457 = vpop.f32.mrb[0].mxu0
    %v2458 = vadd.f32 %v2357, %v2457
    %v2459 = vpop.f32.mrb[0].mxu0
    %v2460 = vadd.f32 %v2359, %v2459
    %2461 = vmatprep.mubr.f32.mxu0 0.0
    %v2462 = vand.u32 %v397, 4294901760
    %2463 = vmatmul.mubr.f32.gmra.mrb[0].mxu0 %v2462
    %v2464 = vpop.f32.mrb[0].mxu0
    %v2465 = vadd.f32 %v2364, %v2464
    %v2466 = vpop.f32.mrb[0].mxu0
    %v2467 = vadd.f32 %v2366, %v2466
    %2468 = vdwg.mxu0
    %v2469 = vand.u32 %v309, 4294901760
    %2470 = vmatprep.subr.mxu0 %v2469
    %v2471 = vand.u32 %v308, 4294901760
    %2472 = vmatpush1.msra.mxu0 %v2471
    %v2473 = vand.u32 %v325, 4294901760
    %2474 = vmatprep.subr.mxu0 %v2473
    %v2475 = vand.u32 %v324, 4294901760
    %2476 = vmatpush1.msra.mxu0 %v2475
    %v2477 = vand.u32 %v341, 4294901760
    %2478 = vmatprep.subr.mxu0 %v2477
    %v2479 = vand.u32 %v340, 4294901760
    %2480 = vmatpush1.msra.mxu0 %v2479
    %v2481 = vand.u32 %v357, 4294901760
    %2482 = vmatprep.subr.mxu0 %v2481
    %v2483 = vand.u32 %v356, 4294901760
    %2484 = vmatpush1.msra.mxu0 %v2483
    %2485 = vmatprep.subr.mxu0 0.0
    %2486 = vmatpush1.msra.mxu0 0.0
    %2487 = vmatprep.subr.mxu0 0.0
    %2488 = vmatpush1.msra.mxu0 0.0
    %2489 = vmatprep.subr.mxu0 0.0
    %2490 = vmatpush1.msra.mxu0 0.0
    %2491 = vmatprep.subr.mxu0 0.0
    %2492 = vmatpush1.msra.mxu0 0.0
    %2493 = vmatprep.subr.mxu0 0.0
    %2494 = vmatpush1.msra.mxu0 0.0
    %2495 = vmatprep.subr.mxu0 0.0
    %2496 = vmatpush1.msra.mxu0 0.0
    %2497 = vmatprep.subr.mxu0 0.0
    %2498 = vmatpush1.msra.mxu0 0.0
    %2499 = vmatprep.subr.mxu0 0.0
    %2500 = vmatpush1.msra.mxu0 0.0
    %2501 = vmatprep.subr.mxu0 0.0
    %2502 = vmatpush1.msra.mxu0 0.0
    %2503 = vmatprep.subr.mxu0 0.0
    %2504 = vmatpush1.msra.mxu0 0.0
    %2505 = vmatprep.subr.mxu0 0.0
    %2506 = vmatpush1.msra.mxu0 0.0
    %2507 = vmatprep.subr.mxu0 0.0
    %2508 = vmatpush1.msra.mxu0 0.0
    %2509 = vmatprep.subr.mxu0 0.0
    %2510 = vmatpush1.msra.mxu0 0.0
    %2511 = vmatprep.subr.mxu0 0.0
    %2512 = vmatpush1.msra.mxu0 0.0
    %2513 = vmatprep.subr.mxu0 0.0
    %2514 = vmatpush1.msra.mxu0 0.0
    %2515 = vmatprep.subr.mxu0 0.0
    %2516 = vmatpush1.msra.mxu0 0.0
    %2517 = vmatprep.subr.mxu0 0.0
    %2518 = vmatpush1.msra.mxu0 0.0
    %2519 = vmatprep.subr.mxu0 0.0
    %2520 = vmatpush1.msra.mxu0 0.0
    %2521 = vmatprep.subr.mxu0 0.0
    %2522 = vmatpush1.msra.mxu0 0.0
    %2523 = vmatprep.subr.mxu0 0.0
    %2524 = vmatpush1.msra.mxu0 0.0
    %2525 = vmatprep.subr.mxu0 0.0
    %2526 = vmatpush1.msra.mxu0 0.0
    %2527 = vmatprep.subr.mxu0 0.0
    %2528 = vmatpush1.msra.mxu0 0.0
    %2529 = vmatprep.subr.mxu0 0.0
    %2530 = vmatpush1.msra.mxu0 0.0
    %2531 = vmatprep.subr.mxu0 0.0
    %2532 = vmatpush1.msra.mxu0 0.0
    %2533 = vmatprep.subr.mxu0 0.0
    %2534 = vmatpush1.msra.mxu0 0.0
    %2535 = vmatprep.subr.mxu0 0.0
    %2536 = vmatpush1.msra.mxu0 0.0
    %2537 = vmatprep.subr.mxu0 0.0
    %2538 = vmatpush1.msra.mxu0 0.0
    %2539 = vmatprep.subr.mxu0 0.0
    %2540 = vmatpush1.msra.mxu0 0.0
    %2541 = vmatprep.mubr.f32.mxu0 0.0
    %v2542 = vand.u32 %v388, 4294901760
    %v2543 = vsub.f32 %v388, %v2542
    %v2544 = vand.u32 %v2543, 4294901760
    %v2545 = vsub.f32 %v2543, %v2544
    %v2546 = vand.u32 %v2545, 4294901760
    %2547 = vmatmul.mubr.f32.gmra.mrb[0].mxu0 %v2546
    %v2548 = vpop.f32.mrb[0].mxu0
    %v2549 = vadd.f32 %v369, %v2548
    %v2550 = vpop.f32.mrb[0].mxu0
    %v2551 = vadd.f32 %v369, %v2550
    %2552 = vmatprep.mubr.f32.mxu0 0.0
    %v2553 = vand.u32 %v391, 4294901760
    %v2554 = vsub.f32 %v391, %v2553
    %v2555 = vand.u32 %v2554, 4294901760
    %v2556 = vsub.f32 %v2554, %v2555
    %v2557 = vand.u32 %v2556, 4294901760
    %2558 = vmatmul.mubr.f32.gmra.mrb[0].mxu0 %v2557
    %v2559 = vpop.f32.mrb[0].mxu0
    %v2560 = vadd.f32 %v374, %v2559
    %v2561 = vpop.f32.mrb[0].mxu0
    %v2562 = vadd.f32 %v374, %v2561
    %2563 = vmatprep.mubr.f32.mxu0 0.0
    %v2564 = vand.u32 %v394, 4294901760
    %v2565 = vsub.f32 %v394, %v2564
    %v2566 = vand.u32 %v2565, 4294901760
    %v2567 = vsub.f32 %v2565, %v2566
    %v2568 = vand.u32 %v2567, 4294901760
    %2569 = vmatmul.mubr.f32.gmra.mrb[0].mxu0 %v2568
    %v2570 = vpop.f32.mrb[0].mxu0
    %v2571 = vadd.f32 %v379, %v2570
    %v2572 = vpop.f32.mrb[0].mxu0
    %v2573 = vadd.f32 %v379, %v2572
    %2574 = vmatprep.mubr.f32.mxu0 0.0
    %v2575 = vand.u32 %v397, 4294901760
    %v2576 = vsub.f32 %v397, %v2575
    %v2577 = vand.u32 %v2576, 4294901760
    %v2578 = vsub.f32 %v2576, %v2577
    %v2579 = vand.u32 %v2578, 4294901760
    %2580 = vmatmul.mubr.f32.gmra.mrb[0].mxu0 %v2579
    %v2581 = vpop.f32.mrb[0].mxu0
    %v2582 = vadd.f32 %v384, %v2581
    %v2583 = vpop.f32.mrb[0].mxu0
    %v2584 = vadd.f32 %v384, %v2583
    %2585 = vdwg.mxu0
    %v2586 = vand.u32 %v309, 4294901760
    %v2587 = vsub.f32 %v309, %v2586
    %v2588 = vand.u32 %v2587, 4294901760
    %v2589 = vsub.f32 %v2587, %v2588
    %v2590 = vand.u32 %v2589, 4294901760
    %2591 = vmatprep.subr.mxu0 %v2590
    %v2592 = vand.u32 %v308, 4294901760
    %v2593 = vsub.f32 %v308, %v2592
    %v2594 = vand.u32 %v2593, 4294901760
    %v2595 = vsub.f32 %v2593, %v2594
    %v2596 = vand.u32 %v2595, 4294901760
    %2597 = vmatpush1.msra.mxu0 %v2596
    %v2598 = vand.u32 %v325, 4294901760
    %v2599 = vsub.f32 %v325, %v2598
    %v2600 = vand.u32 %v2599, 4294901760
    %v2601 = vsub.f32 %v2599, %v2600
    %v2602 = vand.u32 %v2601, 4294901760
    %2603 = vmatprep.subr.mxu0 %v2602
    %v2604 = vand.u32 %v324, 4294901760
    %v2605 = vsub.f32 %v324, %v2604
    %v2606 = vand.u32 %v2605, 4294901760
    %v2607 = vsub.f32 %v2605, %v2606
    %v2608 = vand.u32 %v2607, 4294901760
    %2609 = vmatpush1.msra.mxu0 %v2608
    %v2610 = vand.u32 %v341, 4294901760
    %v2611 = vsub.f32 %v341, %v2610
    %v2612 = vand.u32 %v2611, 4294901760
    %v2613 = vsub.f32 %v2611, %v2612
    %v2614 = vand.u32 %v2613, 4294901760
    %2615 = vmatprep.subr.mxu0 %v2614
    %v2616 = vand.u32 %v340, 4294901760
    %v2617 = vsub.f32 %v340, %v2616
    %v2618 = vand.u32 %v2617, 4294901760
    %v2619 = vsub.f32 %v2617, %v2618
    %v2620 = vand.u32 %v2619, 4294901760
    %2621 = vmatpush1.msra.mxu0 %v2620
    %v2622 = vand.u32 %v357, 4294901760
    %v2623 = vsub.f32 %v357, %v2622
    %v2624 = vand.u32 %v2623, 4294901760
    %v2625 = vsub.f32 %v2623, %v2624
    %v2626 = vand.u32 %v2625, 4294901760
    %2627 = vmatprep.subr.mxu0 %v2626
    %v2628 = vand.u32 %v356, 4294901760
    %v2629 = vsub.f32 %v356, %v2628
    %v2630 = vand.u32 %v2629, 4294901760
    %v2631 = vsub.f32 %v2629, %v2630
    %v2632 = vand.u32 %v2631, 4294901760
    %2633 = vmatpush1.msra.mxu0 %v2632
    %2634 = vmatprep.subr.mxu0 0.0
    %2635 = vmatpush1.msra.mxu0 0.0
    %2636 = vmatprep.subr.mxu0 0.0
    %2637 = vmatpush1.msra.mxu0 0.0
    %2638 = vmatprep.subr.mxu0 0.0
    %2639 = vmatpush1.msra.mxu0 0.0
    %2640 = vmatprep.subr.mxu0 0.0
    %2641 = vmatpush1.msra.mxu0 0.0
    %2642 = vmatprep.subr.mxu0 0.0
    %2643 = vmatpush1.msra.mxu0 0.0
    %2644 = vmatprep.subr.mxu0 0.0
    %2645 = vmatpush1.msra.mxu0 0.0
    %2646 = vmatprep.subr.mxu0 0.0
    %2647 = vmatpush1.msra.mxu0 0.0
    %2648 = vmatprep.subr.mxu0 0.0
    %2649 = vmatpush1.msra.mxu0 0.0
    %2650 = vmatprep.subr.mxu0 0.0
    %2651 = vmatpush1.msra.mxu0 0.0
    %2652 = vmatprep.subr.mxu0 0.0
    %2653 = vmatpush1.msra.mxu0 0.0
    %2654 = vmatprep.subr.mxu0 0.0
    %2655 = vmatpush1.msra.mxu0 0.0
    %2656 = vmatprep.subr.mxu0 0.0
    %2657 = vmatpush1.msra.mxu0 0.0
    %2658 = vmatprep.subr.mxu0 0.0
    %2659 = vmatpush1.msra.mxu0 0.0
    %2660 = vmatprep.subr.mxu0 0.0
    %2661 = vmatpush1.msra.mxu0 0.0
    %2662 = vmatprep.subr.mxu0 0.0
    %2663 = vmatpush1.msra.mxu0 0.0
    %2664 = vmatprep.subr.mxu0 0.0
    %2665 = vmatpush1.msra.mxu0 0.0
    %2666 = vmatprep.subr.mxu0 0.0
    %2667 = vmatpush1.msra.mxu0 0.0
    %2668 = vmatprep.subr.mxu0 0.0
    %2669 = vmatpush1.msra.mxu0 0.0
    %2670 = vmatprep.subr.mxu0 0.0
    %2671 = vmatpush1.msra.mxu0 0.0
    %2672 = vmatprep.subr.mxu0 0.0
    %2673 = vmatpush1.msra.mxu0 0.0
    %2674 = vmatprep.subr.mxu0 0.0
    %2675 = vmatpush1.msra.mxu0 0.0
    %2676 = vmatprep.subr.mxu0 0.0
    %2677 = vmatpush1.msra.mxu0 0.0
    %2678 = vmatprep.subr.mxu0 0.0
    %2679 = vmatpush1.msra.mxu0 0.0
    %2680 = vmatprep.subr.mxu0 0.0
    %2681 = vmatpush1.msra.mxu0 0.0
    %2682 = vmatprep.subr.mxu0 0.0
    %2683 = vmatpush1.msra.mxu0 0.0
    %2684 = vmatprep.subr.mxu0 0.0
    %2685 = vmatpush1.msra.mxu0 0.0
    %2686 = vmatprep.subr.mxu0 0.0
    %2687 = vmatpush1.msra.mxu0 0.0
    %2688 = vmatprep.subr.mxu0 0.0
    %2689 = vmatpush1.msra.mxu0 0.0
    %2690 = vmatprep.mubr.f32.mxu0 0.0
    %v2691 = vand.u32 %v388, 4294901760
    %2692 = vmatmul.mubr.f32.gmra.mrb[0].mxu0 %v2691
    %v2693 = vpop.f32.mrb[0].mxu0
    %v2694 = vadd.f32 %v2549, %v2693
    %v2695 = vpop.f32.mrb[0].mxu0
    %v2696 = vadd.f32 %v2551, %v2695
    %2697 = vmatprep.mubr.f32.mxu0 0.0
    %v2698 = vand.u32 %v391, 4294901760
    %2699 = vmatmul.mubr.f32.gmra.mrb[0].mxu0 %v2698
    %v2700 = vpop.f32.mrb[0].mxu0
    %v2701 = vadd.f32 %v2560, %v2700
    %v2702 = vpop.f32.mrb[0].mxu0
    %v2703 = vadd.f32 %v2562, %v2702
    %2704 = vmatprep.mubr.f32.mxu0 0.0
    %v2705 = vand.u32 %v394, 4294901760
    %2706 = vmatmul.mubr.f32.gmra.mrb[0].mxu0 %v2705
    %v2707 = vpop.f32.mrb[0].mxu0
    %v2708 = vadd.f32 %v2571, %v2707
    %v2709 = vpop.f32.mrb[0].mxu0
    %v2710 = vadd.f32 %v2573, %v2709
    %2711 = vmatprep.mubr.f32.mxu0 0.0
    %v2712 = vand.u32 %v397, 4294901760
    %2713 = vmatmul.mubr.f32.gmra.mrb[0].mxu0 %v2712
    %v2714 = vpop.f32.mrb[0].mxu0
    %v2715 = vadd.f32 %v2582, %v2714
    %v2716 = vpop.f32.mrb[0].mxu0
    %v2717 = vadd.f32 %v2584, %v2716
    %2718 = vdwg.mxu0
    %v2719 = vand.u32 %v309, 4294901760
    %v2720 = vsub.f32 %v309, %v2719
    %2721 = vmatprep.subr.mxu0 %v2720
    %v2722 = vand.u32 %v308, 4294901760
    %v2723 = vsub.f32 %v308, %v2722
    %2724 = vmatpush1.msra.mxu0 %v2723
    %v2725 = vand.u32 %v325, 4294901760
    %v2726 = vsub.f32 %v325, %v2725
    %2727 = vmatprep.subr.mxu0 %v2726
    %v2728 = vand.u32 %v324, 4294901760
    %v2729 = vsub.f32 %v324, %v2728
    %2730 = vmatpush1.msra.mxu0 %v2729
    %v2731 = vand.u32 %v341, 4294901760
    %v2732 = vsub.f32 %v341, %v2731
    %2733 = vmatprep.subr.mxu0 %v2732
    %v2734 = vand.u32 %v340, 4294901760
    %v2735 = vsub.f32 %v340, %v2734
    %2736 = vmatpush1.msra.mxu0 %v2735
    %v2737 = vand.u32 %v357, 4294901760
    %v2738 = vsub.f32 %v357, %v2737
    %2739 = vmatprep.subr.mxu0 %v2738
    %v2740 = vand.u32 %v356, 4294901760
    %v2741 = vsub.f32 %v356, %v2740
    %2742 = vmatpush1.msra.mxu0 %v2741
    %2743 = vmatprep.subr.mxu0 0.0
    %2744 = vmatpush1.msra.mxu0 0.0
    %2745 = vmatprep.subr.mxu0 0.0
    %2746 = vmatpush1.msra.mxu0 0.0
    %2747 = vmatprep.subr.mxu0 0.0
    %2748 = vmatpush1.msra.mxu0 0.0
    %2749 = vmatprep.subr.mxu0 0.0
    %2750 = vmatpush1.msra.mxu0 0.0
    %2751 = vmatprep.subr.mxu0 0.0
    %2752 = vmatpush1.msra.mxu0 0.0
    %2753 = vmatprep.subr.mxu0 0.0
    %2754 = vmatpush1.msra.mxu0 0.0
    %2755 = vmatprep.subr.mxu0 0.0
    %2756 = vmatpush1.msra.mxu0 0.0
    %2757 = vmatprep.subr.mxu0 0.0
    %2758 = vmatpush1.msra.mxu0 0.0
    %2759 = vmatprep.subr.mxu0 0.0
    %2760 = vmatpush1.msra.mxu0 0.0
    %2761 = vmatprep.subr.mxu0 0.0
    %2762 = vmatpush1.msra.mxu0 0.0
    %2763 = vmatprep.subr.mxu0 0.0
    %2764 = vmatpush1.msra.mxu0 0.0
    %2765 = vmatprep.subr.mxu0 0.0
    %2766 = vmatpush1.msra.mxu0 0.0
    %2767 = vmatprep.subr.mxu0 0.0
    %2768 = vmatpush1.msra.mxu0 0.0
    %2769 = vmatprep.subr.mxu0 0.0
    %2770 = vmatpush1.msra.mxu0 0.0
    %2771 = vmatprep.subr.mxu0 0.0
    %2772 = vmatpush1.msra.mxu0 0.0
    %2773 = vmatprep.subr.mxu0 0.0
    %2774 = vmatpush1.msra.mxu0 0.0
    %2775 = vmatprep.subr.mxu0 0.0
    %2776 = vmatpush1.msra.mxu0 0.0
    %2777 = vmatprep.subr.mxu0 0.0
    %2778 = vmatpush1.msra.mxu0 0.0
    %2779 = vmatprep.subr.mxu0 0.0
    %2780 = vmatpush1.msra.mxu0 0.0
    %2781 = vmatprep.subr.mxu0 0.0
    %2782 = vmatpush1.msra.mxu0 0.0
    %2783 = vmatprep.subr.mxu0 0.0
    %2784 = vmatpush1.msra.mxu0 0.0
    %2785 = vmatprep.subr.mxu0 0.0
    %2786 = vmatpush1.msra.mxu0 0.0
    %2787 = vmatprep.subr.mxu0 0.0
    %2788 = vmatpush1.msra.mxu0 0.0
    %2789 = vmatprep.subr.mxu0 0.0
    %2790 = vmatpush1.msra.mxu0 0.0
    %2791 = vmatprep.subr.mxu0 0.0
    %2792 = vmatpush1.msra.mxu0 0.0
    %2793 = vmatprep.subr.mxu0 0.0
    %2794 = vmatpush1.msra.mxu0 0.0
    %2795 = vmatprep.subr.mxu0 0.0
    %2796 = vmatpush1.msra.mxu0 0.0
    %2797 = vmatprep.subr.mxu0 0.0
    %2798 = vmatpush1.msra.mxu0 0.0
    %2799 = vmatprep.mubr.f32.mxu0 0.0
    %v2800 = vand.u32 %v388, 4294901760
    %v2801 = vsub.f32 %v388, %v2800
    %2802 = vmatmul.mubr.f32.gmra.mrb[0].mxu0 %v2801
    %v2803 = vpop.f32.mrb[0].mxu0
    %v2804 = vadd.f32 %v2694, %v2803
    %v2805 = vpop.f32.mrb[0].mxu0
    %v2806 = vadd.f32 %v2696, %v2805
    %2807 = vmatprep.mubr.f32.mxu0 0.0
    %v2808 = vand.u32 %v391, 4294901760
    %v2809 = vsub.f32 %v391, %v2808
    %2810 = vmatmul.mubr.f32.gmra.mrb[0].mxu0 %v2809
    %v2811 = vpop.f32.mrb[0].mxu0
    %v2812 = vadd.f32 %v2701, %v2811
    %v2813 = vpop.f32.mrb[0].mxu0
    %v2814 = vadd.f32 %v2703, %v2813
    %2815 = vmatprep.mubr.f32.mxu0 0.0
    %v2816 = vand.u32 %v394, 4294901760
    %v2817 = vsub.f32 %v394, %v2816
    %2818 = vmatmul.mubr.f32.gmra.mrb[0].mxu0 %v2817
    %v2819 = vpop.f32.mrb[0].mxu0
    %v2820 = vadd.f32 %v2708, %v2819
    %v2821 = vpop.f32.mrb[0].mxu0
    %v2822 = vadd.f32 %v2710, %v2821
    %2823 = vmatprep.mubr.f32.mxu0 0.0
    %v2824 = vand.u32 %v397, 4294901760
    %v2825 = vsub.f32 %v397, %v2824
    %2826 = vmatmul.mubr.f32.gmra.mrb[0].mxu0 %v2825
    %v2827 = vpop.f32.mrb[0].mxu0
    %v2828 = vadd.f32 %v2715, %v2827
    %v2829 = vpop.f32.mrb[0].mxu0
    %v2830 = vadd.f32 %v2717, %v2829
    %2831 = vdwg.mxu0
    %v2832 = vand.u32 %v309, 4294901760
    %2833 = vmatprep.subr.mxu0 %v2832
    %v2834 = vand.u32 %v308, 4294901760
    %2835 = vmatpush1.msra.mxu0 %v2834
    %v2836 = vand.u32 %v325, 4294901760
    %2837 = vmatprep.subr.mxu0 %v2836
    %v2838 = vand.u32 %v324, 4294901760
    %2839 = vmatpush1.msra.mxu0 %v2838
    %v2840 = vand.u32 %v341, 4294901760
    %2841 = vmatprep.subr.mxu0 %v2840
    %v2842 = vand.u32 %v340, 4294901760
    %2843 = vmatpush1.msra.mxu0 %v2842
    %v2844 = vand.u32 %v357, 4294901760
    %2845 = vmatprep.subr.mxu0 %v2844
    %v2846 = vand.u32 %v356, 4294901760
    %2847 = vmatpush1.msra.mxu0 %v2846
    %2848 = vmatprep.subr.mxu0 0.0
    %2849 = vmatpush1.msra.mxu0 0.0
    %2850 = vmatprep.subr.mxu0 0.0
    %2851 = vmatpush1.msra.mxu0 0.0
    %2852 = vmatprep.subr.mxu0 0.0
    %2853 = vmatpush1.msra.mxu0 0.0
    %2854 = vmatprep.subr.mxu0 0.0
    %2855 = vmatpush1.msra.mxu0 0.0
    %2856 = vmatprep.subr.mxu0 0.0
    %2857 = vmatpush1.msra.mxu0 0.0
    %2858 = vmatprep.subr.mxu0 0.0
    %2859 = vmatpush1.msra.mxu0 0.0
    %2860 = vmatprep.subr.mxu0 0.0
    %2861 = vmatpush1.msra.mxu0 0.0
    %2862 = vmatprep.subr.mxu0 0.0
    %2863 = vmatpush1.msra.mxu0 0.0
    %2864 = vmatprep.subr.mxu0 0.0
    %2865 = vmatpush1.msra.mxu0 0.0
    %2866 = vmatprep.subr.mxu0 0.0
    %2867 = vmatpush1.msra.mxu0 0.0
    %2868 = vmatprep.subr.mxu0 0.0
    %2869 = vmatpush1.msra.mxu0 0.0
    %2870 = vmatprep.subr.mxu0 0.0
    %2871 = vmatpush1.msra.mxu0 0.0
    %2872 = vmatprep.subr.mxu0 0.0
    %2873 = vmatpush1.msra.mxu0 0.0
    %2874 = vmatprep.subr.mxu0 0.0
    %2875 = vmatpush1.msra.mxu0 0.0
    %2876 = vmatprep.subr.mxu0 0.0
    %2877 = vmatpush1.msra.mxu0 0.0
    %2878 = vmatprep.subr.mxu0 0.0
    %2879 = vmatpush1.msra.mxu0 0.0
    %2880 = vmatprep.subr.mxu0 0.0
    %2881 = vmatpush1.msra.mxu0 0.0
    %2882 = vmatprep.subr.mxu0 0.0
    %2883 = vmatpush1.msra.mxu0 0.0
    %2884 = vmatprep.subr.mxu0 0.0
    %2885 = vmatpush1.msra.mxu0 0.0
    %2886 = vmatprep.subr.mxu0 0.0
    %2887 = vmatpush1.msra.mxu0 0.0
    %2888 = vmatprep.subr.mxu0 0.0
    %2889 = vmatpush1.msra.mxu0 0.0
    %2890 = vmatprep.subr.mxu0 0.0
    %2891 = vmatpush1.msra.mxu0 0.0
    %2892 = vmatprep.subr.mxu0 0.0
    %2893 = vmatpush1.msra.mxu0 0.0
    %2894 = vmatprep.subr.mxu0 0.0
    %2895 = vmatpush1.msra.mxu0 0.0
    %2896 = vmatprep.subr.mxu0 0.0
    %2897 = vmatpush1.msra.mxu0 0.0
    %2898 = vmatprep.subr.mxu0 0.0
    %2899 = vmatpush1.msra.mxu0 0.0
    %2900 = vmatprep.subr.mxu0 0.0
    %2901 = vmatpush1.msra.mxu0 0.0
    %2902 = vmatprep.subr.mxu0 0.0
    %2903 = vmatpush1.msra.mxu0 0.0
    %2904 = vmatprep.mubr.f32.mxu0 0.0
    %v2905 = vand.u32 %v388, 4294901760
    %v2906 = vsub.f32 %v388, %v2905
    %v2907 = vand.u32 %v2906, 4294901760
    %2908 = vmatmul.mubr.f32.gmra.mrb[0].mxu0 %v2907
    %v2909 = vpop.f32.mrb[0].mxu0
    %v2910 = vadd.f32 %v2804, %v2909
    %v2911 = vpop.f32.mrb[0].mxu0
    %v2912 = vadd.f32 %v2806, %v2911
    %2913 = vmatprep.mubr.f32.mxu0 0.0
    %v2914 = vand.u32 %v391, 4294901760
    %v2915 = vsub.f32 %v391, %v2914
    %v2916 = vand.u32 %v2915, 4294901760
    %2917 = vmatmul.mubr.f32.gmra.mrb[0].mxu0 %v2916
    %v2918 = vpop.f32.mrb[0].mxu0
    %v2919 = vadd.f32 %v2812, %v2918
    %v2920 = vpop.f32.mrb[0].mxu0
    %v2921 = vadd.f32 %v2814, %v2920
    %2922 = vmatprep.mubr.f32.mxu0 0.0
    %v2923 = vand.u32 %v394, 4294901760
    %v2924 = vsub.f32 %v394, %v2923
    %v2925 = vand.u32 %v2924, 4294901760
    %2926 = vmatmul.mubr.f32.gmra.mrb[0].mxu0 %v2925
    %v2927 = vpop.f32.mrb[0].mxu0
    %v2928 = vadd.f32 %v2820, %v2927
    %v2929 = vpop.f32.mrb[0].mxu0
    %v2930 = vadd.f32 %v2822, %v2929
    %2931 = vmatprep.mubr.f32.mxu0 0.0
    %v2932 = vand.u32 %v397, 4294901760
    %v2933 = vsub.f32 %v397, %v2932
    %v2934 = vand.u32 %v2933, 4294901760
    %2935 = vmatmul.mubr.f32.gmra.mrb[0].mxu0 %v2934
    %v2936 = vpop.f32.mrb[0].mxu0
    %v2937 = vadd.f32 %v2828, %v2936
    %v2938 = vpop.f32.mrb[0].mxu0
    %v2939 = vadd.f32 %v2830, %v2938
    %2940 = vdwg.mxu0
    %v2941 = vand.u32 %v309, 4294901760
    %v2942 = vsub.f32 %v309, %v2941
    %v2943 = vand.u32 %v2942, 4294901760
    %2944 = vmatprep.subr.mxu0 %v2943
    %v2945 = vand.u32 %v308, 4294901760
    %v2946 = vsub.f32 %v308, %v2945
    %v2947 = vand.u32 %v2946, 4294901760
    %2948 = vmatpush1.msra.mxu0 %v2947
    %v2949 = vand.u32 %v325, 4294901760
    %v2950 = vsub.f32 %v325, %v2949
    %v2951 = vand.u32 %v2950, 4294901760
    %2952 = vmatprep.subr.mxu0 %v2951
    %v2953 = vand.u32 %v324, 4294901760
    %v2954 = vsub.f32 %v324, %v2953
    %v2955 = vand.u32 %v2954, 4294901760
    %2956 = vmatpush1.msra.mxu0 %v2955
    %v2957 = vand.u32 %v341, 4294901760
    %v2958 = vsub.f32 %v341, %v2957
    %v2959 = vand.u32 %v2958, 4294901760
    %2960 = vmatprep.subr.mxu0 %v2959
    %v2961 = vand.u32 %v340, 4294901760
    %v2962 = vsub.f32 %v340, %v2961
    %v2963 = vand.u32 %v2962, 4294901760
    %2964 = vmatpush1.msra.mxu0 %v2963
    %v2965 = vand.u32 %v357, 4294901760
    %v2966 = vsub.f32 %v357, %v2965
    %v2967 = vand.u32 %v2966, 4294901760
    %2968 = vmatprep.subr.mxu0 %v2967
    %v2969 = vand.u32 %v356, 4294901760
    %v2970 = vsub.f32 %v356, %v2969
    %v2971 = vand.u32 %v2970, 4294901760
    %2972 = vmatpush1.msra.mxu0 %v2971
    %2973 = vmatprep.subr.mxu0 0.0
    %2974 = vmatpush1.msra.mxu0 0.0
    %2975 = vmatprep.subr.mxu0 0.0
    %2976 = vmatpush1.msra.mxu0 0.0
    %2977 = vmatprep.subr.mxu0 0.0
    %2978 = vmatpush1.msra.mxu0 0.0
    %2979 = vmatprep.subr.mxu0 0.0
    %2980 = vmatpush1.msra.mxu0 0.0
    %2981 = vmatprep.subr.mxu0 0.0
    %2982 = vmatpush1.msra.mxu0 0.0
    %2983 = vmatprep.subr.mxu0 0.0
    %2984 = vmatpush1.msra.mxu0 0.0
    %2985 = vmatprep.subr.mxu0 0.0
    %2986 = vmatpush1.msra.mxu0 0.0
    %2987 = vmatprep.subr.mxu0 0.0
    %2988 = vmatpush1.msra.mxu0 0.0
    %2989 = vmatprep.subr.mxu0 0.0
    %2990 = vmatpush1.msra.mxu0 0.0
    %2991 = vmatprep.subr.mxu0 0.0
    %2992 = vmatpush1.msra.mxu0 0.0
    %2993 = vmatprep.subr.mxu0 0.0
    %2994 = vmatpush1.msra.mxu0 0.0
    %2995 = vmatprep.subr.mxu0 0.0
    %2996 = vmatpush1.msra.mxu0 0.0
    %2997 = vmatprep.subr.mxu0 0.0
    %2998 = vmatpush1.msra.mxu0 0.0
    %2999 = vmatprep.subr.mxu0 0.0
    %3000 = vmatpush1.msra.mxu0 0.0
    %3001 = vmatprep.subr.mxu0 0.0
    %3002 = vmatpush1.msra.mxu0 0.0
    %3003 = vmatprep.subr.mxu0 0.0
    %3004 = vmatpush1.msra.mxu0 0.0
    %3005 = vmatprep.subr.mxu0 0.0
    %3006 = vmatpush1.msra.mxu0 0.0
    %3007 = vmatprep.subr.mxu0 0.0
    %3008 = vmatpush1.msra.mxu0 0.0
    %3009 = vmatprep.subr.mxu0 0.0
    %3010 = vmatpush1.msra.mxu0 0.0
    %3011 = vmatprep.subr.mxu0 0.0
    %3012 = vmatpush1.msra.mxu0 0.0
    %3013 = vmatprep.subr.mxu0 0.0
    %3014 = vmatpush1.msra.mxu0 0.0
    %3015 = vmatprep.subr.mxu0 0.0
    %3016 = vmatpush1.msra.mxu0 0.0
    %3017 = vmatprep.subr.mxu0 0.0
    %3018 = vmatpush1.msra.mxu0 0.0
    %3019 = vmatprep.subr.mxu0 0.0
    %3020 = vmatpush1.msra.mxu0 0.0
    %3021 = vmatprep.subr.mxu0 0.0
    %3022 = vmatpush1.msra.mxu0 0.0
    %3023 = vmatprep.subr.mxu0 0.0
    %3024 = vmatpush1.msra.mxu0 0.0
    %3025 = vmatprep.subr.mxu0 0.0
    %3026 = vmatpush1.msra.mxu0 0.0
    %3027 = vmatprep.subr.mxu0 0.0
    %3028 = vmatpush1.msra.mxu0 0.0
    %3029 = vmatprep.mubr.f32.mxu0 0.0
    %v3030 = vand.u32 %v388, 4294901760
    %3031 = vmatmul.mubr.f32.gmra.mrb[0].mxu0 %v3030
    %v3032 = vpop.f32.mrb[0].mxu0
    %v3033 = vadd.f32 %v2910, %v3032
    %v3034 = vpop.f32.mrb[0].mxu0
    %v3035 = vadd.f32 %v2912, %v3034
    %3036 = vmatprep.mubr.f32.mxu0 0.0
    %v3037 = vand.u32 %v391, 4294901760
    %3038 = vmatmul.mubr.f32.gmra.mrb[0].mxu0 %v3037
    %v3039 = vpop.f32.mrb[0].mxu0
    %v3040 = vadd.f32 %v2919, %v3039
    %v3041 = vpop.f32.mrb[0].mxu0
    %v3042 = vadd.f32 %v2921, %v3041
    %3043 = vmatprep.mubr.f32.mxu0 0.0
    %v3044 = vand.u32 %v394, 4294901760
    %3045 = vmatmul.mubr.f32.gmra.mrb[0].mxu0 %v3044
    %v3046 = vpop.f32.mrb[0].mxu0
    %v3047 = vadd.f32 %v2928, %v3046
    %v3048 = vpop.f32.mrb[0].mxu0
    %v3049 = vadd.f32 %v2930, %v3048
    %3050 = vmatprep.mubr.f32.mxu0 0.0
    %v3051 = vand.u32 %v397, 4294901760
    %3052 = vmatmul.mubr.f32.gmra.mrb[0].mxu0 %v3051
    %v3053 = vpop.f32.mrb[0].mxu0
    %v3054 = vadd.f32 %v2937, %v3053
    %v3055 = vpop.f32.mrb[0].mxu0
    %v3056 = vadd.f32 %v2939, %v3055
    %3057 = vdwg.mxu0
    %v3058 = vand.u32 %v309, 4294901760
    %3059 = vmatprep.subr.mxu0 %v3058
    %v3060 = vand.u32 %v308, 4294901760
    %3061 = vmatpush1.msra.mxu0 %v3060
    %v3062 = vand.u32 %v325, 4294901760
    %3063 = vmatprep.subr.mxu0 %v3062
    %v3064 = vand.u32 %v324, 4294901760
    %3065 = vmatpush1.msra.mxu0 %v3064
    %v3066 = vand.u32 %v341, 4294901760
    %3067 = vmatprep.subr.mxu0 %v3066
    %v3068 = vand.u32 %v340, 4294901760
    %3069 = vmatpush1.msra.mxu0 %v3068
    %v3070 = vand.u32 %v357, 4294901760
    %3071 = vmatprep.subr.mxu0 %v3070
    %v3072 = vand.u32 %v356, 4294901760
    %3073 = vmatpush1.msra.mxu0 %v3072
    %3074 = vmatprep.subr.mxu0 0.0
    %3075 = vmatpush1.msra.mxu0 0.0
    %3076 = vmatprep.subr.mxu0 0.0
    %3077 = vmatpush1.msra.mxu0 0.0
    %3078 = vmatprep.subr.mxu0 0.0
    %3079 = vmatpush1.msra.mxu0 0.0
    %3080 = vmatprep.subr.mxu0 0.0
    %3081 = vmatpush1.msra.mxu0 0.0
    %3082 = vmatprep.subr.mxu0 0.0
    %3083 = vmatpush1.msra.mxu0 0.0
    %3084 = vmatprep.subr.mxu0 0.0
    %3085 = vmatpush1.msra.mxu0 0.0
    %3086 = vmatprep.subr.mxu0 0.0
    %3087 = vmatpush1.msra.mxu0 0.0
    %3088 = vmatprep.subr.mxu0 0.0
    %3089 = vmatpush1.msra.mxu0 0.0
    %3090 = vmatprep.subr.mxu0 0.0
    %3091 = vmatpush1.msra.mxu0 0.0
    %3092 = vmatprep.subr.mxu0 0.0
    %3093 = vmatpush1.msra.mxu0 0.0
    %3094 = vmatprep.subr.mxu0 0.0
    %3095 = vmatpush1.msra.mxu0 0.0
    %3096 = vmatprep.subr.mxu0 0.0
    %3097 = vmatpush1.msra.mxu0 0.0
    %3098 = vmatprep.subr.mxu0 0.0
    %3099 = vmatpush1.msra.mxu0 0.0
    %3100 = vmatprep.subr.mxu0 0.0
    %3101 = vmatpush1.msra.mxu0 0.0
    %3102 = vmatprep.subr.mxu0 0.0
    %3103 = vmatpush1.msra.mxu0 0.0
    %3104 = vmatprep.subr.mxu0 0.0
    %3105 = vmatpush1.msra.mxu0 0.0
    %3106 = vmatprep.subr.mxu0 0.0
    %3107 = vmatpush1.msra.mxu0 0.0
    %3108 = vmatprep.subr.mxu0 0.0
    %3109 = vmatpush1.msra.mxu0 0.0
    %3110 = vmatprep.subr.mxu0 0.0
    %3111 = vmatpush1.msra.mxu0 0.0
    %3112 = vmatprep.subr.mxu0 0.0
    %3113 = vmatpush1.msra.mxu0 0.0
    %3114 = vmatprep.subr.mxu0 0.0
    %3115 = vmatpush1.msra.mxu0 0.0
    %3116 = vmatprep.subr.mxu0 0.0
    %3117 = vmatpush1.msra.mxu0 0.0
    %3118 = vmatprep.subr.mxu0 0.0
    %3119 = vmatpush1.msra.mxu0 0.0
    %3120 = vmatprep.subr.mxu0 0.0
    %3121 = vmatpush1.msra.mxu0 0.0
    %3122 = vmatprep.subr.mxu0 0.0
    %3123 = vmatpush1.msra.mxu0 0.0
    %3124 = vmatprep.subr.mxu0 0.0
    %3125 = vmatpush1.msra.mxu0 0.0
    %3126 = vmatprep.subr.mxu0 0.0
    %3127 = vmatpush1.msra.mxu0 0.0
    %3128 = vmatprep.subr.mxu0 0.0
    %3129 = vmatpush1.msra.mxu0 0.0
    %3130 = vmatprep.mubr.f32.mxu0 0.0
    %v3131 = vand.u32 %v388, 4294901760
    %3132 = vmatmul.mubr.f32.gmra.mrb[0].mxu0 %v3131
    %v3133 = vpop.f32.mrb[0].mxu0
    %v3134 = vadd.f32 %v3033, %v3133
    %v3135 = vpop.f32.mrb[0].mxu0
    %v3136 = vadd.f32 %v3035, %v3135
    %3137 = vmatprep.mubr.f32.mxu0 0.0
    %v3138 = vand.u32 %v391, 4294901760
    %3139 = vmatmul.mubr.f32.gmra.mrb[0].mxu0 %v3138
    %v3140 = vpop.f32.mrb[0].mxu0
    %v3141 = vadd.f32 %v3040, %v3140
    %v3142 = vpop.f32.mrb[0].mxu0
    %v3143 = vadd.f32 %v3042, %v3142
    %3144 = vmatprep.mubr.f32.mxu0 0.0
    %v3145 = vand.u32 %v394, 4294901760
    %3146 = vmatmul.mubr.f32.gmra.mrb[0].mxu0 %v3145
    %v3147 = vpop.f32.mrb[0].mxu0
    %v3148 = vadd.f32 %v3047, %v3147
    %v3149 = vpop.f32.mrb[0].mxu0
    %v3150 = vadd.f32 %v3049, %v3149
    %3151 = vmatprep.mubr.f32.mxu0 0.0
    %v3152 = vand.u32 %v397, 4294901760
    %3153 = vmatmul.mubr.f32.gmra.mrb[0].mxu0 %v3152
    %v3154 = vpop.f32.mrb[0].mxu0
    %v3155 = vadd.f32 %v3054, %v3154
    %v3156 = vpop.f32.mrb[0].mxu0
    %v3157 = vadd.f32 %v3056, %v3156
    %3158 = vdwg.mxu0
    %v3159 = vand.u32 %v311, 4294901760
    %3160 = vmatprep.subr.mxu0 %v3159
    %v3161 = vand.u32 %v310, 4294901760
    %3162 = vmatpush1.msra.mxu0 %v3161
    %v3163 = vand.u32 %v327, 4294901760
    %3164 = vmatprep.subr.mxu0 %v3163
    %v3165 = vand.u32 %v326, 4294901760
    %3166 = vmatpush1.msra.mxu0 %v3165
    %v3167 = vand.u32 %v343, 4294901760
    %3168 = vmatprep.subr.mxu0 %v3167
    %v3169 = vand.u32 %v342, 4294901760
    %3170 = vmatpush1.msra.mxu0 %v3169
    %v3171 = vand.u32 %v359, 4294901760
    %3172 = vmatprep.subr.mxu0 %v3171
    %v3173 = vand.u32 %v358, 4294901760
    %3174 = vmatpush1.msra.mxu0 %v3173
    %3175 = vmatprep.subr.mxu0 0.0
    %3176 = vmatpush1.msra.mxu0 0.0
    %3177 = vmatprep.subr.mxu0 0.0
    %3178 = vmatpush1.msra.mxu0 0.0
    %3179 = vmatprep.subr.mxu0 0.0
    %3180 = vmatpush1.msra.mxu0 0.0
    %3181 = vmatprep.subr.mxu0 0.0
    %3182 = vmatpush1.msra.mxu0 0.0
    %3183 = vmatprep.subr.mxu0 0.0
    %3184 = vmatpush1.msra.mxu0 0.0
    %3185 = vmatprep.subr.mxu0 0.0
    %3186 = vmatpush1.msra.mxu0 0.0
    %3187 = vmatprep.subr.mxu0 0.0
    %3188 = vmatpush1.msra.mxu0 0.0
    %3189 = vmatprep.subr.mxu0 0.0
    %3190 = vmatpush1.msra.mxu0 0.0
    %3191 = vmatprep.subr.mxu0 0.0
    %3192 = vmatpush1.msra.mxu0 0.0
    %3193 = vmatprep.subr.mxu0 0.0
    %3194 = vmatpush1.msra.mxu0 0.0
    %3195 = vmatprep.subr.mxu0 0.0
    %3196 = vmatpush1.msra.mxu0 0.0
    %3197 = vmatprep.subr.mxu0 0.0
    %3198 = vmatpush1.msra.mxu0 0.0
    %3199 = vmatprep.subr.mxu0 0.0
    %3200 = vmatpush1.msra.mxu0 0.0
    %3201 = vmatprep.subr.mxu0 0.0
    %3202 = vmatpush1.msra.mxu0 0.0
    %3203 = vmatprep.subr.mxu0 0.0
    %3204 = vmatpush1.msra.mxu0 0.0
    %3205 = vmatprep.subr.mxu0 0.0
    %3206 = vmatpush1.msra.mxu0 0.0
    %3207 = vmatprep.subr.mxu0 0.0
    %3208 = vmatpush1.msra.mxu0 0.0
    %3209 = vmatprep.subr.mxu0 0.0
    %3210 = vmatpush1.msra.mxu0 0.0
    %3211 = vmatprep.subr.mxu0 0.0
    %3212 = vmatpush1.msra.mxu0 0.0
    %3213 = vmatprep.subr.mxu0 0.0
    %3214 = vmatpush1.msra.mxu0 0.0
    %3215 = vmatprep.subr.mxu0 0.0
    %3216 = vmatpush1.msra.mxu0 0.0
    %3217 = vmatprep.subr.mxu0 0.0
    %3218 = vmatpush1.msra.mxu0 0.0
    %3219 = vmatprep.subr.mxu0 0.0
    %3220 = vmatpush1.msra.mxu0 0.0
    %3221 = vmatprep.subr.mxu0 0.0
    %3222 = vmatpush1.msra.mxu0 0.0
    %3223 = vmatprep.subr.mxu0 0.0
    %3224 = vmatpush1.msra.mxu0 0.0
    %3225 = vmatprep.subr.mxu0 0.0
    %3226 = vmatpush1.msra.mxu0 0.0
    %3227 = vmatprep.subr.mxu0 0.0
    %3228 = vmatpush1.msra.mxu0 0.0
    %3229 = vmatprep.subr.mxu0 0.0
    %3230 = vmatpush1.msra.mxu0 0.0
    %3231 = vmatprep.mubr.f32.mxu0 0.0
    %v3232 = vand.u32 %v388, 4294901760
    %v3233 = vsub.f32 %v388, %v3232
    %v3234 = vand.u32 %v3233, 4294901760
    %v3235 = vsub.f32 %v3233, %v3234
    %v3236 = vand.u32 %v3235, 4294901760
    %3237 = vmatmul.mubr.f32.gmra.mrb[0].mxu0 %v3236
    %v3238 = vpop.f32.mrb[0].mxu0
    %v3239 = vadd.f32 %v369, %v3238
    %v3240 = vpop.f32.mrb[0].mxu0
    %v3241 = vadd.f32 %v369, %v3240
    %3242 = vmatprep.mubr.f32.mxu0 0.0
    %v3243 = vand.u32 %v391, 4294901760
    %v3244 = vsub.f32 %v391, %v3243
    %v3245 = vand.u32 %v3244, 4294901760
    %v3246 = vsub.f32 %v3244, %v3245
    %v3247 = vand.u32 %v3246, 4294901760
    %3248 = vmatmul.mubr.f32.gmra.mrb[0].mxu0 %v3247
    %v3249 = vpop.f32.mrb[0].mxu0
    %v3250 = vadd.f32 %v374, %v3249
    %v3251 = vpop.f32.mrb[0].mxu0
    %v3252 = vadd.f32 %v374, %v3251
    %3253 = vmatprep.mubr.f32.mxu0 0.0
    %v3254 = vand.u32 %v394, 4294901760
    %v3255 = vsub.f32 %v394, %v3254
    %v3256 = vand.u32 %v3255, 4294901760
    %v3257 = vsub.f32 %v3255, %v3256
    %v3258 = vand.u32 %v3257, 4294901760
    %3259 = vmatmul.mubr.f32.gmra.mrb[0].mxu0 %v3258
    %v3260 = vpop.f32.mrb[0].mxu0
    %v3261 = vadd.f32 %v379, %v3260
    %v3262 = vpop.f32.mrb[0].mxu0
    %v3263 = vadd.f32 %v379, %v3262
    %3264 = vmatprep.mubr.f32.mxu0 0.0
    %v3265 = vand.u32 %v397, 4294901760
    %v3266 = vsub.f32 %v397, %v3265
    %v3267 = vand.u32 %v3266, 4294901760
    %v3268 = vsub.f32 %v3266, %v3267
    %v3269 = vand.u32 %v3268, 4294901760
    %3270 = vmatmul.mubr.f32.gmra.mrb[0].mxu0 %v3269
    %v3271 = vpop.f32.mrb[0].mxu0
    %v3272 = vadd.f32 %v384, %v3271
    %v3273 = vpop.f32.mrb[0].mxu0
    %v3274 = vadd.f32 %v384, %v3273
    %3275 = vdwg.mxu0
    %v3276 = vand.u32 %v311, 4294901760
    %v3277 = vsub.f32 %v311, %v3276
    %v3278 = vand.u32 %v3277, 4294901760
    %v3279 = vsub.f32 %v3277, %v3278
    %v3280 = vand.u32 %v3279, 4294901760
    %3281 = vmatprep.subr.mxu0 %v3280
    %v3282 = vand.u32 %v310, 4294901760
    %v3283 = vsub.f32 %v310, %v3282
    %v3284 = vand.u32 %v3283, 4294901760
    %v3285 = vsub.f32 %v3283, %v3284
    %v3286 = vand.u32 %v3285, 4294901760
    %3287 = vmatpush1.msra.mxu0 %v3286
    %v3288 = vand.u32 %v327, 4294901760
    %v3289 = vsub.f32 %v327, %v3288
    %v3290 = vand.u32 %v3289, 4294901760
    %v3291 = vsub.f32 %v3289, %v3290
    %v3292 = vand.u32 %v3291, 4294901760
    %3293 = vmatprep.subr.mxu0 %v3292
    %v3294 = vand.u32 %v326, 4294901760
    %v3295 = vsub.f32 %v326, %v3294
    %v3296 = vand.u32 %v3295, 4294901760
    %v3297 = vsub.f32 %v3295, %v3296
    %v3298 = vand.u32 %v3297, 4294901760
    %3299 = vmatpush1.msra.mxu0 %v3298
    %v3300 = vand.u32 %v343, 4294901760
    %v3301 = vsub.f32 %v343, %v3300
    %v3302 = vand.u32 %v3301, 4294901760
    %v3303 = vsub.f32 %v3301, %v3302
    %v3304 = vand.u32 %v3303, 4294901760
    %3305 = vmatprep.subr.mxu0 %v3304
    %v3306 = vand.u32 %v342, 4294901760
    %v3307 = vsub.f32 %v342, %v3306
    %v3308 = vand.u32 %v3307, 4294901760
    %v3309 = vsub.f32 %v3307, %v3308
    %v3310 = vand.u32 %v3309, 4294901760
    %3311 = vmatpush1.msra.mxu0 %v3310
    %v3312 = vand.u32 %v359, 4294901760
    %v3313 = vsub.f32 %v359, %v3312
    %v3314 = vand.u32 %v3313, 4294901760
    %v3315 = vsub.f32 %v3313, %v3314
    %v3316 = vand.u32 %v3315, 4294901760
    %3317 = vmatprep.subr.mxu0 %v3316
    %v3318 = vand.u32 %v358, 4294901760
    %v3319 = vsub.f32 %v358, %v3318
    %v3320 = vand.u32 %v3319, 4294901760
    %v3321 = vsub.f32 %v3319, %v3320
    %v3322 = vand.u32 %v3321, 4294901760
    %3323 = vmatpush1.msra.mxu0 %v3322
    %3324 = vmatprep.subr.mxu0 0.0
    %3325 = vmatpush1.msra.mxu0 0.0
    %3326 = vmatprep.subr.mxu0 0.0
    %3327 = vmatpush1.msra.mxu0 0.0
    %3328 = vmatprep.subr.mxu0 0.0
    %3329 = vmatpush1.msra.mxu0 0.0
    %3330 = vmatprep.subr.mxu0 0.0
    %3331 = vmatpush1.msra.mxu0 0.0
    %3332 = vmatprep.subr.mxu0 0.0
    %3333 = vmatpush1.msra.mxu0 0.0
    %3334 = vmatprep.subr.mxu0 0.0
    %3335 = vmatpush1.msra.mxu0 0.0
    %3336 = vmatprep.subr.mxu0 0.0
    %3337 = vmatpush1.msra.mxu0 0.0
    %3338 = vmatprep.subr.mxu0 0.0
    %3339 = vmatpush1.msra.mxu0 0.0
    %3340 = vmatprep.subr.mxu0 0.0
    %3341 = vmatpush1.msra.mxu0 0.0
    %3342 = vmatprep.subr.mxu0 0.0
    %3343 = vmatpush1.msra.mxu0 0.0
    %3344 = vmatprep.subr.mxu0 0.0
    %3345 = vmatpush1.msra.mxu0 0.0
    %3346 = vmatprep.subr.mxu0 0.0
    %3347 = vmatpush1.msra.mxu0 0.0
    %3348 = vmatprep.subr.mxu0 0.0
    %3349 = vmatpush1.msra.mxu0 0.0
    %3350 = vmatprep.subr.mxu0 0.0
    %3351 = vmatpush1.msra.mxu0 0.0
    %3352 = vmatprep.subr.mxu0 0.0
    %3353 = vmatpush1.msra.mxu0 0.0
    %3354 = vmatprep.subr.mxu0 0.0
    %3355 = vmatpush1.msra.mxu0 0.0
    %3356 = vmatprep.subr.mxu0 0.0
    %3357 = vmatpush1.msra.mxu0 0.0
    %3358 = vmatprep.subr.mxu0 0.0
    %3359 = vmatpush1.msra.mxu0 0.0
    %3360 = vmatprep.subr.mxu0 0.0
    %3361 = vmatpush1.msra.mxu0 0.0
    %3362 = vmatprep.subr.mxu0 0.0
    %3363 = vmatpush1.msra.mxu0 0.0
    %3364 = vmatprep.subr.mxu0 0.0
    %3365 = vmatpush1.msra.mxu0 0.0
    %3366 = vmatprep.subr.mxu0 0.0
    %3367 = vmatpush1.msra.mxu0 0.0
    %3368 = vmatprep.subr.mxu0 0.0
    %3369 = vmatpush1.msra.mxu0 0.0
    %3370 = vmatprep.subr.mxu0 0.0
    %3371 = vmatpush1.msra.mxu0 0.0
    %3372 = vmatprep.subr.mxu0 0.0
    %3373 = vmatpush1.msra.mxu0 0.0
    %3374 = vmatprep.subr.mxu0 0.0
    %3375 = vmatpush1.msra.mxu0 0.0
    %3376 = vmatprep.subr.mxu0 0.0
    %3377 = vmatpush1.msra.mxu0 0.0
    %3378 = vmatprep.subr.mxu0 0.0
    %3379 = vmatpush1.msra.mxu0 0.0
    %3380 = vmatprep.mubr.f32.mxu0 0.0
    %v3381 = vand.u32 %v388, 4294901760
    %3382 = vmatmul.mubr.f32.gmra.mrb[0].mxu0 %v3381
    %v3383 = vpop.f32.mrb[0].mxu0
    %v3384 = vadd.f32 %v3239, %v3383
    %v3385 = vpop.f32.mrb[0].mxu0
    %v3386 = vadd.f32 %v3241, %v3385
    %3387 = vmatprep.mubr.f32.mxu0 0.0
    %v3388 = vand.u32 %v391, 4294901760
    %3389 = vmatmul.mubr.f32.gmra.mrb[0].mxu0 %v3388
    %v3390 = vpop.f32.mrb[0].mxu0
    %v3391 = vadd.f32 %v3250, %v3390
    %v3392 = vpop.f32.mrb[0].mxu0
    %v3393 = vadd.f32 %v3252, %v3392
    %3394 = vmatprep.mubr.f32.mxu0 0.0
    %v3395 = vand.u32 %v394, 4294901760
    %3396 = vmatmul.mubr.f32.gmra.mrb[0].mxu0 %v3395
    %v3397 = vpop.f32.mrb[0].mxu0
    %v3398 = vadd.f32 %v3261, %v3397
    %v3399 = vpop.f32.mrb[0].mxu0
    %v3400 = vadd.f32 %v3263, %v3399
    %3401 = vmatprep.mubr.f32.mxu0 0.0
    %v3402 = vand.u32 %v397, 4294901760
    %3403 = vmatmul.mubr.f32.gmra.mrb[0].mxu0 %v3402
    %v3404 = vpop.f32.mrb[0].mxu0
    %v3405 = vadd.f32 %v3272, %v3404
    %v3406 = vpop.f32.mrb[0].mxu0
    %v3407 = vadd.f32 %v3274, %v3406
    %3408 = vdwg.mxu0
    %v3409 = vand.u32 %v311, 4294901760
    %v3410 = vsub.f32 %v311, %v3409
    %3411 = vmatprep.subr.mxu0 %v3410
    %v3412 = vand.u32 %v310, 4294901760
    %v3413 = vsub.f32 %v310, %v3412
    %3414 = vmatpush1.msra.mxu0 %v3413
    %v3415 = vand.u32 %v327, 4294901760
    %v3416 = vsub.f32 %v327, %v3415
    %3417 = vmatprep.subr.mxu0 %v3416
    %v3418 = vand.u32 %v326, 4294901760
    %v3419 = vsub.f32 %v326, %v3418
    %3420 = vmatpush1.msra.mxu0 %v3419
    %v3421 = vand.u32 %v343, 4294901760
    %v3422 = vsub.f32 %v343, %v3421
    %3423 = vmatprep.subr.mxu0 %v3422
    %v3424 = vand.u32 %v342, 4294901760
    %v3425 = vsub.f32 %v342, %v3424
    %3426 = vmatpush1.msra.mxu0 %v3425
    %v3427 = vand.u32 %v359, 4294901760
    %v3428 = vsub.f32 %v359, %v3427
    %3429 = vmatprep.subr.mxu0 %v3428
    %v3430 = vand.u32 %v358, 4294901760
    %v3431 = vsub.f32 %v358, %v3430
    %3432 = vmatpush1.msra.mxu0 %v3431
    %3433 = vmatprep.subr.mxu0 0.0
    %3434 = vmatpush1.msra.mxu0 0.0
    %3435 = vmatprep.subr.mxu0 0.0
    %3436 = vmatpush1.msra.mxu0 0.0
    %3437 = vmatprep.subr.mxu0 0.0
    %3438 = vmatpush1.msra.mxu0 0.0
    %3439 = vmatprep.subr.mxu0 0.0
    %3440 = vmatpush1.msra.mxu0 0.0
    %3441 = vmatprep.subr.mxu0 0.0
    %3442 = vmatpush1.msra.mxu0 0.0
    %3443 = vmatprep.subr.mxu0 0.0
    %3444 = vmatpush1.msra.mxu0 0.0
    %3445 = vmatprep.subr.mxu0 0.0
    %3446 = vmatpush1.msra.mxu0 0.0
    %3447 = vmatprep.subr.mxu0 0.0
    %3448 = vmatpush1.msra.mxu0 0.0
    %3449 = vmatprep.subr.mxu0 0.0
    %3450 = vmatpush1.msra.mxu0 0.0
    %3451 = vmatprep.subr.mxu0 0.0
    %3452 = vmatpush1.msra.mxu0 0.0
    %3453 = vmatprep.subr.mxu0 0.0
    %3454 = vmatpush1.msra.mxu0 0.0
    %3455 = vmatprep.subr.mxu0 0.0
    %3456 = vmatpush1.msra.mxu0 0.0
    %3457 = vmatprep.subr.mxu0 0.0
    %3458 = vmatpush1.msra.mxu0 0.0
    %3459 = vmatprep.subr.mxu0 0.0
    %3460 = vmatpush1.msra.mxu0 0.0
    %3461 = vmatprep.subr.mxu0 0.0
    %3462 = vmatpush1.msra.mxu0 0.0
    %3463 = vmatprep.subr.mxu0 0.0
    %3464 = vmatpush1.msra.mxu0 0.0
    %3465 = vmatprep.subr.mxu0 0.0
    %3466 = vmatpush1.msra.mxu0 0.0
    %3467 = vmatprep.subr.mxu0 0.0
    %3468 = vmatpush1.msra.mxu0 0.0
    %3469 = vmatprep.subr.mxu0 0.0
    %3470 = vmatpush1.msra.mxu0 0.0
    %3471 = vmatprep.subr.mxu0 0.0
    %3472 = vmatpush1.msra.mxu0 0.0
    %3473 = vmatprep.subr.mxu0 0.0
    %3474 = vmatpush1.msra.mxu0 0.0
    %3475 = vmatprep.subr.mxu0 0.0
    %3476 = vmatpush1.msra.mxu0 0.0
    %3477 = vmatprep.subr.mxu0 0.0
    %3478 = vmatpush1.msra.mxu0 0.0
    %3479 = vmatprep.subr.mxu0 0.0
    %3480 = vmatpush1.msra.mxu0 0.0
    %3481 = vmatprep.subr.mxu0 0.0
    %3482 = vmatpush1.msra.mxu0 0.0
    %3483 = vmatprep.subr.mxu0 0.0
    %3484 = vmatpush1.msra.mxu0 0.0
    %3485 = vmatprep.subr.mxu0 0.0
    %3486 = vmatpush1.msra.mxu0 0.0
    %3487 = vmatprep.subr.mxu0 0.0
    %3488 = vmatpush1.msra.mxu0 0.0
    %3489 = vmatprep.mubr.f32.mxu0 0.0
    %v3490 = vand.u32 %v388, 4294901760
    %v3491 = vsub.f32 %v388, %v3490
    %3492 = vmatmul.mubr.f32.gmra.mrb[0].mxu0 %v3491
    %v3493 = vpop.f32.mrb[0].mxu0
    %v3494 = vadd.f32 %v3384, %v3493
    %v3495 = vpop.f32.mrb[0].mxu0
    %v3496 = vadd.f32 %v3386, %v3495
    %3497 = vmatprep.mubr.f32.mxu0 0.0
    %v3498 = vand.u32 %v391, 4294901760
    %v3499 = vsub.f32 %v391, %v3498
    %3500 = vmatmul.mubr.f32.gmra.mrb[0].mxu0 %v3499
    %v3501 = vpop.f32.mrb[0].mxu0
    %v3502 = vadd.f32 %v3391, %v3501
    %v3503 = vpop.f32.mrb[0].mxu0
    %v3504 = vadd.f32 %v3393, %v3503
    %3505 = vmatprep.mubr.f32.mxu0 0.0
    %v3506 = vand.u32 %v394, 4294901760
    %v3507 = vsub.f32 %v394, %v3506
    %3508 = vmatmul.mubr.f32.gmra.mrb[0].mxu0 %v3507
    %v3509 = vpop.f32.mrb[0].mxu0
    %v3510 = vadd.f32 %v3398, %v3509
    %v3511 = vpop.f32.mrb[0].mxu0
    %v3512 = vadd.f32 %v3400, %v3511
    %3513 = vmatprep.mubr.f32.mxu0 0.0
    %v3514 = vand.u32 %v397, 4294901760
    %v3515 = vsub.f32 %v397, %v3514
    %3516 = vmatmul.mubr.f32.gmra.mrb[0].mxu0 %v3515
    %v3517 = vpop.f32.mrb[0].mxu0
    %v3518 = vadd.f32 %v3405, %v3517
    %v3519 = vpop.f32.mrb[0].mxu0
    %v3520 = vadd.f32 %v3407, %v3519
    %3521 = vdwg.mxu0
    %v3522 = vand.u32 %v311, 4294901760
    %3523 = vmatprep.subr.mxu0 %v3522
    %v3524 = vand.u32 %v310, 4294901760
    %3525 = vmatpush1.msra.mxu0 %v3524
    %v3526 = vand.u32 %v327, 4294901760
    %3527 = vmatprep.subr.mxu0 %v3526
    %v3528 = vand.u32 %v326, 4294901760
    %3529 = vmatpush1.msra.mxu0 %v3528
    %v3530 = vand.u32 %v343, 4294901760
    %3531 = vmatprep.subr.mxu0 %v3530
    %v3532 = vand.u32 %v342, 4294901760
    %3533 = vmatpush1.msra.mxu0 %v3532
    %v3534 = vand.u32 %v359, 4294901760
    %3535 = vmatprep.subr.mxu0 %v3534
    %v3536 = vand.u32 %v358, 4294901760
    %3537 = vmatpush1.msra.mxu0 %v3536
    %3538 = vmatprep.subr.mxu0 0.0
    %3539 = vmatpush1.msra.mxu0 0.0
    %3540 = vmatprep.subr.mxu0 0.0
    %3541 = vmatpush1.msra.mxu0 0.0
    %3542 = vmatprep.subr.mxu0 0.0
    %3543 = vmatpush1.msra.mxu0 0.0
    %3544 = vmatprep.subr.mxu0 0.0
    %3545 = vmatpush1.msra.mxu0 0.0
    %3546 = vmatprep.subr.mxu0 0.0
    %3547 = vmatpush1.msra.mxu0 0.0
    %3548 = vmatprep.subr.mxu0 0.0
    %3549 = vmatpush1.msra.mxu0 0.0
    %3550 = vmatprep.subr.mxu0 0.0
    %3551 = vmatpush1.msra.mxu0 0.0
    %3552 = vmatprep.subr.mxu0 0.0
    %3553 = vmatpush1.msra.mxu0 0.0
    %3554 = vmatprep.subr.mxu0 0.0
    %3555 = vmatpush1.msra.mxu0 0.0
    %3556 = vmatprep.subr.mxu0 0.0
    %3557 = vmatpush1.msra.mxu0 0.0
    %3558 = vmatprep.subr.mxu0 0.0
    %3559 = vmatpush1.msra.mxu0 0.0
    %3560 = vmatprep.subr.mxu0 0.0
    %3561 = vmatpush1.msra.mxu0 0.0
    %3562 = vmatprep.subr.mxu0 0.0
    %3563 = vmatpush1.msra.mxu0 0.0
    %3564 = vmatprep.subr.mxu0 0.0
    %3565 = vmatpush1.msra.mxu0 0.0
    %3566 = vmatprep.subr.mxu0 0.0
    %3567 = vmatpush1.msra.mxu0 0.0
    %3568 = vmatprep.subr.mxu0 0.0
    %3569 = vmatpush1.msra.mxu0 0.0
    %3570 = vmatprep.subr.mxu0 0.0
    %3571 = vmatpush1.msra.mxu0 0.0
    %3572 = vmatprep.subr.mxu0 0.0
    %3573 = vmatpush1.msra.mxu0 0.0
    %3574 = vmatprep.subr.mxu0 0.0
    %3575 = vmatpush1.msra.mxu0 0.0
    %3576 = vmatprep.subr.mxu0 0.0
    %3577 = vmatpush1.msra.mxu0 0.0
    %3578 = vmatprep.subr.mxu0 0.0
    %3579 = vmatpush1.msra.mxu0 0.0
    %3580 = vmatprep.subr.mxu0 0.0
    %3581 = vmatpush1.msra.mxu0 0.0
    %3582 = vmatprep.subr.mxu0 0.0
    %3583 = vmatpush1.msra.mxu0 0.0
    %3584 = vmatprep.subr.mxu0 0.0
    %3585 = vmatpush1.msra.mxu0 0.0
    %3586 = vmatprep.subr.mxu0 0.0
    %3587 = vmatpush1.msra.mxu0 0.0
    %3588 = vmatprep.subr.mxu0 0.0
    %3589 = vmatpush1.msra.mxu0 0.0
    %3590 = vmatprep.subr.mxu0 0.0
    %3591 = vmatpush1.msra.mxu0 0.0
    %3592 = vmatprep.subr.mxu0 0.0
    %3593 = vmatpush1.msra.mxu0 0.0
    %3594 = vmatprep.mubr.f32.mxu0 0.0
    %v3595 = vand.u32 %v388, 4294901760
    %v3596 = vsub.f32 %v388, %v3595
    %v3597 = vand.u32 %v3596, 4294901760
    %3598 = vmatmul.mubr.f32.gmra.mrb[0].mxu0 %v3597
    %v3599 = vpop.f32.mrb[0].mxu0
    %v3600 = vadd.f32 %v3494, %v3599
    %v3601 = vpop.f32.mrb[0].mxu0
    %v3602 = vadd.f32 %v3496, %v3601
    %3603 = vmatprep.mubr.f32.mxu0 0.0
    %v3604 = vand.u32 %v391, 4294901760
    %v3605 = vsub.f32 %v391, %v3604
    %v3606 = vand.u32 %v3605, 4294901760
    %3607 = vmatmul.mubr.f32.gmra.mrb[0].mxu0 %v3606
    %v3608 = vpop.f32.mrb[0].mxu0
    %v3609 = vadd.f32 %v3502, %v3608
    %v3610 = vpop.f32.mrb[0].mxu0
    %v3611 = vadd.f32 %v3504, %v3610
    %3612 = vmatprep.mubr.f32.mxu0 0.0
    %v3613 = vand.u32 %v394, 4294901760
    %v3614 = vsub.f32 %v394, %v3613
    %v3615 = vand.u32 %v3614, 4294901760
    %3616 = vmatmul.mubr.f32.gmra.mrb[0].mxu0 %v3615
    %v3617 = vpop.f32.mrb[0].mxu0
    %v3618 = vadd.f32 %v3510, %v3617
    %v3619 = vpop.f32.mrb[0].mxu0
    %v3620 = vadd.f32 %v3512, %v3619
    %3621 = vmatprep.mubr.f32.mxu0 0.0
    %v3622 = vand.u32 %v397, 4294901760
    %v3623 = vsub.f32 %v397, %v3622
    %v3624 = vand.u32 %v3623, 4294901760
    %3625 = vmatmul.mubr.f32.gmra.mrb[0].mxu0 %v3624
    %v3626 = vpop.f32.mrb[0].mxu0
    %v3627 = vadd.f32 %v3518, %v3626
    %v3628 = vpop.f32.mrb[0].mxu0
    %v3629 = vadd.f32 %v3520, %v3628
    %3630 = vdwg.mxu0
    %v3631 = vand.u32 %v311, 4294901760
    %v3632 = vsub.f32 %v311, %v3631
    %v3633 = vand.u32 %v3632, 4294901760
    %3634 = vmatprep.subr.mxu0 %v3633
    %v3635 = vand.u32 %v310, 4294901760
    %v3636 = vsub.f32 %v310, %v3635
    %v3637 = vand.u32 %v3636, 4294901760
    %3638 = vmatpush1.msra.mxu0 %v3637
    %v3639 = vand.u32 %v327, 4294901760
    %v3640 = vsub.f32 %v327, %v3639
    %v3641 = vand.u32 %v3640, 4294901760
    %3642 = vmatprep.subr.mxu0 %v3641
    %v3643 = vand.u32 %v326, 4294901760
    %v3644 = vsub.f32 %v326, %v3643
    %v3645 = vand.u32 %v3644, 4294901760
    %3646 = vmatpush1.msra.mxu0 %v3645
    %v3647 = vand.u32 %v343, 4294901760
    %v3648 = vsub.f32 %v343, %v3647
    %v3649 = vand.u32 %v3648, 4294901760
    %3650 = vmatprep.subr.mxu0 %v3649
    %v3651 = vand.u32 %v342, 4294901760
    %v3652 = vsub.f32 %v342, %v3651
    %v3653 = vand.u32 %v3652, 4294901760
    %3654 = vmatpush1.msra.mxu0 %v3653
    %v3655 = vand.u32 %v359, 4294901760
    %v3656 = vsub.f32 %v359, %v3655
    %v3657 = vand.u32 %v3656, 4294901760
    %3658 = vmatprep.subr.mxu0 %v3657
    %v3659 = vand.u32 %v358, 4294901760
    %v3660 = vsub.f32 %v358, %v3659
    %v3661 = vand.u32 %v3660, 4294901760
    %3662 = vmatpush1.msra.mxu0 %v3661
    %3663 = vmatprep.subr.mxu0 0.0
    %3664 = vmatpush1.msra.mxu0 0.0
    %3665 = vmatprep.subr.mxu0 0.0
    %3666 = vmatpush1.msra.mxu0 0.0
    %3667 = vmatprep.subr.mxu0 0.0
    %3668 = vmatpush1.msra.mxu0 0.0
    %3669 = vmatprep.subr.mxu0 0.0
    %3670 = vmatpush1.msra.mxu0 0.0
    %3671 = vmatprep.subr.mxu0 0.0
    %3672 = vmatpush1.msra.mxu0 0.0
    %3673 = vmatprep.subr.mxu0 0.0
    %3674 = vmatpush1.msra.mxu0 0.0
    %3675 = vmatprep.subr.mxu0 0.0
    %3676 = vmatpush1.msra.mxu0 0.0
    %3677 = vmatprep.subr.mxu0 0.0
    %3678 = vmatpush1.msra.mxu0 0.0
    %3679 = vmatprep.subr.mxu0 0.0
    %3680 = vmatpush1.msra.mxu0 0.0
    %3681 = vmatprep.subr.mxu0 0.0
    %3682 = vmatpush1.msra.mxu0 0.0
    %3683 = vmatprep.subr.mxu0 0.0
    %3684 = vmatpush1.msra.mxu0 0.0
    %3685 = vmatprep.subr.mxu0 0.0
    %3686 = vmatpush1.msra.mxu0 0.0
    %3687 = vmatprep.subr.mxu0 0.0
    %3688 = vmatpush1.msra.mxu0 0.0
    %3689 = vmatprep.subr.mxu0 0.0
    %3690 = vmatpush1.msra.mxu0 0.0
    %3691 = vmatprep.subr.mxu0 0.0
    %3692 = vmatpush1.msra.mxu0 0.0
    %3693 = vmatprep.subr.mxu0 0.0
    %3694 = vmatpush1.msra.mxu0 0.0
    %3695 = vmatprep.subr.mxu0 0.0
    %3696 = vmatpush1.msra.mxu0 0.0
    %3697 = vmatprep.subr.mxu0 0.0
    %3698 = vmatpush1.msra.mxu0 0.0
    %3699 = vmatprep.subr.mxu0 0.0
    %3700 = vmatpush1.msra.mxu0 0.0
    %3701 = vmatprep.subr.mxu0 0.0
    %3702 = vmatpush1.msra.mxu0 0.0
    %3703 = vmatprep.subr.mxu0 0.0
    %3704 = vmatpush1.msra.mxu0 0.0
    %3705 = vmatprep.subr.mxu0 0.0
    %3706 = vmatpush1.msra.mxu0 0.0
    %3707 = vmatprep.subr.mxu0 0.0
    %3708 = vmatpush1.msra.mxu0 0.0
    %3709 = vmatprep.subr.mxu0 0.0
    %3710 = vmatpush1.msra.mxu0 0.0
    %3711 = vmatprep.subr.mxu0 0.0
    %3712 = vmatpush1.msra.mxu0 0.0
    %3713 = vmatprep.subr.mxu0 0.0
    %3714 = vmatpush1.msra.mxu0 0.0
    %3715 = vmatprep.subr.mxu0 0.0
    %3716 = vmatpush1.msra.mxu0 0.0
    %3717 = vmatprep.subr.mxu0 0.0
    %3718 = vmatpush1.msra.mxu0 0.0
    %3719 = vmatprep.mubr.f32.mxu0 0.0
    %v3720 = vand.u32 %v388, 4294901760
    %3721 = vmatmul.mubr.f32.gmra.mrb[0].mxu0 %v3720
    %v3722 = vpop.f32.mrb[0].mxu0
    %v3723 = vadd.f32 %v3600, %v3722
    %v3724 = vpop.f32.mrb[0].mxu0
    %v3725 = vadd.f32 %v3602, %v3724
    %3726 = vmatprep.mubr.f32.mxu0 0.0
    %v3727 = vand.u32 %v391, 4294901760
    %3728 = vmatmul.mubr.f32.gmra.mrb[0].mxu0 %v3727
    %v3729 = vpop.f32.mrb[0].mxu0
    %v3730 = vadd.f32 %v3609, %v3729
    %v3731 = vpop.f32.mrb[0].mxu0
    %v3732 = vadd.f32 %v3611, %v3731
    %3733 = vmatprep.mubr.f32.mxu0 0.0
    %v3734 = vand.u32 %v394, 4294901760
    %3735 = vmatmul.mubr.f32.gmra.mrb[0].mxu0 %v3734
    %v3736 = vpop.f32.mrb[0].mxu0
    %v3737 = vadd.f32 %v3618, %v3736
    %v3738 = vpop.f32.mrb[0].mxu0
    %v3739 = vadd.f32 %v3620, %v3738
    %3740 = vmatprep.mubr.f32.mxu0 0.0
    %v3741 = vand.u32 %v397, 4294901760
    %3742 = vmatmul.mubr.f32.gmra.mrb[0].mxu0 %v3741
    %v3743 = vpop.f32.mrb[0].mxu0
    %v3744 = vadd.f32 %v3627, %v3743
    %v3745 = vpop.f32.mrb[0].mxu0
    %v3746 = vadd.f32 %v3629, %v3745
    %3747 = vdwg.mxu0
    %v3748 = vand.u32 %v311, 4294901760
    %3749 = vmatprep.subr.mxu0 %v3748
    %v3750 = vand.u32 %v310, 4294901760
    %3751 = vmatpush1.msra.mxu0 %v3750
    %v3752 = vand.u32 %v327, 4294901760
    %3753 = vmatprep.subr.mxu0 %v3752
    %v3754 = vand.u32 %v326, 4294901760
    %3755 = vmatpush1.msra.mxu0 %v3754
    %v3756 = vand.u32 %v343, 4294901760
    %3757 = vmatprep.subr.mxu0 %v3756
    %v3758 = vand.u32 %v342, 4294901760
    %3759 = vmatpush1.msra.mxu0 %v3758
    %v3760 = vand.u32 %v359, 4294901760
    %3761 = vmatprep.subr.mxu0 %v3760
    %v3762 = vand.u32 %v358, 4294901760
    %3763 = vmatpush1.msra.mxu0 %v3762
    %3764 = vmatprep.subr.mxu0 0.0
    %3765 = vmatpush1.msra.mxu0 0.0
    %3766 = vmatprep.subr.mxu0 0.0
    %3767 = vmatpush1.msra.mxu0 0.0
    %3768 = vmatprep.subr.mxu0 0.0
    %3769 = vmatpush1.msra.mxu0 0.0
    %3770 = vmatprep.subr.mxu0 0.0
    %3771 = vmatpush1.msra.mxu0 0.0
    %3772 = vmatprep.subr.mxu0 0.0
    %3773 = vmatpush1.msra.mxu0 0.0
    %3774 = vmatprep.subr.mxu0 0.0
    %3775 = vmatpush1.msra.mxu0 0.0
    %3776 = vmatprep.subr.mxu0 0.0
    %3777 = vmatpush1.msra.mxu0 0.0
    %3778 = vmatprep.subr.mxu0 0.0
    %3779 = vmatpush1.msra.mxu0 0.0
    %3780 = vmatprep.subr.mxu0 0.0
    %3781 = vmatpush1.msra.mxu0 0.0
    %3782 = vmatprep.subr.mxu0 0.0
    %3783 = vmatpush1.msra.mxu0 0.0
    %3784 = vmatprep.subr.mxu0 0.0
    %3785 = vmatpush1.msra.mxu0 0.0
    %3786 = vmatprep.subr.mxu0 0.0
    %3787 = vmatpush1.msra.mxu0 0.0
    %3788 = vmatprep.subr.mxu0 0.0
    %3789 = vmatpush1.msra.mxu0 0.0
    %3790 = vmatprep.subr.mxu0 0.0
    %3791 = vmatpush1.msra.mxu0 0.0
    %3792 = vmatprep.subr.mxu0 0.0
    %3793 = vmatpush1.msra.mxu0 0.0
    %3794 = vmatprep.subr.mxu0 0.0
    %3795 = vmatpush1.msra.mxu0 0.0
    %3796 = vmatprep.subr.mxu0 0.0
    %3797 = vmatpush1.msra.mxu0 0.0
    %3798 = vmatprep.subr.mxu0 0.0
    %3799 = vmatpush1.msra.mxu0 0.0
    %3800 = vmatprep.subr.mxu0 0.0
    %3801 = vmatpush1.msra.mxu0 0.0
    %3802 = vmatprep.subr.mxu0 0.0
    %3803 = vmatpush1.msra.mxu0 0.0
    %3804 = vmatprep.subr.mxu0 0.0
    %3805 = vmatpush1.msra.mxu0 0.0
    %3806 = vmatprep.subr.mxu0 0.0
    %3807 = vmatpush1.msra.mxu0 0.0
    %3808 = vmatprep.subr.mxu0 0.0
    %3809 = vmatpush1.msra.mxu0 0.0
    %3810 = vmatprep.subr.mxu0 0.0
    %3811 = vmatpush1.msra.mxu0 0.0
    %3812 = vmatprep.subr.mxu0 0.0
    %3813 = vmatpush1.msra.mxu0 0.0
    %3814 = vmatprep.subr.mxu0 0.0
    %3815 = vmatpush1.msra.mxu0 0.0
    %3816 = vmatprep.subr.mxu0 0.0
    %3817 = vmatpush1.msra.mxu0 0.0
    %3818 = vmatprep.subr.mxu0 0.0
    %3819 = vmatpush1.msra.mxu0 0.0
    %3820 = vmatprep.mubr.f32.mxu0 0.0
    %v3821 = vand.u32 %v388, 4294901760
    %3822 = vmatmul.mubr.f32.gmra.mrb[0].mxu0 %v3821
    %v3823 = vpop.f32.mrb[0].mxu0
    %v3824 = vadd.f32 %v3723, %v3823
    %v3825 = vpop.f32.mrb[0].mxu0
    %v3826 = vadd.f32 %v3725, %v3825
    %3827 = vmatprep.mubr.f32.mxu0 0.0
    %v3828 = vand.u32 %v391, 4294901760
    %3829 = vmatmul.mubr.f32.gmra.mrb[0].mxu0 %v3828
    %v3830 = vpop.f32.mrb[0].mxu0
    %v3831 = vadd.f32 %v3730, %v3830
    %v3832 = vpop.f32.mrb[0].mxu0
    %v3833 = vadd.f32 %v3732, %v3832
    %3834 = vmatprep.mubr.f32.mxu0 0.0
    %v3835 = vand.u32 %v394, 4294901760
    %3836 = vmatmul.mubr.f32.gmra.mrb[0].mxu0 %v3835
    %v3837 = vpop.f32.mrb[0].mxu0
    %v3838 = vadd.f32 %v3737, %v3837
    %v3839 = vpop.f32.mrb[0].mxu0
    %v3840 = vadd.f32 %v3739, %v3839
    %3841 = vmatprep.mubr.f32.mxu0 0.0
    %v3842 = vand.u32 %v397, 4294901760
    %3843 = vmatmul.mubr.f32.gmra.mrb[0].mxu0 %v3842
    %v3844 = vpop.f32.mrb[0].mxu0
    %v3845 = vadd.f32 %v3744, %v3844
    %v3846 = vpop.f32.mrb[0].mxu0
    %v3847 = vadd.f32 %v3746, %v3846
    %3848 = vdwg.mxu0
    %v3849 = vand.u32 %v313, 4294901760
    %3850 = vmatprep.subr.mxu0 %v3849
    %v3851 = vand.u32 %v312, 4294901760
    %3852 = vmatpush1.msra.mxu0 %v3851
    %v3853 = vand.u32 %v329, 4294901760
    %3854 = vmatprep.subr.mxu0 %v3853
    %v3855 = vand.u32 %v328, 4294901760
    %3856 = vmatpush1.msra.mxu0 %v3855
    %v3857 = vand.u32 %v345, 4294901760
    %3858 = vmatprep.subr.mxu0 %v3857
    %v3859 = vand.u32 %v344, 4294901760
    %3860 = vmatpush1.msra.mxu0 %v3859
    %v3861 = vand.u32 %v361, 4294901760
    %3862 = vmatprep.subr.mxu0 %v3861
    %v3863 = vand.u32 %v360, 4294901760
    %3864 = vmatpush1.msra.mxu0 %v3863
    %3865 = vmatprep.subr.mxu0 0.0
    %3866 = vmatpush1.msra.mxu0 0.0
    %3867 = vmatprep.subr.mxu0 0.0
    %3868 = vmatpush1.msra.mxu0 0.0
    %3869 = vmatprep.subr.mxu0 0.0
    %3870 = vmatpush1.msra.mxu0 0.0
    %3871 = vmatprep.subr.mxu0 0.0
    %3872 = vmatpush1.msra.mxu0 0.0
    %3873 = vmatprep.subr.mxu0 0.0
    %3874 = vmatpush1.msra.mxu0 0.0
    %3875 = vmatprep.subr.mxu0 0.0
    %3876 = vmatpush1.msra.mxu0 0.0
    %3877 = vmatprep.subr.mxu0 0.0
    %3878 = vmatpush1.msra.mxu0 0.0
    %3879 = vmatprep.subr.mxu0 0.0
    %3880 = vmatpush1.msra.mxu0 0.0
    %3881 = vmatprep.subr.mxu0 0.0
    %3882 = vmatpush1.msra.mxu0 0.0
    %3883 = vmatprep.subr.mxu0 0.0
    %3884 = vmatpush1.msra.mxu0 0.0
    %3885 = vmatprep.subr.mxu0 0.0
    %3886 = vmatpush1.msra.mxu0 0.0
    %3887 = vmatprep.subr.mxu0 0.0
    %3888 = vmatpush1.msra.mxu0 0.0
    %3889 = vmatprep.subr.mxu0 0.0
    %3890 = vmatpush1.msra.mxu0 0.0
    %3891 = vmatprep.subr.mxu0 0.0
    %3892 = vmatpush1.msra.mxu0 0.0
    %3893 = vmatprep.subr.mxu0 0.0
    %3894 = vmatpush1.msra.mxu0 0.0
    %3895 = vmatprep.subr.mxu0 0.0
    %3896 = vmatpush1.msra.mxu0 0.0
    %3897 = vmatprep.subr.mxu0 0.0
    %3898 = vmatpush1.msra.mxu0 0.0
    %3899 = vmatprep.subr.mxu0 0.0
    %3900 = vmatpush1.msra.mxu0 0.0
    %3901 = vmatprep.subr.mxu0 0.0
    %3902 = vmatpush1.msra.mxu0 0.0
    %3903 = vmatprep.subr.mxu0 0.0
    %3904 = vmatpush1.msra.mxu0 0.0
    %3905 = vmatprep.subr.mxu0 0.0
    %3906 = vmatpush1.msra.mxu0 0.0
    %3907 = vmatprep.subr.mxu0 0.0
    %3908 = vmatpush1.msra.mxu0 0.0
    %3909 = vmatprep.subr.mxu0 0.0
    %3910 = vmatpush1.msra.mxu0 0.0
    %3911 = vmatprep.subr.mxu0 0.0
    %3912 = vmatpush1.msra.mxu0 0.0
    %3913 = vmatprep.subr.mxu0 0.0
    %3914 = vmatpush1.msra.mxu0 0.0
    %3915 = vmatprep.subr.mxu0 0.0
    %3916 = vmatpush1.msra.mxu0 0.0
    %3917 = vmatprep.subr.mxu0 0.0
    %3918 = vmatpush1.msra.mxu0 0.0
    %3919 = vmatprep.subr.mxu0 0.0
    %3920 = vmatpush1.msra.mxu0 0.0
    %3921 = vmatprep.mubr.f32.mxu0 0.0
    %v3922 = vand.u32 %v388, 4294901760
    %v3923 = vsub.f32 %v388, %v3922
    %v3924 = vand.u32 %v3923, 4294901760
    %v3925 = vsub.f32 %v3923, %v3924
    %v3926 = vand.u32 %v3925, 4294901760
    %3927 = vmatmul.mubr.f32.gmra.mrb[0].mxu0 %v3926
    %v3928 = vpop.f32.mrb[0].mxu0
    %v3929 = vadd.f32 %v369, %v3928
    %v3930 = vpop.f32.mrb[0].mxu0
    %v3931 = vadd.f32 %v369, %v3930
    %3932 = vmatprep.mubr.f32.mxu0 0.0
    %v3933 = vand.u32 %v391, 4294901760
    %v3934 = vsub.f32 %v391, %v3933
    %v3935 = vand.u32 %v3934, 4294901760
    %v3936 = vsub.f32 %v3934, %v3935
    %v3937 = vand.u32 %v3936, 4294901760
    %3938 = vmatmul.mubr.f32.gmra.mrb[0].mxu0 %v3937
    %v3939 = vpop.f32.mrb[0].mxu0
    %v3940 = vadd.f32 %v374, %v3939
    %v3941 = vpop.f32.mrb[0].mxu0
    %v3942 = vadd.f32 %v374, %v3941
    %3943 = vmatprep.mubr.f32.mxu0 0.0
    %v3944 = vand.u32 %v394, 4294901760
    %v3945 = vsub.f32 %v394, %v3944
    %v3946 = vand.u32 %v3945, 4294901760
    %v3947 = vsub.f32 %v3945, %v3946
    %v3948 = vand.u32 %v3947, 4294901760
    %3949 = vmatmul.mubr.f32.gmra.mrb[0].mxu0 %v3948
    %v3950 = vpop.f32.mrb[0].mxu0
    %v3951 = vadd.f32 %v379, %v3950
    %v3952 = vpop.f32.mrb[0].mxu0
    %v3953 = vadd.f32 %v379, %v3952
    %3954 = vmatprep.mubr.f32.mxu0 0.0
    %v3955 = vand.u32 %v397, 4294901760
    %v3956 = vsub.f32 %v397, %v3955
    %v3957 = vand.u32 %v3956, 4294901760
    %v3958 = vsub.f32 %v3956, %v3957
    %v3959 = vand.u32 %v3958, 4294901760
    %3960 = vmatmul.mubr.f32.gmra.mrb[0].mxu0 %v3959
    %v3961 = vpop.f32.mrb[0].mxu0
    %v3962 = vadd.f32 %v384, %v3961
    %v3963 = vpop.f32.mrb[0].mxu0
    %v3964 = vadd.f32 %v384, %v3963
    %3965 = vdwg.mxu0
    %v3966 = vand.u32 %v313, 4294901760
    %v3967 = vsub.f32 %v313, %v3966
    %v3968 = vand.u32 %v3967, 4294901760
    %v3969 = vsub.f32 %v3967, %v3968
    %v3970 = vand.u32 %v3969, 4294901760
    %3971 = vmatprep.subr.mxu0 %v3970
    %v3972 = vand.u32 %v312, 4294901760
    %v3973 = vsub.f32 %v312, %v3972
    %v3974 = vand.u32 %v3973, 4294901760
    %v3975 = vsub.f32 %v3973, %v3974
    %v3976 = vand.u32 %v3975, 4294901760
    %3977 = vmatpush1.msra.mxu0 %v3976
    %v3978 = vand.u32 %v329, 4294901760
    %v3979 = vsub.f32 %v329, %v3978
    %v3980 = vand.u32 %v3979, 4294901760
    %v3981 = vsub.f32 %v3979, %v3980
    %v3982 = vand.u32 %v3981, 4294901760
    %3983 = vmatprep.subr.mxu0 %v3982
    %v3984 = vand.u32 %v328, 4294901760
    %v3985 = vsub.f32 %v328, %v3984
    %v3986 = vand.u32 %v3985, 4294901760
    %v3987 = vsub.f32 %v3985, %v3986
    %v3988 = vand.u32 %v3987, 4294901760
    %3989 = vmatpush1.msra.mxu0 %v3988
    %v3990 = vand.u32 %v345, 4294901760
    %v3991 = vsub.f32 %v345, %v3990
    %v3992 = vand.u32 %v3991, 4294901760
    %v3993 = vsub.f32 %v3991, %v3992
    %v3994 = vand.u32 %v3993, 4294901760
    %3995 = vmatprep.subr.mxu0 %v3994
    %v3996 = vand.u32 %v344, 4294901760
    %v3997 = vsub.f32 %v344, %v3996
    %v3998 = vand.u32 %v3997, 4294901760
    %v3999 = vsub.f32 %v3997, %v3998
    %v4000 = vand.u32 %v3999, 4294901760
    %4001 = vmatpush1.msra.mxu0 %v4000
    %v4002 = vand.u32 %v361, 4294901760
    %v4003 = vsub.f32 %v361, %v4002
    %v4004 = vand.u32 %v4003, 4294901760
    %v4005 = vsub.f32 %v4003, %v4004
    %v4006 = vand.u32 %v4005, 4294901760
    %4007 = vmatprep.subr.mxu0 %v4006
    %v4008 = vand.u32 %v360, 4294901760
    %v4009 = vsub.f32 %v360, %v4008
    %v4010 = vand.u32 %v4009, 4294901760
    %v4011 = vsub.f32 %v4009, %v4010
    %v4012 = vand.u32 %v4011, 4294901760
    %4013 = vmatpush1.msra.mxu0 %v4012
    %4014 = vmatprep.subr.mxu0 0.0
    %4015 = vmatpush1.msra.mxu0 0.0
    %4016 = vmatprep.subr.mxu0 0.0
    %4017 = vmatpush1.msra.mxu0 0.0
    %4018 = vmatprep.subr.mxu0 0.0
    %4019 = vmatpush1.msra.mxu0 0.0
    %4020 = vmatprep.subr.mxu0 0.0
    %4021 = vmatpush1.msra.mxu0 0.0
    %4022 = vmatprep.subr.mxu0 0.0
    %4023 = vmatpush1.msra.mxu0 0.0
    %4024 = vmatprep.subr.mxu0 0.0
    %4025 = vmatpush1.msra.mxu0 0.0
    %4026 = vmatprep.subr.mxu0 0.0
    %4027 = vmatpush1.msra.mxu0 0.0
    %4028 = vmatprep.subr.mxu0 0.0
    %4029 = vmatpush1.msra.mxu0 0.0
    %4030 = vmatprep.subr.mxu0 0.0
    %4031 = vmatpush1.msra.mxu0 0.0
    %4032 = vmatprep.subr.mxu0 0.0
    %4033 = vmatpush1.msra.mxu0 0.0
    %4034 = vmatprep.subr.mxu0 0.0
    %4035 = vmatpush1.msra.mxu0 0.0
    %4036 = vmatprep.subr.mxu0 0.0
    %4037 = vmatpush1.msra.mxu0 0.0
    %4038 = vmatprep.subr.mxu0 0.0
    %4039 = vmatpush1.msra.mxu0 0.0
    %4040 = vmatprep.subr.mxu0 0.0
    %4041 = vmatpush1.msra.mxu0 0.0
    %4042 = vmatprep.subr.mxu0 0.0
    %4043 = vmatpush1.msra.mxu0 0.0
    %4044 = vmatprep.subr.mxu0 0.0
    %4045 = vmatpush1.msra.mxu0 0.0
    %4046 = vmatprep.subr.mxu0 0.0
    %4047 = vmatpush1.msra.mxu0 0.0
    %4048 = vmatprep.subr.mxu0 0.0
    %4049 = vmatpush1.msra.mxu0 0.0
    %4050 = vmatprep.subr.mxu0 0.0
    %4051 = vmatpush1.msra.mxu0 0.0
    %4052 = vmatprep.subr.mxu0 0.0
    %4053 = vmatpush1.msra.mxu0 0.0
    %4054 = vmatprep.subr.mxu0 0.0
    %4055 = vmatpush1.msra.mxu0 0.0
    %4056 = vmatprep.subr.mxu0 0.0
    %4057 = vmatpush1.msra.mxu0 0.0
    %4058 = vmatprep.subr.mxu0 0.0
    %4059 = vmatpush1.msra.mxu0 0.0
    %4060 = vmatprep.subr.mxu0 0.0
    %4061 = vmatpush1.msra.mxu0 0.0
    %4062 = vmatprep.subr.mxu0 0.0
    %4063 = vmatpush1.msra.mxu0 0.0
    %4064 = vmatprep.subr.mxu0 0.0
    %4065 = vmatpush1.msra.mxu0 0.0
    %4066 = vmatprep.subr.mxu0 0.0
    %4067 = vmatpush1.msra.mxu0 0.0
    %4068 = vmatprep.subr.mxu0 0.0
    %4069 = vmatpush1.msra.mxu0 0.0
    %4070 = vmatprep.mubr.f32.mxu0 0.0
    %v4071 = vand.u32 %v388, 4294901760
    %4072 = vmatmul.mubr.f32.gmra.mrb[0].mxu0 %v4071
    %v4073 = vpop.f32.mrb[0].mxu0
    %v4074 = vadd.f32 %v3929, %v4073
    %v4075 = vpop.f32.mrb[0].mxu0
    %v4076 = vadd.f32 %v3931, %v4075
    %4077 = vmatprep.mubr.f32.mxu0 0.0
    %v4078 = vand.u32 %v391, 4294901760
    %4079 = vmatmul.mubr.f32.gmra.mrb[0].mxu0 %v4078
    %v4080 = vpop.f32.mrb[0].mxu0
    %v4081 = vadd.f32 %v3940, %v4080
    %v4082 = vpop.f32.mrb[0].mxu0
    %v4083 = vadd.f32 %v3942, %v4082
    %4084 = vmatprep.mubr.f32.mxu0 0.0
    %v4085 = vand.u32 %v394, 4294901760
    %4086 = vmatmul.mubr.f32.gmra.mrb[0].mxu0 %v4085
    %v4087 = vpop.f32.mrb[0].mxu0
    %v4088 = vadd.f32 %v3951, %v4087
    %v4089 = vpop.f32.mrb[0].mxu0
    %v4090 = vadd.f32 %v3953, %v4089
    %4091 = vmatprep.mubr.f32.mxu0 0.0
    %v4092 = vand.u32 %v397, 4294901760
    %4093 = vmatmul.mubr.f32.gmra.mrb[0].mxu0 %v4092
    %v4094 = vpop.f32.mrb[0].mxu0
    %v4095 = vadd.f32 %v3962, %v4094
    %v4096 = vpop.f32.mrb[0].mxu0
    %v4097 = vadd.f32 %v3964, %v4096
    %4098 = vdwg.mxu0
    %v4099 = vand.u32 %v313, 4294901760
    %v4100 = vsub.f32 %v313, %v4099
    %4101 = vmatprep.subr.mxu0 %v4100
    %v4102 = vand.u32 %v312, 4294901760
    %v4103 = vsub.f32 %v312, %v4102
    %4104 = vmatpush1.msra.mxu0 %v4103
    %v4105 = vand.u32 %v329, 4294901760
    %v4106 = vsub.f32 %v329, %v4105
    %4107 = vmatprep.subr.mxu0 %v4106
    %v4108 = vand.u32 %v328, 4294901760
    %v4109 = vsub.f32 %v328, %v4108
    %4110 = vmatpush1.msra.mxu0 %v4109
    %v4111 = vand.u32 %v345, 4294901760
    %v4112 = vsub.f32 %v345, %v4111
    %4113 = vmatprep.subr.mxu0 %v4112
    %v4114 = vand.u32 %v344, 4294901760
    %v4115 = vsub.f32 %v344, %v4114
    %4116 = vmatpush1.msra.mxu0 %v4115
    %v4117 = vand.u32 %v361, 4294901760
    %v4118 = vsub.f32 %v361, %v4117
    %4119 = vmatprep.subr.mxu0 %v4118
    %v4120 = vand.u32 %v360, 4294901760
    %v4121 = vsub.f32 %v360, %v4120
    %4122 = vmatpush1.msra.mxu0 %v4121
    %4123 = vmatprep.subr.mxu0 0.0
    %4124 = vmatpush1.msra.mxu0 0.0
    %4125 = vmatprep.subr.mxu0 0.0
    %4126 = vmatpush1.msra.mxu0 0.0
    %4127 = vmatprep.subr.mxu0 0.0
    %4128 = vmatpush1.msra.mxu0 0.0
    %4129 = vmatprep.subr.mxu0 0.0
    %4130 = vmatpush1.msra.mxu0 0.0
    %4131 = vmatprep.subr.mxu0 0.0
    %4132 = vmatpush1.msra.mxu0 0.0
    %4133 = vmatprep.subr.mxu0 0.0
    %4134 = vmatpush1.msra.mxu0 0.0
    %4135 = vmatprep.subr.mxu0 0.0
    %4136 = vmatpush1.msra.mxu0 0.0
    %4137 = vmatprep.subr.mxu0 0.0
    %4138 = vmatpush1.msra.mxu0 0.0
    %4139 = vmatprep.subr.mxu0 0.0
    %4140 = vmatpush1.msra.mxu0 0.0
    %4141 = vmatprep.subr.mxu0 0.0
    %4142 = vmatpush1.msra.mxu0 0.0
    %4143 = vmatprep.subr.mxu0 0.0
    %4144 = vmatpush1.msra.mxu0 0.0
    %4145 = vmatprep.subr.mxu0 0.0
    %4146 = vmatpush1.msra.mxu0 0.0
    %4147 = vmatprep.subr.mxu0 0.0
    %4148 = vmatpush1.msra.mxu0 0.0
    %4149 = vmatprep.subr.mxu0 0.0
    %4150 = vmatpush1.msra.mxu0 0.0
    %4151 = vmatprep.subr.mxu0 0.0
    %4152 = vmatpush1.msra.mxu0 0.0
    %4153 = vmatprep.subr.mxu0 0.0
    %4154 = vmatpush1.msra.mxu0 0.0
    %4155 = vmatprep.subr.mxu0 0.0
    %4156 = vmatpush1.msra.mxu0 0.0
    %4157 = vmatprep.subr.mxu0 0.0
    %4158 = vmatpush1.msra.mxu0 0.0
    %4159 = vmatprep.subr.mxu0 0.0
    %4160 = vmatpush1.msra.mxu0 0.0
    %4161 = vmatprep.subr.mxu0 0.0
    %4162 = vmatpush1.msra.mxu0 0.0
    %4163 = vmatprep.subr.mxu0 0.0
    %4164 = vmatpush1.msra.mxu0 0.0
    %4165 = vmatprep.subr.mxu0 0.0
    %4166 = vmatpush1.msra.mxu0 0.0
    %4167 = vmatprep.subr.mxu0 0.0
    %4168 = vmatpush1.msra.mxu0 0.0
    %4169 = vmatprep.subr.mxu0 0.0
    %4170 = vmatpush1.msra.mxu0 0.0
    %4171 = vmatprep.subr.mxu0 0.0
    %4172 = vmatpush1.msra.mxu0 0.0
    %4173 = vmatprep.subr.mxu0 0.0
    %4174 = vmatpush1.msra.mxu0 0.0
    %4175 = vmatprep.subr.mxu0 0.0
    %4176 = vmatpush1.msra.mxu0 0.0
    %4177 = vmatprep.subr.mxu0 0.0
    %4178 = vmatpush1.msra.mxu0 0.0
    %4179 = vmatprep.mubr.f32.mxu0 0.0
    %v4180 = vand.u32 %v388, 4294901760
    %v4181 = vsub.f32 %v388, %v4180
    %4182 = vmatmul.mubr.f32.gmra.mrb[0].mxu0 %v4181
    %v4183 = vpop.f32.mrb[0].mxu0
    %v4184 = vadd.f32 %v4074, %v4183
    %v4185 = vpop.f32.mrb[0].mxu0
    %v4186 = vadd.f32 %v4076, %v4185
    %4187 = vmatprep.mubr.f32.mxu0 0.0
    %v4188 = vand.u32 %v391, 4294901760
    %v4189 = vsub.f32 %v391, %v4188
    %4190 = vmatmul.mubr.f32.gmra.mrb[0].mxu0 %v4189
    %v4191 = vpop.f32.mrb[0].mxu0
    %v4192 = vadd.f32 %v4081, %v4191
    %v4193 = vpop.f32.mrb[0].mxu0
    %v4194 = vadd.f32 %v4083, %v4193
    %4195 = vmatprep.mubr.f32.mxu0 0.0
    %v4196 = vand.u32 %v394, 4294901760
    %v4197 = vsub.f32 %v394, %v4196
    %4198 = vmatmul.mubr.f32.gmra.mrb[0].mxu0 %v4197
    %v4199 = vpop.f32.mrb[0].mxu0
    %v4200 = vadd.f32 %v4088, %v4199
    %v4201 = vpop.f32.mrb[0].mxu0
    %v4202 = vadd.f32 %v4090, %v4201
    %4203 = vmatprep.mubr.f32.mxu0 0.0
    %v4204 = vand.u32 %v397, 4294901760
    %v4205 = vsub.f32 %v397, %v4204
    %4206 = vmatmul.mubr.f32.gmra.mrb[0].mxu0 %v4205
    %v4207 = vpop.f32.mrb[0].mxu0
    %v4208 = vadd.f32 %v4095, %v4207
    %v4209 = vpop.f32.mrb[0].mxu0
    %v4210 = vadd.f32 %v4097, %v4209
    %4211 = vdwg.mxu0
    %v4212 = vand.u32 %v313, 4294901760
    %4213 = vmatprep.subr.mxu0 %v4212
    %v4214 = vand.u32 %v312, 4294901760
    %4215 = vmatpush1.msra.mxu0 %v4214
    %v4216 = vand.u32 %v329, 4294901760
    %4217 = vmatprep.subr.mxu0 %v4216
    %v4218 = vand.u32 %v328, 4294901760
    %4219 = vmatpush1.msra.mxu0 %v4218
    %v4220 = vand.u32 %v345, 4294901760
    %4221 = vmatprep.subr.mxu0 %v4220
    %v4222 = vand.u32 %v344, 4294901760
    %4223 = vmatpush1.msra.mxu0 %v4222
    %v4224 = vand.u32 %v361, 4294901760
    %4225 = vmatprep.subr.mxu0 %v4224
    %v4226 = vand.u32 %v360, 4294901760
    %4227 = vmatpush1.msra.mxu0 %v4226
    %4228 = vmatprep.subr.mxu0 0.0
    %4229 = vmatpush1.msra.mxu0 0.0
    %4230 = vmatprep.subr.mxu0 0.0
    %4231 = vmatpush1.msra.mxu0 0.0
    %4232 = vmatprep.subr.mxu0 0.0
    %4233 = vmatpush1.msra.mxu0 0.0
    %4234 = vmatprep.subr.mxu0 0.0
    %4235 = vmatpush1.msra.mxu0 0.0
    %4236 = vmatprep.subr.mxu0 0.0
    %4237 = vmatpush1.msra.mxu0 0.0
    %4238 = vmatprep.subr.mxu0 0.0
    %4239 = vmatpush1.msra.mxu0 0.0
    %4240 = vmatprep.subr.mxu0 0.0
    %4241 = vmatpush1.msra.mxu0 0.0
    %4242 = vmatprep.subr.mxu0 0.0
    %4243 = vmatpush1.msra.mxu0 0.0
    %4244 = vmatprep.subr.mxu0 0.0
    %4245 = vmatpush1.msra.mxu0 0.0
    %4246 = vmatprep.subr.mxu0 0.0
    %4247 = vmatpush1.msra.mxu0 0.0
    %4248 = vmatprep.subr.mxu0 0.0
    %4249 = vmatpush1.msra.mxu0 0.0
    %4250 = vmatprep.subr.mxu0 0.0
    %4251 = vmatpush1.msra.mxu0 0.0
    %4252 = vmatprep.subr.mxu0 0.0
    %4253 = vmatpush1.msra.mxu0 0.0
    %4254 = vmatprep.subr.mxu0 0.0
    %4255 = vmatpush1.msra.mxu0 0.0
    %4256 = vmatprep.subr.mxu0 0.0
    %4257 = vmatpush1.msra.mxu0 0.0
    %4258 = vmatprep.subr.mxu0 0.0
    %4259 = vmatpush1.msra.mxu0 0.0
    %4260 = vmatprep.subr.mxu0 0.0
    %4261 = vmatpush1.msra.mxu0 0.0
    %4262 = vmatprep.subr.mxu0 0.0
    %4263 = vmatpush1.msra.mxu0 0.0
    %4264 = vmatprep.subr.mxu0 0.0
    %4265 = vmatpush1.msra.mxu0 0.0
    %4266 = vmatprep.subr.mxu0 0.0
    %4267 = vmatpush1.msra.mxu0 0.0
    %4268 = vmatprep.subr.mxu0 0.0
    %4269 = vmatpush1.msra.mxu0 0.0
    %4270 = vmatprep.subr.mxu0 0.0
    %4271 = vmatpush1.msra.mxu0 0.0
    %4272 = vmatprep.subr.mxu0 0.0
    %4273 = vmatpush1.msra.mxu0 0.0
    %4274 = vmatprep.subr.mxu0 0.0
    %4275 = vmatpush1.msra.mxu0 0.0
    %4276 = vmatprep.subr.mxu0 0.0
    %4277 = vmatpush1.msra.mxu0 0.0
    %4278 = vmatprep.subr.mxu0 0.0
    %4279 = vmatpush1.msra.mxu0 0.0
    %4280 = vmatprep.subr.mxu0 0.0
    %4281 = vmatpush1.msra.mxu0 0.0
    %4282 = vmatprep.subr.mxu0 0.0
    %4283 = vmatpush1.msra.mxu0 0.0
    %4284 = vmatprep.mubr.f32.mxu0 0.0
    %v4285 = vand.u32 %v388, 4294901760
    %v4286 = vsub.f32 %v388, %v4285
    %v4287 = vand.u32 %v4286, 4294901760
    %4288 = vmatmul.mubr.f32.gmra.mrb[0].mxu0 %v4287
    %v4289 = vpop.f32.mrb[0].mxu0
    %v4290 = vadd.f32 %v4184, %v4289
    %v4291 = vpop.f32.mrb[0].mxu0
    %v4292 = vadd.f32 %v4186, %v4291
    %4293 = vmatprep.mubr.f32.mxu0 0.0
    %v4294 = vand.u32 %v391, 4294901760
    %v4295 = vsub.f32 %v391, %v4294
    %v4296 = vand.u32 %v4295, 4294901760
    %4297 = vmatmul.mubr.f32.gmra.mrb[0].mxu0 %v4296
    %v4298 = vpop.f32.mrb[0].mxu0
    %v4299 = vadd.f32 %v4192, %v4298
    %v4300 = vpop.f32.mrb[0].mxu0
    %v4301 = vadd.f32 %v4194, %v4300
    %4302 = vmatprep.mubr.f32.mxu0 0.0
    %v4303 = vand.u32 %v394, 4294901760
    %v4304 = vsub.f32 %v394, %v4303
    %v4305 = vand.u32 %v4304, 4294901760
    %4306 = vmatmul.mubr.f32.gmra.mrb[0].mxu0 %v4305
    %v4307 = vpop.f32.mrb[0].mxu0
    %v4308 = vadd.f32 %v4200, %v4307
    %v4309 = vpop.f32.mrb[0].mxu0
    %v4310 = vadd.f32 %v4202, %v4309
    %4311 = vmatprep.mubr.f32.mxu0 0.0
    %v4312 = vand.u32 %v397, 4294901760
    %v4313 = vsub.f32 %v397, %v4312
    %v4314 = vand.u32 %v4313, 4294901760
    %4315 = vmatmul.mubr.f32.gmra.mrb[0].mxu0 %v4314
    %v4316 = vpop.f32.mrb[0].mxu0
    %v4317 = vadd.f32 %v4208, %v4316
    %v4318 = vpop.f32.mrb[0].mxu0
    %v4319 = vadd.f32 %v4210, %v4318
    %4320 = vdwg.mxu0
    %v4321 = vand.u32 %v313, 4294901760
    %v4322 = vsub.f32 %v313, %v4321
    %v4323 = vand.u32 %v4322, 4294901760
    %4324 = vmatprep.subr.mxu0 %v4323
    %v4325 = vand.u32 %v312, 4294901760
    %v4326 = vsub.f32 %v312, %v4325
    %v4327 = vand.u32 %v4326, 4294901760
    %4328 = vmatpush1.msra.mxu0 %v4327
    %v4329 = vand.u32 %v329, 4294901760
    %v4330 = vsub.f32 %v329, %v4329
    %v4331 = vand.u32 %v4330, 4294901760
    %4332 = vmatprep.subr.mxu0 %v4331
    %v4333 = vand.u32 %v328, 4294901760
    %v4334 = vsub.f32 %v328, %v4333
    %v4335 = vand.u32 %v4334, 4294901760
    %4336 = vmatpush1.msra.mxu0 %v4335
    %v4337 = vand.u32 %v345, 4294901760
    %v4338 = vsub.f32 %v345, %v4337
    %v4339 = vand.u32 %v4338, 4294901760
    %4340 = vmatprep.subr.mxu0 %v4339
    %v4341 = vand.u32 %v344, 4294901760
    %v4342 = vsub.f32 %v344, %v4341
    %v4343 = vand.u32 %v4342, 4294901760
    %4344 = vmatpush1.msra.mxu0 %v4343
    %v4345 = vand.u32 %v361, 4294901760
    %v4346 = vsub.f32 %v361, %v4345
    %v4347 = vand.u32 %v4346, 4294901760
    %4348 = vmatprep.subr.mxu0 %v4347
    %v4349 = vand.u32 %v360, 4294901760
    %v4350 = vsub.f32 %v360, %v4349
    %v4351 = vand.u32 %v4350, 4294901760
    %4352 = vmatpush1.msra.mxu0 %v4351
    %4353 = vmatprep.subr.mxu0 0.0
    %4354 = vmatpush1.msra.mxu0 0.0
    %4355 = vmatprep.subr.mxu0 0.0
    %4356 = vmatpush1.msra.mxu0 0.0
    %4357 = vmatprep.subr.mxu0 0.0
    %4358 = vmatpush1.msra.mxu0 0.0
    %4359 = vmatprep.subr.mxu0 0.0
    %4360 = vmatpush1.msra.mxu0 0.0
    %4361 = vmatprep.subr.mxu0 0.0
    %4362 = vmatpush1.msra.mxu0 0.0
    %4363 = vmatprep.subr.mxu0 0.0
    %4364 = vmatpush1.msra.mxu0 0.0
    %4365 = vmatprep.subr.mxu0 0.0
    %4366 = vmatpush1.msra.mxu0 0.0
    %4367 = vmatprep.subr.mxu0 0.0
    %4368 = vmatpush1.msra.mxu0 0.0
    %4369 = vmatprep.subr.mxu0 0.0
    %4370 = vmatpush1.msra.mxu0 0.0
    %4371 = vmatprep.subr.mxu0 0.0
    %4372 = vmatpush1.msra.mxu0 0.0
    %4373 = vmatprep.subr.mxu0 0.0
    %4374 = vmatpush1.msra.mxu0 0.0
    %4375 = vmatprep.subr.mxu0 0.0
    %4376 = vmatpush1.msra.mxu0 0.0
    %4377 = vmatprep.subr.mxu0 0.0
    %4378 = vmatpush1.msra.mxu0 0.0
    %4379 = vmatprep.subr.mxu0 0.0
    %4380 = vmatpush1.msra.mxu0 0.0
    %4381 = vmatprep.subr.mxu0 0.0
    %4382 = vmatpush1.msra.mxu0 0.0
    %4383 = vmatprep.subr.mxu0 0.0
    %4384 = vmatpush1.msra.mxu0 0.0
    %4385 = vmatprep.subr.mxu0 0.0
    %4386 = vmatpush1.msra.mxu0 0.0
    %4387 = vmatprep.subr.mxu0 0.0
    %4388 = vmatpush1.msra.mxu0 0.0
    %4389 = vmatprep.subr.mxu0 0.0
    %4390 = vmatpush1.msra.mxu0 0.0
    %4391 = vmatprep.subr.mxu0 0.0
    %4392 = vmatpush1.msra.mxu0 0.0
    %4393 = vmatprep.subr.mxu0 0.0
    %4394 = vmatpush1.msra.mxu0 0.0
    %4395 = vmatprep.subr.mxu0 0.0
    %4396 = vmatpush1.msra.mxu0 0.0
    %4397 = vmatprep.subr.mxu0 0.0
    %4398 = vmatpush1.msra.mxu0 0.0
    %4399 = vmatprep.subr.mxu0 0.0
    %4400 = vmatpush1.msra.mxu0 0.0
    %4401 = vmatprep.subr.mxu0 0.0
    %4402 = vmatpush1.msra.mxu0 0.0
    %4403 = vmatprep.subr.mxu0 0.0
    %4404 = vmatpush1.msra.mxu0 0.0
    %4405 = vmatprep.subr.mxu0 0.0
    %4406 = vmatpush1.msra.mxu0 0.0
    %4407 = vmatprep.subr.mxu0 0.0
    %4408 = vmatpush1.msra.mxu0 0.0
    %4409 = vmatprep.mubr.f32.mxu0 0.0
    %v4410 = vand.u32 %v388, 4294901760
    %4411 = vmatmul.mubr.f32.gmra.mrb[0].mxu0 %v4410
    %v4412 = vpop.f32.mrb[0].mxu0
    %v4413 = vadd.f32 %v4290, %v4412
    %v4414 = vpop.f32.mrb[0].mxu0
    %v4415 = vadd.f32 %v4292, %v4414
    %4416 = vmatprep.mubr.f32.mxu0 0.0
    %v4417 = vand.u32 %v391, 4294901760
    %4418 = vmatmul.mubr.f32.gmra.mrb[0].mxu0 %v4417
    %v4419 = vpop.f32.mrb[0].mxu0
    %v4420 = vadd.f32 %v4299, %v4419
    %v4421 = vpop.f32.mrb[0].mxu0
    %v4422 = vadd.f32 %v4301, %v4421
    %4423 = vmatprep.mubr.f32.mxu0 0.0
    %v4424 = vand.u32 %v394, 4294901760
    %4425 = vmatmul.mubr.f32.gmra.mrb[0].mxu0 %v4424
    %v4426 = vpop.f32.mrb[0].mxu0
    %v4427 = vadd.f32 %v4308, %v4426
    %v4428 = vpop.f32.mrb[0].mxu0
    %v4429 = vadd.f32 %v4310, %v4428
    %4430 = vmatprep.mubr.f32.mxu0 0.0
    %v4431 = vand.u32 %v397, 4294901760
    %4432 = vmatmul.mubr.f32.gmra.mrb[0].mxu0 %v4431
    %v4433 = vpop.f32.mrb[0].mxu0
    %v4434 = vadd.f32 %v4317, %v4433
    %v4435 = vpop.f32.mrb[0].mxu0
    %v4436 = vadd.f32 %v4319, %v4435
    %4437 = vdwg.mxu0
    %v4438 = vand.u32 %v313, 4294901760
    %4439 = vmatprep.subr.mxu0 %v4438
    %v4440 = vand.u32 %v312, 4294901760
    %4441 = vmatpush1.msra.mxu0 %v4440
    %v4442 = vand.u32 %v329, 4294901760
    %4443 = vmatprep.subr.mxu0 %v4442
    %v4444 = vand.u32 %v328, 4294901760
    %4445 = vmatpush1.msra.mxu0 %v4444
    %v4446 = vand.u32 %v345, 4294901760
    %4447 = vmatprep.subr.mxu0 %v4446
    %v4448 = vand.u32 %v344, 4294901760
    %4449 = vmatpush1.msra.mxu0 %v4448
    %v4450 = vand.u32 %v361, 4294901760
    %4451 = vmatprep.subr.mxu0 %v4450
    %v4452 = vand.u32 %v360, 4294901760
    %4453 = vmatpush1.msra.mxu0 %v4452
    %4454 = vmatprep.subr.mxu0 0.0
    %4455 = vmatpush1.msra.mxu0 0.0
    %4456 = vmatprep.subr.mxu0 0.0
    %4457 = vmatpush1.msra.mxu0 0.0
    %4458 = vmatprep.subr.mxu0 0.0
    %4459 = vmatpush1.msra.mxu0 0.0
    %4460 = vmatprep.subr.mxu0 0.0
    %4461 = vmatpush1.msra.mxu0 0.0
    %4462 = vmatprep.subr.mxu0 0.0
    %4463 = vmatpush1.msra.mxu0 0.0
    %4464 = vmatprep.subr.mxu0 0.0
    %4465 = vmatpush1.msra.mxu0 0.0
    %4466 = vmatprep.subr.mxu0 0.0
    %4467 = vmatpush1.msra.mxu0 0.0
    %4468 = vmatprep.subr.mxu0 0.0
    %4469 = vmatpush1.msra.mxu0 0.0
    %4470 = vmatprep.subr.mxu0 0.0
    %4471 = vmatpush1.msra.mxu0 0.0
    %4472 = vmatprep.subr.mxu0 0.0
    %4473 = vmatpush1.msra.mxu0 0.0
    %4474 = vmatprep.subr.mxu0 0.0
    %4475 = vmatpush1.msra.mxu0 0.0
    %4476 = vmatprep.subr.mxu0 0.0
    %4477 = vmatpush1.msra.mxu0 0.0
    %4478 = vmatprep.subr.mxu0 0.0
    %4479 = vmatpush1.msra.mxu0 0.0
    %4480 = vmatprep.subr.mxu0 0.0
    %4481 = vmatpush1.msra.mxu0 0.0
    %4482 = vmatprep.subr.mxu0 0.0
    %4483 = vmatpush1.msra.mxu0 0.0
    %4484 = vmatprep.subr.mxu0 0.0
    %4485 = vmatpush1.msra.mxu0 0.0
    %4486 = vmatprep.subr.mxu0 0.0
    %4487 = vmatpush1.msra.mxu0 0.0
    %4488 = vmatprep.subr.mxu0 0.0
    %4489 = vmatpush1.msra.mxu0 0.0
    %4490 = vmatprep.subr.mxu0 0.0
    %4491 = vmatpush1.msra.mxu0 0.0
    %4492 = vmatprep.subr.mxu0 0.0
    %4493 = vmatpush1.msra.mxu0 0.0
    %4494 = vmatprep.subr.mxu0 0.0
    %4495 = vmatpush1.msra.mxu0 0.0
    %4496 = vmatprep.subr.mxu0 0.0
    %4497 = vmatpush1.msra.mxu0 0.0
    %4498 = vmatprep.subr.mxu0 0.0
    %4499 = vmatpush1.msra.mxu0 0.0
    %4500 = vmatprep.subr.mxu0 0.0
    %4501 = vmatpush1.msra.mxu0 0.0
    %4502 = vmatprep.subr.mxu0 0.0
    %4503 = vmatpush1.msra.mxu0 0.0
    %4504 = vmatprep.subr.mxu0 0.0
    %4505 = vmatpush1.msra.mxu0 0.0
    %4506 = vmatprep.subr.mxu0 0.0
    %4507 = vmatpush1.msra.mxu0 0.0
    %4508 = vmatprep.subr.mxu0 0.0
    %4509 = vmatpush1.msra.mxu0 0.0
    %4510 = vmatprep.mubr.f32.mxu0 0.0
    %v4511 = vand.u32 %v388, 4294901760
    %4512 = vmatmul.mubr.f32.gmra.mrb[0].mxu0 %v4511
    %v4513 = vpop.f32.mrb[0].mxu0
    %v4514 = vadd.f32 %v4413, %v4513
    %v4515 = vpop.f32.mrb[0].mxu0
    %v4516 = vadd.f32 %v4415, %v4515
    %4517 = vmatprep.mubr.f32.mxu0 0.0
    %v4518 = vand.u32 %v391, 4294901760
    %4519 = vmatmul.mubr.f32.gmra.mrb[0].mxu0 %v4518
    %v4520 = vpop.f32.mrb[0].mxu0
    %v4521 = vadd.f32 %v4420, %v4520
    %v4522 = vpop.f32.mrb[0].mxu0
    %v4523 = vadd.f32 %v4422, %v4522
    %4524 = vmatprep.mubr.f32.mxu0 0.0
    %v4525 = vand.u32 %v394, 4294901760
    %4526 = vmatmul.mubr.f32.gmra.mrb[0].mxu0 %v4525
    %v4527 = vpop.f32.mrb[0].mxu0
    %v4528 = vadd.f32 %v4427, %v4527
    %v4529 = vpop.f32.mrb[0].mxu0
    %v4530 = vadd.f32 %v4429, %v4529
    %4531 = vmatprep.mubr.f32.mxu0 0.0
    %v4532 = vand.u32 %v397, 4294901760
    %4533 = vmatmul.mubr.f32.gmra.mrb[0].mxu0 %v4532
    %v4534 = vpop.f32.mrb[0].mxu0
    %v4535 = vadd.f32 %v4434, %v4534
    %v4536 = vpop.f32.mrb[0].mxu0
    %v4537 = vadd.f32 %v4436, %v4536
    %4538 = vdwg.mxu0
    %v4539 = vand.u32 %v315, 4294901760
    %4540 = vmatprep.subr.mxu0 %v4539
    %v4541 = vand.u32 %v314, 4294901760
    %4542 = vmatpush1.msra.mxu0 %v4541
    %v4543 = vand.u32 %v331, 4294901760
    %4544 = vmatprep.subr.mxu0 %v4543
    %v4545 = vand.u32 %v330, 4294901760
    %4546 = vmatpush1.msra.mxu0 %v4545
    %v4547 = vand.u32 %v347, 4294901760
    %4548 = vmatprep.subr.mxu0 %v4547
    %v4549 = vand.u32 %v346, 4294901760
    %4550 = vmatpush1.msra.mxu0 %v4549
    %v4551 = vand.u32 %v363, 4294901760
    %4552 = vmatprep.subr.mxu0 %v4551
    %v4553 = vand.u32 %v362, 4294901760
    %4554 = vmatpush1.msra.mxu0 %v4553
    %4555 = vmatprep.subr.mxu0 0.0
    %4556 = vmatpush1.msra.mxu0 0.0
    %4557 = vmatprep.subr.mxu0 0.0
    %4558 = vmatpush1.msra.mxu0 0.0
    %4559 = vmatprep.subr.mxu0 0.0
    %4560 = vmatpush1.msra.mxu0 0.0
    %4561 = vmatprep.subr.mxu0 0.0
    %4562 = vmatpush1.msra.mxu0 0.0
    %4563 = vmatprep.subr.mxu0 0.0
    %4564 = vmatpush1.msra.mxu0 0.0
    %4565 = vmatprep.subr.mxu0 0.0
    %4566 = vmatpush1.msra.mxu0 0.0
    %4567 = vmatprep.subr.mxu0 0.0
    %4568 = vmatpush1.msra.mxu0 0.0
    %4569 = vmatprep.subr.mxu0 0.0
    %4570 = vmatpush1.msra.mxu0 0.0
    %4571 = vmatprep.subr.mxu0 0.0
    %4572 = vmatpush1.msra.mxu0 0.0
    %4573 = vmatprep.subr.mxu0 0.0
    %4574 = vmatpush1.msra.mxu0 0.0
    %4575 = vmatprep.subr.mxu0 0.0
    %4576 = vmatpush1.msra.mxu0 0.0
    %4577 = vmatprep.subr.mxu0 0.0
    %4578 = vmatpush1.msra.mxu0 0.0
    %4579 = vmatprep.subr.mxu0 0.0
    %4580 = vmatpush1.msra.mxu0 0.0
    %4581 = vmatprep.subr.mxu0 0.0
    %4582 = vmatpush1.msra.mxu0 0.0
    %4583 = vmatprep.subr.mxu0 0.0
    %4584 = vmatpush1.msra.mxu0 0.0
    %4585 = vmatprep.subr.mxu0 0.0
    %4586 = vmatpush1.msra.mxu0 0.0
    %4587 = vmatprep.subr.mxu0 0.0
    %4588 = vmatpush1.msra.mxu0 0.0
    %4589 = vmatprep.subr.mxu0 0.0
    %4590 = vmatpush1.msra.mxu0 0.0
    %4591 = vmatprep.subr.mxu0 0.0
    %4592 = vmatpush1.msra.mxu0 0.0
    %4593 = vmatprep.subr.mxu0 0.0
    %4594 = vmatpush1.msra.mxu0 0.0
    %4595 = vmatprep.subr.mxu0 0.0
    %4596 = vmatpush1.msra.mxu0 0.0
    %4597 = vmatprep.subr.mxu0 0.0
    %4598 = vmatpush1.msra.mxu0 0.0
    %4599 = vmatprep.subr.mxu0 0.0
    %4600 = vmatpush1.msra.mxu0 0.0
    %4601 = vmatprep.subr.mxu0 0.0
    %4602 = vmatpush1.msra.mxu0 0.0
    %4603 = vmatprep.subr.mxu0 0.0
    %4604 = vmatpush1.msra.mxu0 0.0
    %4605 = vmatprep.subr.mxu0 0.0
    %4606 = vmatpush1.msra.mxu0 0.0
    %4607 = vmatprep.subr.mxu0 0.0
    %4608 = vmatpush1.msra.mxu0 0.0
    %4609 = vmatprep.subr.mxu0 0.0
    %4610 = vmatpush1.msra.mxu0 0.0
    %4611 = vmatprep.mubr.f32.mxu0 0.0
    %v4612 = vand.u32 %v388, 4294901760
    %v4613 = vsub.f32 %v388, %v4612
    %v4614 = vand.u32 %v4613, 4294901760
    %v4615 = vsub.f32 %v4613, %v4614
    %v4616 = vand.u32 %v4615, 4294901760
    %4617 = vmatmul.mubr.f32.gmra.mrb[0].mxu0 %v4616
    %v4618 = vpop.f32.mrb[0].mxu0
    %v4619 = vadd.f32 %v369, %v4618
    %v4620 = vpop.f32.mrb[0].mxu0
    %v4621 = vadd.f32 %v369, %v4620
    %4622 = vmatprep.mubr.f32.mxu0 0.0
    %v4623 = vand.u32 %v391, 4294901760
    %v4624 = vsub.f32 %v391, %v4623
    %v4625 = vand.u32 %v4624, 4294901760
    %v4626 = vsub.f32 %v4624, %v4625
    %v4627 = vand.u32 %v4626, 4294901760
    %4628 = vmatmul.mubr.f32.gmra.mrb[0].mxu0 %v4627
    %v4629 = vpop.f32.mrb[0].mxu0
    %v4630 = vadd.f32 %v374, %v4629
    %v4631 = vpop.f32.mrb[0].mxu0
    %v4632 = vadd.f32 %v374, %v4631
    %4633 = vmatprep.mubr.f32.mxu0 0.0
    %v4634 = vand.u32 %v394, 4294901760
    %v4635 = vsub.f32 %v394, %v4634
    %v4636 = vand.u32 %v4635, 4294901760
    %v4637 = vsub.f32 %v4635, %v4636
    %v4638 = vand.u32 %v4637, 4294901760
    %4639 = vmatmul.mubr.f32.gmra.mrb[0].mxu0 %v4638
    %v4640 = vpop.f32.mrb[0].mxu0
    %v4641 = vadd.f32 %v379, %v4640
    %v4642 = vpop.f32.mrb[0].mxu0
    %v4643 = vadd.f32 %v379, %v4642
    %4644 = vmatprep.mubr.f32.mxu0 0.0
    %v4645 = vand.u32 %v397, 4294901760
    %v4646 = vsub.f32 %v397, %v4645
    %v4647 = vand.u32 %v4646, 4294901760
    %v4648 = vsub.f32 %v4646, %v4647
    %v4649 = vand.u32 %v4648, 4294901760
    %4650 = vmatmul.mubr.f32.gmra.mrb[0].mxu0 %v4649
    %v4651 = vpop.f32.mrb[0].mxu0
    %v4652 = vadd.f32 %v384, %v4651
    %v4653 = vpop.f32.mrb[0].mxu0
    %v4654 = vadd.f32 %v384, %v4653
    %4655 = vdwg.mxu0
    %v4656 = vand.u32 %v315, 4294901760
    %v4657 = vsub.f32 %v315, %v4656
    %v4658 = vand.u32 %v4657, 4294901760
    %v4659 = vsub.f32 %v4657, %v4658
    %v4660 = vand.u32 %v4659, 4294901760
    %4661 = vmatprep.subr.mxu0 %v4660
    %v4662 = vand.u32 %v314, 4294901760
    %v4663 = vsub.f32 %v314, %v4662
    %v4664 = vand.u32 %v4663, 4294901760
    %v4665 = vsub.f32 %v4663, %v4664
    %v4666 = vand.u32 %v4665, 4294901760
    %4667 = vmatpush1.msra.mxu0 %v4666
    %v4668 = vand.u32 %v331, 4294901760
    %v4669 = vsub.f32 %v331, %v4668
    %v4670 = vand.u32 %v4669, 4294901760
    %v4671 = vsub.f32 %v4669, %v4670
    %v4672 = vand.u32 %v4671, 4294901760
    %4673 = vmatprep.subr.mxu0 %v4672
    %v4674 = vand.u32 %v330, 4294901760
    %v4675 = vsub.f32 %v330, %v4674
    %v4676 = vand.u32 %v4675, 4294901760
    %v4677 = vsub.f32 %v4675, %v4676
    %v4678 = vand.u32 %v4677, 4294901760
    %4679 = vmatpush1.msra.mxu0 %v4678
    %v4680 = vand.u32 %v347, 4294901760
    %v4681 = vsub.f32 %v347, %v4680
    %v4682 = vand.u32 %v4681, 4294901760
    %v4683 = vsub.f32 %v4681, %v4682
    %v4684 = vand.u32 %v4683, 4294901760
    %4685 = vmatprep.subr.mxu0 %v4684
    %v4686 = vand.u32 %v346, 4294901760
    %v4687 = vsub.f32 %v346, %v4686
    %v4688 = vand.u32 %v4687, 4294901760
    %v4689 = vsub.f32 %v4687, %v4688
    %v4690 = vand.u32 %v4689, 4294901760
    %4691 = vmatpush1.msra.mxu0 %v4690
    %v4692 = vand.u32 %v363, 4294901760
    %v4693 = vsub.f32 %v363, %v4692
    %v4694 = vand.u32 %v4693, 4294901760
    %v4695 = vsub.f32 %v4693, %v4694
    %v4696 = vand.u32 %v4695, 4294901760
    %4697 = vmatprep.subr.mxu0 %v4696
    %v4698 = vand.u32 %v362, 4294901760
    %v4699 = vsub.f32 %v362, %v4698
    %v4700 = vand.u32 %v4699, 4294901760
    %v4701 = vsub.f32 %v4699, %v4700
    %v4702 = vand.u32 %v4701, 4294901760
    %4703 = vmatpush1.msra.mxu0 %v4702
    %4704 = vmatprep.subr.mxu0 0.0
    %4705 = vmatpush1.msra.mxu0 0.0
    %4706 = vmatprep.subr.mxu0 0.0
    %4707 = vmatpush1.msra.mxu0 0.0
    %4708 = vmatprep.subr.mxu0 0.0
    %4709 = vmatpush1.msra.mxu0 0.0
    %4710 = vmatprep.subr.mxu0 0.0
    %4711 = vmatpush1.msra.mxu0 0.0
    %4712 = vmatprep.subr.mxu0 0.0
    %4713 = vmatpush1.msra.mxu0 0.0
    %4714 = vmatprep.subr.mxu0 0.0
    %4715 = vmatpush1.msra.mxu0 0.0
    %4716 = vmatprep.subr.mxu0 0.0
    %4717 = vmatpush1.msra.mxu0 0.0
    %4718 = vmatprep.subr.mxu0 0.0
    %4719 = vmatpush1.msra.mxu0 0.0
    %4720 = vmatprep.subr.mxu0 0.0
    %4721 = vmatpush1.msra.mxu0 0.0
    %4722 = vmatprep.subr.mxu0 0.0
    %4723 = vmatpush1.msra.mxu0 0.0
    %4724 = vmatprep.subr.mxu0 0.0
    %4725 = vmatpush1.msra.mxu0 0.0
    %4726 = vmatprep.subr.mxu0 0.0
    %4727 = vmatpush1.msra.mxu0 0.0
    %4728 = vmatprep.subr.mxu0 0.0
    %4729 = vmatpush1.msra.mxu0 0.0
    %4730 = vmatprep.subr.mxu0 0.0
    %4731 = vmatpush1.msra.mxu0 0.0
    %4732 = vmatprep.subr.mxu0 0.0
    %4733 = vmatpush1.msra.mxu0 0.0
    %4734 = vmatprep.subr.mxu0 0.0
    %4735 = vmatpush1.msra.mxu0 0.0
    %4736 = vmatprep.subr.mxu0 0.0
    %4737 = vmatpush1.msra.mxu0 0.0
    %4738 = vmatprep.subr.mxu0 0.0
    %4739 = vmatpush1.msra.mxu0 0.0
    %4740 = vmatprep.subr.mxu0 0.0
    %4741 = vmatpush1.msra.mxu0 0.0
    %4742 = vmatprep.subr.mxu0 0.0
    %4743 = vmatpush1.msra.mxu0 0.0
    %4744 = vmatprep.subr.mxu0 0.0
    %4745 = vmatpush1.msra.mxu0 0.0
    %4746 = vmatprep.subr.mxu0 0.0
    %4747 = vmatpush1.msra.mxu0 0.0
    %4748 = vmatprep.subr.mxu0 0.0
    %4749 = vmatpush1.msra.mxu0 0.0
    %4750 = vmatprep.subr.mxu0 0.0
    %4751 = vmatpush1.msra.mxu0 0.0
    %4752 = vmatprep.subr.mxu0 0.0
    %4753 = vmatpush1.msra.mxu0 0.0
    %4754 = vmatprep.subr.mxu0 0.0
    %4755 = vmatpush1.msra.mxu0 0.0
    %4756 = vmatprep.subr.mxu0 0.0
    %4757 = vmatpush1.msra.mxu0 0.0
    %4758 = vmatprep.subr.mxu0 0.0
    %4759 = vmatpush1.msra.mxu0 0.0
    %4760 = vmatprep.mubr.f32.mxu0 0.0
    %v4761 = vand.u32 %v388, 4294901760
    %4762 = vmatmul.mubr.f32.gmra.mrb[0].mxu0 %v4761
    %v4763 = vpop.f32.mrb[0].mxu0
    %v4764 = vadd.f32 %v4619, %v4763
    %v4765 = vpop.f32.mrb[0].mxu0
    %v4766 = vadd.f32 %v4621, %v4765
    %4767 = vmatprep.mubr.f32.mxu0 0.0
    %v4768 = vand.u32 %v391, 4294901760
    %4769 = vmatmul.mubr.f32.gmra.mrb[0].mxu0 %v4768
    %v4770 = vpop.f32.mrb[0].mxu0
    %v4771 = vadd.f32 %v4630, %v4770
    %v4772 = vpop.f32.mrb[0].mxu0
    %v4773 = vadd.f32 %v4632, %v4772
    %4774 = vmatprep.mubr.f32.mxu0 0.0
    %v4775 = vand.u32 %v394, 4294901760
    %4776 = vmatmul.mubr.f32.gmra.mrb[0].mxu0 %v4775
    %v4777 = vpop.f32.mrb[0].mxu0
    %v4778 = vadd.f32 %v4641, %v4777
    %v4779 = vpop.f32.mrb[0].mxu0
    %v4780 = vadd.f32 %v4643, %v4779
    %4781 = vmatprep.mubr.f32.mxu0 0.0
    %v4782 = vand.u32 %v397, 4294901760
    %4783 = vmatmul.mubr.f32.gmra.mrb[0].mxu0 %v4782
    %v4784 = vpop.f32.mrb[0].mxu0
    %v4785 = vadd.f32 %v4652, %v4784
    %v4786 = vpop.f32.mrb[0].mxu0
    %v4787 = vadd.f32 %v4654, %v4786
    %4788 = vdwg.mxu0
    %v4789 = vand.u32 %v315, 4294901760
    %v4790 = vsub.f32 %v315, %v4789
    %4791 = vmatprep.subr.mxu0 %v4790
    %v4792 = vand.u32 %v314, 4294901760
    %v4793 = vsub.f32 %v314, %v4792
    %4794 = vmatpush1.msra.mxu0 %v4793
    %v4795 = vand.u32 %v331, 4294901760
    %v4796 = vsub.f32 %v331, %v4795
    %4797 = vmatprep.subr.mxu0 %v4796
    %v4798 = vand.u32 %v330, 4294901760
    %v4799 = vsub.f32 %v330, %v4798
    %4800 = vmatpush1.msra.mxu0 %v4799
    %v4801 = vand.u32 %v347, 4294901760
    %v4802 = vsub.f32 %v347, %v4801
    %4803 = vmatprep.subr.mxu0 %v4802
    %v4804 = vand.u32 %v346, 4294901760
    %v4805 = vsub.f32 %v346, %v4804
    %4806 = vmatpush1.msra.mxu0 %v4805
    %v4807 = vand.u32 %v363, 4294901760
    %v4808 = vsub.f32 %v363, %v4807
    %4809 = vmatprep.subr.mxu0 %v4808
    %v4810 = vand.u32 %v362, 4294901760
    %v4811 = vsub.f32 %v362, %v4810
    %4812 = vmatpush1.msra.mxu0 %v4811
    %4813 = vmatprep.subr.mxu0 0.0
    %4814 = vmatpush1.msra.mxu0 0.0
    %4815 = vmatprep.subr.mxu0 0.0
    %4816 = vmatpush1.msra.mxu0 0.0
    %4817 = vmatprep.subr.mxu0 0.0
    %4818 = vmatpush1.msra.mxu0 0.0
    %4819 = vmatprep.subr.mxu0 0.0
    %4820 = vmatpush1.msra.mxu0 0.0
    %4821 = vmatprep.subr.mxu0 0.0
    %4822 = vmatpush1.msra.mxu0 0.0
    %4823 = vmatprep.subr.mxu0 0.0
    %4824 = vmatpush1.msra.mxu0 0.0
    %4825 = vmatprep.subr.mxu0 0.0
    %4826 = vmatpush1.msra.mxu0 0.0
    %4827 = vmatprep.subr.mxu0 0.0
    %4828 = vmatpush1.msra.mxu0 0.0
    %4829 = vmatprep.subr.mxu0 0.0
    %4830 = vmatpush1.msra.mxu0 0.0
    %4831 = vmatprep.subr.mxu0 0.0
    %4832 = vmatpush1.msra.mxu0 0.0
    %4833 = vmatprep.subr.mxu0 0.0
    %4834 = vmatpush1.msra.mxu0 0.0
    %4835 = vmatprep.subr.mxu0 0.0
    %4836 = vmatpush1.msra.mxu0 0.0
    %4837 = vmatprep.subr.mxu0 0.0
    %4838 = vmatpush1.msra.mxu0 0.0
    %4839 = vmatprep.subr.mxu0 0.0
    %4840 = vmatpush1.msra.mxu0 0.0
    %4841 = vmatprep.subr.mxu0 0.0
    %4842 = vmatpush1.msra.mxu0 0.0
    %4843 = vmatprep.subr.mxu0 0.0
    %4844 = vmatpush1.msra.mxu0 0.0
    %4845 = vmatprep.subr.mxu0 0.0
    %4846 = vmatpush1.msra.mxu0 0.0
    %4847 = vmatprep.subr.mxu0 0.0
    %4848 = vmatpush1.msra.mxu0 0.0
    %4849 = vmatprep.subr.mxu0 0.0
    %4850 = vmatpush1.msra.mxu0 0.0
    %4851 = vmatprep.subr.mxu0 0.0
    %4852 = vmatpush1.msra.mxu0 0.0
    %4853 = vmatprep.subr.mxu0 0.0
    %4854 = vmatpush1.msra.mxu0 0.0
    %4855 = vmatprep.subr.mxu0 0.0
    %4856 = vmatpush1.msra.mxu0 0.0
    %4857 = vmatprep.subr.mxu0 0.0
    %4858 = vmatpush1.msra.mxu0 0.0
    %4859 = vmatprep.subr.mxu0 0.0
    %4860 = vmatpush1.msra.mxu0 0.0
    %4861 = vmatprep.subr.mxu0 0.0
    %4862 = vmatpush1.msra.mxu0 0.0
    %4863 = vmatprep.subr.mxu0 0.0
    %4864 = vmatpush1.msra.mxu0 0.0
    %4865 = vmatprep.subr.mxu0 0.0
    %4866 = vmatpush1.msra.mxu0 0.0
    %4867 = vmatprep.subr.mxu0 0.0
    %4868 = vmatpush1.msra.mxu0 0.0
    %4869 = vmatprep.mubr.f32.mxu0 0.0
    %v4870 = vand.u32 %v388, 4294901760
    %v4871 = vsub.f32 %v388, %v4870
    %4872 = vmatmul.mubr.f32.gmra.mrb[0].mxu0 %v4871
    %v4873 = vpop.f32.mrb[0].mxu0
    %v4874 = vadd.f32 %v4764, %v4873
    %v4875 = vpop.f32.mrb[0].mxu0
    %v4876 = vadd.f32 %v4766, %v4875
    %4877 = vmatprep.mubr.f32.mxu0 0.0
    %v4878 = vand.u32 %v391, 4294901760
    %v4879 = vsub.f32 %v391, %v4878
    %4880 = vmatmul.mubr.f32.gmra.mrb[0].mxu0 %v4879
    %v4881 = vpop.f32.mrb[0].mxu0
    %v4882 = vadd.f32 %v4771, %v4881
    %v4883 = vpop.f32.mrb[0].mxu0
    %v4884 = vadd.f32 %v4773, %v4883
    %4885 = vmatprep.mubr.f32.mxu0 0.0
    %v4886 = vand.u32 %v394, 4294901760
    %v4887 = vsub.f32 %v394, %v4886
    %4888 = vmatmul.mubr.f32.gmra.mrb[0].mxu0 %v4887
    %v4889 = vpop.f32.mrb[0].mxu0
    %v4890 = vadd.f32 %v4778, %v4889
    %v4891 = vpop.f32.mrb[0].mxu0
    %v4892 = vadd.f32 %v4780, %v4891
    %4893 = vmatprep.mubr.f32.mxu0 0.0
    %v4894 = vand.u32 %v397, 4294901760
    %v4895 = vsub.f32 %v397, %v4894
    %4896 = vmatmul.mubr.f32.gmra.mrb[0].mxu0 %v4895
    %v4897 = vpop.f32.mrb[0].mxu0
    %v4898 = vadd.f32 %v4785, %v4897
    %v4899 = vpop.f32.mrb[0].mxu0
    %v4900 = vadd.f32 %v4787, %v4899
    %4901 = vdwg.mxu0
    %v4902 = vand.u32 %v315, 4294901760
    %4903 = vmatprep.subr.mxu0 %v4902
    %v4904 = vand.u32 %v314, 4294901760
    %4905 = vmatpush1.msra.mxu0 %v4904
    %v4906 = vand.u32 %v331, 4294901760
    %4907 = vmatprep.subr.mxu0 %v4906
    %v4908 = vand.u32 %v330, 4294901760
    %4909 = vmatpush1.msra.mxu0 %v4908
    %v4910 = vand.u32 %v347, 4294901760
    %4911 = vmatprep.subr.mxu0 %v4910
    %v4912 = vand.u32 %v346, 4294901760
    %4913 = vmatpush1.msra.mxu0 %v4912
    %v4914 = vand.u32 %v363, 4294901760
    %4915 = vmatprep.subr.mxu0 %v4914
    %v4916 = vand.u32 %v362, 4294901760
    %4917 = vmatpush1.msra.mxu0 %v4916
    %4918 = vmatprep.subr.mxu0 0.0
    %4919 = vmatpush1.msra.mxu0 0.0
    %4920 = vmatprep.subr.mxu0 0.0
    %4921 = vmatpush1.msra.mxu0 0.0
    %4922 = vmatprep.subr.mxu0 0.0
    %4923 = vmatpush1.msra.mxu0 0.0
    %4924 = vmatprep.subr.mxu0 0.0
    %4925 = vmatpush1.msra.mxu0 0.0
    %4926 = vmatprep.subr.mxu0 0.0
    %4927 = vmatpush1.msra.mxu0 0.0
    %4928 = vmatprep.subr.mxu0 0.0
    %4929 = vmatpush1.msra.mxu0 0.0
    %4930 = vmatprep.subr.mxu0 0.0
    %4931 = vmatpush1.msra.mxu0 0.0
    %4932 = vmatprep.subr.mxu0 0.0
    %4933 = vmatpush1.msra.mxu0 0.0
    %4934 = vmatprep.subr.mxu0 0.0
    %4935 = vmatpush1.msra.mxu0 0.0
    %4936 = vmatprep.subr.mxu0 0.0
    %4937 = vmatpush1.msra.mxu0 0.0
    %4938 = vmatprep.subr.mxu0 0.0
    %4939 = vmatpush1.msra.mxu0 0.0
    %4940 = vmatprep.subr.mxu0 0.0
    %4941 = vmatpush1.msra.mxu0 0.0
    %4942 = vmatprep.subr.mxu0 0.0
    %4943 = vmatpush1.msra.mxu0 0.0
    %4944 = vmatprep.subr.mxu0 0.0
    %4945 = vmatpush1.msra.mxu0 0.0
    %4946 = vmatprep.subr.mxu0 0.0
    %4947 = vmatpush1.msra.mxu0 0.0
    %4948 = vmatprep.subr.mxu0 0.0
    %4949 = vmatpush1.msra.mxu0 0.0
    %4950 = vmatprep.subr.mxu0 0.0
    %4951 = vmatpush1.msra.mxu0 0.0
    %4952 = vmatprep.subr.mxu0 0.0
    %4953 = vmatpush1.msra.mxu0 0.0
    %4954 = vmatprep.subr.mxu0 0.0
    %4955 = vmatpush1.msra.mxu0 0.0
    %4956 = vmatprep.subr.mxu0 0.0
    %4957 = vmatpush1.msra.mxu0 0.0
    %4958 = vmatprep.subr.mxu0 0.0
    %4959 = vmatpush1.msra.mxu0 0.0
    %4960 = vmatprep.subr.mxu0 0.0
    %4961 = vmatpush1.msra.mxu0 0.0
    %4962 = vmatprep.subr.mxu0 0.0
    %4963 = vmatpush1.msra.mxu0 0.0
    %4964 = vmatprep.subr.mxu0 0.0
    %4965 = vmatpush1.msra.mxu0 0.0
    %4966 = vmatprep.subr.mxu0 0.0
    %4967 = vmatpush1.msra.mxu0 0.0
    %4968 = vmatprep.subr.mxu0 0.0
    %4969 = vmatpush1.msra.mxu0 0.0
    %4970 = vmatprep.subr.mxu0 0.0
    %4971 = vmatpush1.msra.mxu0 0.0
    %4972 = vmatprep.subr.mxu0 0.0
    %4973 = vmatpush1.msra.mxu0 0.0
    %4974 = vmatprep.mubr.f32.mxu0 0.0
    %v4975 = vand.u32 %v388, 4294901760
    %v4976 = vsub.f32 %v388, %v4975
    %v4977 = vand.u32 %v4976, 4294901760
    %4978 = vmatmul.mubr.f32.gmra.mrb[0].mxu0 %v4977
    %v4979 = vpop.f32.mrb[0].mxu0
    %v4980 = vadd.f32 %v4874, %v4979
    %v4981 = vpop.f32.mrb[0].mxu0
    %v4982 = vadd.f32 %v4876, %v4981
    %4983 = vmatprep.mubr.f32.mxu0 0.0
    %v4984 = vand.u32 %v391, 4294901760
    %v4985 = vsub.f32 %v391, %v4984
    %v4986 = vand.u32 %v4985, 4294901760
    %4987 = vmatmul.mubr.f32.gmra.mrb[0].mxu0 %v4986
    %v4988 = vpop.f32.mrb[0].mxu0
    %v4989 = vadd.f32 %v4882, %v4988
    %v4990 = vpop.f32.mrb[0].mxu0
    %v4991 = vadd.f32 %v4884, %v4990
    %4992 = vmatprep.mubr.f32.mxu0 0.0
    %v4993 = vand.u32 %v394, 4294901760
    %v4994 = vsub.f32 %v394, %v4993
    %v4995 = vand.u32 %v4994, 4294901760
    %4996 = vmatmul.mubr.f32.gmra.mrb[0].mxu0 %v4995
    %v4997 = vpop.f32.mrb[0].mxu0
    %v4998 = vadd.f32 %v4890, %v4997
    %v4999 = vpop.f32.mrb[0].mxu0
    %v5000 = vadd.f32 %v4892, %v4999
    %5001 = vmatprep.mubr.f32.mxu0 0.0
    %v5002 = vand.u32 %v397, 4294901760
    %v5003 = vsub.f32 %v397, %v5002
    %v5004 = vand.u32 %v5003, 4294901760
    %5005 = vmatmul.mubr.f32.gmra.mrb[0].mxu0 %v5004
    %v5006 = vpop.f32.mrb[0].mxu0
    %v5007 = vadd.f32 %v4898, %v5006
    %v5008 = vpop.f32.mrb[0].mxu0
    %v5009 = vadd.f32 %v4900, %v5008
    %5010 = vdwg.mxu0
    %v5011 = vand.u32 %v315, 4294901760
    %v5012 = vsub.f32 %v315, %v5011
    %v5013 = vand.u32 %v5012, 4294901760
    %5014 = vmatprep.subr.mxu0 %v5013
    %v5015 = vand.u32 %v314, 4294901760
    %v5016 = vsub.f32 %v314, %v5015
    %v5017 = vand.u32 %v5016, 4294901760
    %5018 = vmatpush1.msra.mxu0 %v5017
    %v5019 = vand.u32 %v331, 4294901760
    %v5020 = vsub.f32 %v331, %v5019
    %v5021 = vand.u32 %v5020, 4294901760
    %5022 = vmatprep.subr.mxu0 %v5021
    %v5023 = vand.u32 %v330, 4294901760
    %v5024 = vsub.f32 %v330, %v5023
    %v5025 = vand.u32 %v5024, 4294901760
    %5026 = vmatpush1.msra.mxu0 %v5025
    %v5027 = vand.u32 %v347, 4294901760
    %v5028 = vsub.f32 %v347, %v5027
    %v5029 = vand.u32 %v5028, 4294901760
    %5030 = vmatprep.subr.mxu0 %v5029
    %v5031 = vand.u32 %v346, 4294901760
    %v5032 = vsub.f32 %v346, %v5031
    %v5033 = vand.u32 %v5032, 4294901760
    %5034 = vmatpush1.msra.mxu0 %v5033
    %v5035 = vand.u32 %v363, 4294901760
    %v5036 = vsub.f32 %v363, %v5035
    %v5037 = vand.u32 %v5036, 4294901760
    %5038 = vmatprep.subr.mxu0 %v5037
    %v5039 = vand.u32 %v362, 4294901760
    %v5040 = vsub.f32 %v362, %v5039
    %v5041 = vand.u32 %v5040, 4294901760
    %5042 = vmatpush1.msra.mxu0 %v5041
    %5043 = vmatprep.subr.mxu0 0.0
    %5044 = vmatpush1.msra.mxu0 0.0
    %5045 = vmatprep.subr.mxu0 0.0
    %5046 = vmatpush1.msra.mxu0 0.0
    %5047 = vmatprep.subr.mxu0 0.0
    %5048 = vmatpush1.msra.mxu0 0.0
    %5049 = vmatprep.subr.mxu0 0.0
    %5050 = vmatpush1.msra.mxu0 0.0
    %5051 = vmatprep.subr.mxu0 0.0
    %5052 = vmatpush1.msra.mxu0 0.0
    %5053 = vmatprep.subr.mxu0 0.0
    %5054 = vmatpush1.msra.mxu0 0.0
    %5055 = vmatprep.subr.mxu0 0.0
    %5056 = vmatpush1.msra.mxu0 0.0
    %5057 = vmatprep.subr.mxu0 0.0
    %5058 = vmatpush1.msra.mxu0 0.0
    %5059 = vmatprep.subr.mxu0 0.0
    %5060 = vmatpush1.msra.mxu0 0.0
    %5061 = vmatprep.subr.mxu0 0.0
    %5062 = vmatpush1.msra.mxu0 0.0
    %5063 = vmatprep.subr.mxu0 0.0
    %5064 = vmatpush1.msra.mxu0 0.0
    %5065 = vmatprep.subr.mxu0 0.0
    %5066 = vmatpush1.msra.mxu0 0.0
    %5067 = vmatprep.subr.mxu0 0.0
    %5068 = vmatpush1.msra.mxu0 0.0
    %5069 = vmatprep.subr.mxu0 0.0
    %5070 = vmatpush1.msra.mxu0 0.0
    %5071 = vmatprep.subr.mxu0 0.0
    %5072 = vmatpush1.msra.mxu0 0.0
    %5073 = vmatprep.subr.mxu0 0.0
    %5074 = vmatpush1.msra.mxu0 0.0
    %5075 = vmatprep.subr.mxu0 0.0
    %5076 = vmatpush1.msra.mxu0 0.0
    %5077 = vmatprep.subr.mxu0 0.0
    %5078 = vmatpush1.msra.mxu0 0.0
    %5079 = vmatprep.subr.mxu0 0.0
    %5080 = vmatpush1.msra.mxu0 0.0
    %5081 = vmatprep.subr.mxu0 0.0
    %5082 = vmatpush1.msra.mxu0 0.0
    %5083 = vmatprep.subr.mxu0 0.0
    %5084 = vmatpush1.msra.mxu0 0.0
    %5085 = vmatprep.subr.mxu0 0.0
    %5086 = vmatpush1.msra.mxu0 0.0
    %5087 = vmatprep.subr.mxu0 0.0
    %5088 = vmatpush1.msra.mxu0 0.0
    %5089 = vmatprep.subr.mxu0 0.0
    %5090 = vmatpush1.msra.mxu0 0.0
    %5091 = vmatprep.subr.mxu0 0.0
    %5092 = vmatpush1.msra.mxu0 0.0
    %5093 = vmatprep.subr.mxu0 0.0
    %5094 = vmatpush1.msra.mxu0 0.0
    %5095 = vmatprep.subr.mxu0 0.0
    %5096 = vmatpush1.msra.mxu0 0.0
    %5097 = vmatprep.subr.mxu0 0.0
    %5098 = vmatpush1.msra.mxu0 0.0
    %5099 = vmatprep.mubr.f32.mxu0 0.0
    %v5100 = vand.u32 %v388, 4294901760
    %5101 = vmatmul.mubr.f32.gmra.mrb[0].mxu0 %v5100
    %v5102 = vpop.f32.mrb[0].mxu0
    %v5103 = vadd.f32 %v4980, %v5102
    %v5104 = vpop.f32.mrb[0].mxu0
    %v5105 = vadd.f32 %v4982, %v5104
    %5106 = vmatprep.mubr.f32.mxu0 0.0
    %v5107 = vand.u32 %v391, 4294901760
    %5108 = vmatmul.mubr.f32.gmra.mrb[0].mxu0 %v5107
    %v5109 = vpop.f32.mrb[0].mxu0
    %v5110 = vadd.f32 %v4989, %v5109
    %v5111 = vpop.f32.mrb[0].mxu0
    %v5112 = vadd.f32 %v4991, %v5111
    %5113 = vmatprep.mubr.f32.mxu0 0.0
    %v5114 = vand.u32 %v394, 4294901760
    %5115 = vmatmul.mubr.f32.gmra.mrb[0].mxu0 %v5114
    %v5116 = vpop.f32.mrb[0].mxu0
    %v5117 = vadd.f32 %v4998, %v5116
    %v5118 = vpop.f32.mrb[0].mxu0
    %v5119 = vadd.f32 %v5000, %v5118
    %5120 = vmatprep.mubr.f32.mxu0 0.0
    %v5121 = vand.u32 %v397, 4294901760
    %5122 = vmatmul.mubr.f32.gmra.mrb[0].mxu0 %v5121
    %v5123 = vpop.f32.mrb[0].mxu0
    %v5124 = vadd.f32 %v5007, %v5123
    %v5125 = vpop.f32.mrb[0].mxu0
    %v5126 = vadd.f32 %v5009, %v5125
    %5127 = vdwg.mxu0
    %v5128 = vand.u32 %v315, 4294901760
    %5129 = vmatprep.subr.mxu0 %v5128
    %v5130 = vand.u32 %v314, 4294901760
    %5131 = vmatpush1.msra.mxu0 %v5130
    %v5132 = vand.u32 %v331, 4294901760
    %5133 = vmatprep.subr.mxu0 %v5132
    %v5134 = vand.u32 %v330, 4294901760
    %5135 = vmatpush1.msra.mxu0 %v5134
    %v5136 = vand.u32 %v347, 4294901760
    %5137 = vmatprep.subr.mxu0 %v5136
    %v5138 = vand.u32 %v346, 4294901760
    %5139 = vmatpush1.msra.mxu0 %v5138
    %v5140 = vand.u32 %v363, 4294901760
    %5141 = vmatprep.subr.mxu0 %v5140
    %v5142 = vand.u32 %v362, 4294901760
    %5143 = vmatpush1.msra.mxu0 %v5142
    %5144 = vmatprep.subr.mxu0 0.0
    %5145 = vmatpush1.msra.mxu0 0.0
    %5146 = vmatprep.subr.mxu0 0.0
    %5147 = vmatpush1.msra.mxu0 0.0
    %5148 = vmatprep.subr.mxu0 0.0
    %5149 = vmatpush1.msra.mxu0 0.0
    %5150 = vmatprep.subr.mxu0 0.0
    %5151 = vmatpush1.msra.mxu0 0.0
    %5152 = vmatprep.subr.mxu0 0.0
    %5153 = vmatpush1.msra.mxu0 0.0
    %5154 = vmatprep.subr.mxu0 0.0
    %5155 = vmatpush1.msra.mxu0 0.0
    %5156 = vmatprep.subr.mxu0 0.0
    %5157 = vmatpush1.msra.mxu0 0.0
    %5158 = vmatprep.subr.mxu0 0.0
    %5159 = vmatpush1.msra.mxu0 0.0
    %5160 = vmatprep.subr.mxu0 0.0
    %5161 = vmatpush1.msra.mxu0 0.0
    %5162 = vmatprep.subr.mxu0 0.0
    %5163 = vmatpush1.msra.mxu0 0.0
    %5164 = vmatprep.subr.mxu0 0.0
    %5165 = vmatpush1.msra.mxu0 0.0
    %5166 = vmatprep.subr.mxu0 0.0
    %5167 = vmatpush1.msra.mxu0 0.0
    %5168 = vmatprep.subr.mxu0 0.0
    %5169 = vmatpush1.msra.mxu0 0.0
    %5170 = vmatprep.subr.mxu0 0.0
    %5171 = vmatpush1.msra.mxu0 0.0
    %5172 = vmatprep.subr.mxu0 0.0
    %5173 = vmatpush1.msra.mxu0 0.0
    %5174 = vmatprep.subr.mxu0 0.0
    %5175 = vmatpush1.msra.mxu0 0.0
    %5176 = vmatprep.subr.mxu0 0.0
    %5177 = vmatpush1.msra.mxu0 0.0
    %5178 = vmatprep.subr.mxu0 0.0
    %5179 = vmatpush1.msra.mxu0 0.0
    %5180 = vmatprep.subr.mxu0 0.0
    %5181 = vmatpush1.msra.mxu0 0.0
    %5182 = vmatprep.subr.mxu0 0.0
    %5183 = vmatpush1.msra.mxu0 0.0
    %5184 = vmatprep.subr.mxu0 0.0
    %5185 = vmatpush1.msra.mxu0 0.0
    %5186 = vmatprep.subr.mxu0 0.0
    %5187 = vmatpush1.msra.mxu0 0.0
    %5188 = vmatprep.subr.mxu0 0.0
    %5189 = vmatpush1.msra.mxu0 0.0
    %5190 = vmatprep.subr.mxu0 0.0
    %5191 = vmatpush1.msra.mxu0 0.0
    %5192 = vmatprep.subr.mxu0 0.0
    %5193 = vmatpush1.msra.mxu0 0.0
    %5194 = vmatprep.subr.mxu0 0.0
    %5195 = vmatpush1.msra.mxu0 0.0
    %5196 = vmatprep.subr.mxu0 0.0
    %5197 = vmatpush1.msra.mxu0 0.0
    %5198 = vmatprep.subr.mxu0 0.0
    %5199 = vmatpush1.msra.mxu0 0.0
    %5200 = vmatprep.mubr.f32.mxu0 0.0
    %v5201 = vand.u32 %v388, 4294901760
    %5202 = vmatmul.mubr.f32.gmra.mrb[0].mxu0 %v5201
    %v5203 = vpop.f32.mrb[0].mxu0
    %v5204 = vadd.f32 %v5103, %v5203
    %v5205 = vpop.f32.mrb[0].mxu0
    %v5206 = vadd.f32 %v5105, %v5205
    %5207 = vmatprep.mubr.f32.mxu0 0.0
    %v5208 = vand.u32 %v391, 4294901760
    %5209 = vmatmul.mubr.f32.gmra.mrb[0].mxu0 %v5208
    %v5210 = vpop.f32.mrb[0].mxu0
    %v5211 = vadd.f32 %v5110, %v5210
    %v5212 = vpop.f32.mrb[0].mxu0
    %v5213 = vadd.f32 %v5112, %v5212
    %5214 = vmatprep.mubr.f32.mxu0 0.0
    %v5215 = vand.u32 %v394, 4294901760
    %5216 = vmatmul.mubr.f32.gmra.mrb[0].mxu0 %v5215
    %v5217 = vpop.f32.mrb[0].mxu0
    %v5218 = vadd.f32 %v5117, %v5217
    %v5219 = vpop.f32.mrb[0].mxu0
    %v5220 = vadd.f32 %v5119, %v5219
    %5221 = vmatprep.mubr.f32.mxu0 0.0
    %v5222 = vand.u32 %v397, 4294901760
    %5223 = vmatmul.mubr.f32.gmra.mrb[0].mxu0 %v5222
    %v5224 = vpop.f32.mrb[0].mxu0
    %v5225 = vadd.f32 %v5124, %v5224
    %v5226 = vpop.f32.mrb[0].mxu0
    %v5227 = vadd.f32 %v5126, %v5226
    %5228 = vdwg.mxu0
    %v5229 = vand.u32 %v317, 4294901760
    %5230 = vmatprep.subr.mxu0 %v5229
    %v5231 = vand.u32 %v316, 4294901760
    %5232 = vmatpush1.msra.mxu0 %v5231
    %v5233 = vand.u32 %v333, 4294901760
    %5234 = vmatprep.subr.mxu0 %v5233
    %v5235 = vand.u32 %v332, 4294901760
    %5236 = vmatpush1.msra.mxu0 %v5235
    %v5237 = vand.u32 %v349, 4294901760
    %5238 = vmatprep.subr.mxu0 %v5237
    %v5239 = vand.u32 %v348, 4294901760
    %5240 = vmatpush1.msra.mxu0 %v5239
    %v5241 = vand.u32 %v365, 4294901760
    %5242 = vmatprep.subr.mxu0 %v5241
    %v5243 = vand.u32 %v364, 4294901760
    %5244 = vmatpush1.msra.mxu0 %v5243
    %5245 = vmatprep.subr.mxu0 0.0
    %5246 = vmatpush1.msra.mxu0 0.0
    %5247 = vmatprep.subr.mxu0 0.0
    %5248 = vmatpush1.msra.mxu0 0.0
    %5249 = vmatprep.subr.mxu0 0.0
    %5250 = vmatpush1.msra.mxu0 0.0
    %5251 = vmatprep.subr.mxu0 0.0
    %5252 = vmatpush1.msra.mxu0 0.0
    %5253 = vmatprep.subr.mxu0 0.0
    %5254 = vmatpush1.msra.mxu0 0.0
    %5255 = vmatprep.subr.mxu0 0.0
    %5256 = vmatpush1.msra.mxu0 0.0
    %5257 = vmatprep.subr.mxu0 0.0
    %5258 = vmatpush1.msra.mxu0 0.0
    %5259 = vmatprep.subr.mxu0 0.0
    %5260 = vmatpush1.msra.mxu0 0.0
    %5261 = vmatprep.subr.mxu0 0.0
    %5262 = vmatpush1.msra.mxu0 0.0
    %5263 = vmatprep.subr.mxu0 0.0
    %5264 = vmatpush1.msra.mxu0 0.0
    %5265 = vmatprep.subr.mxu0 0.0
    %5266 = vmatpush1.msra.mxu0 0.0
    %5267 = vmatprep.subr.mxu0 0.0
    %5268 = vmatpush1.msra.mxu0 0.0
    %5269 = vmatprep.subr.mxu0 0.0
    %5270 = vmatpush1.msra.mxu0 0.0
    %5271 = vmatprep.subr.mxu0 0.0
    %5272 = vmatpush1.msra.mxu0 0.0
    %5273 = vmatprep.subr.mxu0 0.0
    %5274 = vmatpush1.msra.mxu0 0.0
    %5275 = vmatprep.subr.mxu0 0.0
    %5276 = vmatpush1.msra.mxu0 0.0
    %5277 = vmatprep.subr.mxu0 0.0
    %5278 = vmatpush1.msra.mxu0 0.0
    %5279 = vmatprep.subr.mxu0 0.0
    %5280 = vmatpush1.msra.mxu0 0.0
    %5281 = vmatprep.subr.mxu0 0.0
    %5282 = vmatpush1.msra.mxu0 0.0
    %5283 = vmatprep.subr.mxu0 0.0
    %5284 = vmatpush1.msra.mxu0 0.0
    %5285 = vmatprep.subr.mxu0 0.0
    %5286 = vmatpush1.msra.mxu0 0.0
    %5287 = vmatprep.subr.mxu0 0.0
    %5288 = vmatpush1.msra.mxu0 0.0
    %5289 = vmatprep.subr.mxu0 0.0
    %5290 = vmatpush1.msra.mxu0 0.0
    %5291 = vmatprep.subr.mxu0 0.0
    %5292 = vmatpush1.msra.mxu0 0.0
    %5293 = vmatprep.subr.mxu0 0.0
    %5294 = vmatpush1.msra.mxu0 0.0
    %5295 = vmatprep.subr.mxu0 0.0
    %5296 = vmatpush1.msra.mxu0 0.0
    %5297 = vmatprep.subr.mxu0 0.0
    %5298 = vmatpush1.msra.mxu0 0.0
    %5299 = vmatprep.subr.mxu0 0.0
    %5300 = vmatpush1.msra.mxu0 0.0
    %5301 = vmatprep.mubr.f32.mxu0 0.0
    %v5302 = vand.u32 %v388, 4294901760
    %v5303 = vsub.f32 %v388, %v5302
    %v5304 = vand.u32 %v5303, 4294901760
    %v5305 = vsub.f32 %v5303, %v5304
    %v5306 = vand.u32 %v5305, 4294901760
    %5307 = vmatmul.mubr.f32.gmra.mrb[0].mxu0 %v5306
    %v5308 = vpop.f32.mrb[0].mxu0
    %v5309 = vadd.f32 %v369, %v5308
    %v5310 = vpop.f32.mrb[0].mxu0
    %v5311 = vadd.f32 %v369, %v5310
    %5312 = vmatprep.mubr.f32.mxu0 0.0
    %v5313 = vand.u32 %v391, 4294901760
    %v5314 = vsub.f32 %v391, %v5313
    %v5315 = vand.u32 %v5314, 4294901760
    %v5316 = vsub.f32 %v5314, %v5315
    %v5317 = vand.u32 %v5316, 4294901760
    %5318 = vmatmul.mubr.f32.gmra.mrb[0].mxu0 %v5317
    %v5319 = vpop.f32.mrb[0].mxu0
    %v5320 = vadd.f32 %v374, %v5319
    %v5321 = vpop.f32.mrb[0].mxu0
    %v5322 = vadd.f32 %v374, %v5321
    %5323 = vmatprep.mubr.f32.mxu0 0.0
    %v5324 = vand.u32 %v394, 4294901760
    %v5325 = vsub.f32 %v394, %v5324
    %v5326 = vand.u32 %v5325, 4294901760
    %v5327 = vsub.f32 %v5325, %v5326
    %v5328 = vand.u32 %v5327, 4294901760
    %5329 = vmatmul.mubr.f32.gmra.mrb[0].mxu0 %v5328
    %v5330 = vpop.f32.mrb[0].mxu0
    %v5331 = vadd.f32 %v379, %v5330
    %v5332 = vpop.f32.mrb[0].mxu0
    %v5333 = vadd.f32 %v379, %v5332
    %5334 = vmatprep.mubr.f32.mxu0 0.0
    %v5335 = vand.u32 %v397, 4294901760
    %v5336 = vsub.f32 %v397, %v5335
    %v5337 = vand.u32 %v5336, 4294901760
    %v5338 = vsub.f32 %v5336, %v5337
    %v5339 = vand.u32 %v5338, 4294901760
    %5340 = vmatmul.mubr.f32.gmra.mrb[0].mxu0 %v5339
    %v5341 = vpop.f32.mrb[0].mxu0
    %v5342 = vadd.f32 %v384, %v5341
    %v5343 = vpop.f32.mrb[0].mxu0
    %v5344 = vadd.f32 %v384, %v5343
    %5345 = vdwg.mxu0
    %v5346 = vand.u32 %v317, 4294901760
    %v5347 = vsub.f32 %v317, %v5346
    %v5348 = vand.u32 %v5347, 4294901760
    %v5349 = vsub.f32 %v5347, %v5348
    %v5350 = vand.u32 %v5349, 4294901760
    %5351 = vmatprep.subr.mxu0 %v5350
    %v5352 = vand.u32 %v316, 4294901760
    %v5353 = vsub.f32 %v316, %v5352
    %v5354 = vand.u32 %v5353, 4294901760
    %v5355 = vsub.f32 %v5353, %v5354
    %v5356 = vand.u32 %v5355, 4294901760
    %5357 = vmatpush1.msra.mxu0 %v5356
    %v5358 = vand.u32 %v333, 4294901760
    %v5359 = vsub.f32 %v333, %v5358
    %v5360 = vand.u32 %v5359, 4294901760
    %v5361 = vsub.f32 %v5359, %v5360
    %v5362 = vand.u32 %v5361, 4294901760
    %5363 = vmatprep.subr.mxu0 %v5362
    %v5364 = vand.u32 %v332, 4294901760
    %v5365 = vsub.f32 %v332, %v5364
    %v5366 = vand.u32 %v5365, 4294901760
    %v5367 = vsub.f32 %v5365, %v5366
    %v5368 = vand.u32 %v5367, 4294901760
    %5369 = vmatpush1.msra.mxu0 %v5368
    %v5370 = vand.u32 %v349, 4294901760
    %v5371 = vsub.f32 %v349, %v5370
    %v5372 = vand.u32 %v5371, 4294901760
    %v5373 = vsub.f32 %v5371, %v5372
    %v5374 = vand.u32 %v5373, 4294901760
    %5375 = vmatprep.subr.mxu0 %v5374
    %v5376 = vand.u32 %v348, 4294901760
    %v5377 = vsub.f32 %v348, %v5376
    %v5378 = vand.u32 %v5377, 4294901760
    %v5379 = vsub.f32 %v5377, %v5378
    %v5380 = vand.u32 %v5379, 4294901760
    %5381 = vmatpush1.msra.mxu0 %v5380
    %v5382 = vand.u32 %v365, 4294901760
    %v5383 = vsub.f32 %v365, %v5382
    %v5384 = vand.u32 %v5383, 4294901760
    %v5385 = vsub.f32 %v5383, %v5384
    %v5386 = vand.u32 %v5385, 4294901760
    %5387 = vmatprep.subr.mxu0 %v5386
    %v5388 = vand.u32 %v364, 4294901760
    %v5389 = vsub.f32 %v364, %v5388
    %v5390 = vand.u32 %v5389, 4294901760
    %v5391 = vsub.f32 %v5389, %v5390
    %v5392 = vand.u32 %v5391, 4294901760
    %5393 = vmatpush1.msra.mxu0 %v5392
    %5394 = vmatprep.subr.mxu0 0.0
    %5395 = vmatpush1.msra.mxu0 0.0
    %5396 = vmatprep.subr.mxu0 0.0
    %5397 = vmatpush1.msra.mxu0 0.0
    %5398 = vmatprep.subr.mxu0 0.0
    %5399 = vmatpush1.msra.mxu0 0.0
    %5400 = vmatprep.subr.mxu0 0.0
    %5401 = vmatpush1.msra.mxu0 0.0
    %5402 = vmatprep.subr.mxu0 0.0
    %5403 = vmatpush1.msra.mxu0 0.0
    %5404 = vmatprep.subr.mxu0 0.0
    %5405 = vmatpush1.msra.mxu0 0.0
    %5406 = vmatprep.subr.mxu0 0.0
    %5407 = vmatpush1.msra.mxu0 0.0
    %5408 = vmatprep.subr.mxu0 0.0
    %5409 = vmatpush1.msra.mxu0 0.0
    %5410 = vmatprep.subr.mxu0 0.0
    %5411 = vmatpush1.msra.mxu0 0.0
    %5412 = vmatprep.subr.mxu0 0.0
    %5413 = vmatpush1.msra.mxu0 0.0
    %5414 = vmatprep.subr.mxu0 0.0
    %5415 = vmatpush1.msra.mxu0 0.0
    %5416 = vmatprep.subr.mxu0 0.0
    %5417 = vmatpush1.msra.mxu0 0.0
    %5418 = vmatprep.subr.mxu0 0.0
    %5419 = vmatpush1.msra.mxu0 0.0
    %5420 = vmatprep.subr.mxu0 0.0
    %5421 = vmatpush1.msra.mxu0 0.0
    %5422 = vmatprep.subr.mxu0 0.0
    %5423 = vmatpush1.msra.mxu0 0.0
    %5424 = vmatprep.subr.mxu0 0.0
    %5425 = vmatpush1.msra.mxu0 0.0
    %5426 = vmatprep.subr.mxu0 0.0
    %5427 = vmatpush1.msra.mxu0 0.0
    %5428 = vmatprep.subr.mxu0 0.0
    %5429 = vmatpush1.msra.mxu0 0.0
    %5430 = vmatprep.subr.mxu0 0.0
    %5431 = vmatpush1.msra.mxu0 0.0
    %5432 = vmatprep.subr.mxu0 0.0
    %5433 = vmatpush1.msra.mxu0 0.0
    %5434 = vmatprep.subr.mxu0 0.0
    %5435 = vmatpush1.msra.mxu0 0.0
    %5436 = vmatprep.subr.mxu0 0.0
    %5437 = vmatpush1.msra.mxu0 0.0
    %5438 = vmatprep.subr.mxu0 0.0
    %5439 = vmatpush1.msra.mxu0 0.0
    %5440 = vmatprep.subr.mxu0 0.0
    %5441 = vmatpush1.msra.mxu0 0.0
    %5442 = vmatprep.subr.mxu0 0.0
    %5443 = vmatpush1.msra.mxu0 0.0
    %5444 = vmatprep.subr.mxu0 0.0
    %5445 = vmatpush1.msra.mxu0 0.0
    %5446 = vmatprep.subr.mxu0 0.0
    %5447 = vmatpush1.msra.mxu0 0.0
    %5448 = vmatprep.subr.mxu0 0.0
    %5449 = vmatpush1.msra.mxu0 0.0
    %5450 = vmatprep.mubr.f32.mxu0 0.0
    %v5451 = vand.u32 %v388, 4294901760
    %5452 = vmatmul.mubr.f32.gmra.mrb[0].mxu0 %v5451
    %v5453 = vpop.f32.mrb[0].mxu0
    %v5454 = vadd.f32 %v5309, %v5453
    %v5455 = vpop.f32.mrb[0].mxu0
    %v5456 = vadd.f32 %v5311, %v5455
    %5457 = vmatprep.mubr.f32.mxu0 0.0
    %v5458 = vand.u32 %v391, 4294901760
    %5459 = vmatmul.mubr.f32.gmra.mrb[0].mxu0 %v5458
    %v5460 = vpop.f32.mrb[0].mxu0
    %v5461 = vadd.f32 %v5320, %v5460
    %v5462 = vpop.f32.mrb[0].mxu0
    %v5463 = vadd.f32 %v5322, %v5462
    %5464 = vmatprep.mubr.f32.mxu0 0.0
    %v5465 = vand.u32 %v394, 4294901760
    %5466 = vmatmul.mubr.f32.gmra.mrb[0].mxu0 %v5465
    %v5467 = vpop.f32.mrb[0].mxu0
    %v5468 = vadd.f32 %v5331, %v5467
    %v5469 = vpop.f32.mrb[0].mxu0
    %v5470 = vadd.f32 %v5333, %v5469
    %5471 = vmatprep.mubr.f32.mxu0 0.0
    %v5472 = vand.u32 %v397, 4294901760
    %5473 = vmatmul.mubr.f32.gmra.mrb[0].mxu0 %v5472
    %v5474 = vpop.f32.mrb[0].mxu0
    %v5475 = vadd.f32 %v5342, %v5474
    %v5476 = vpop.f32.mrb[0].mxu0
    %v5477 = vadd.f32 %v5344, %v5476
    %5478 = vdwg.mxu0
    %v5479 = vand.u32 %v317, 4294901760
    %v5480 = vsub.f32 %v317, %v5479
    %5481 = vmatprep.subr.mxu0 %v5480
    %v5482 = vand.u32 %v316, 4294901760
    %v5483 = vsub.f32 %v316, %v5482
    %5484 = vmatpush1.msra.mxu0 %v5483
    %v5485 = vand.u32 %v333, 4294901760
    %v5486 = vsub.f32 %v333, %v5485
    %5487 = vmatprep.subr.mxu0 %v5486
    %v5488 = vand.u32 %v332, 4294901760
    %v5489 = vsub.f32 %v332, %v5488
    %5490 = vmatpush1.msra.mxu0 %v5489
    %v5491 = vand.u32 %v349, 4294901760
    %v5492 = vsub.f32 %v349, %v5491
    %5493 = vmatprep.subr.mxu0 %v5492
    %v5494 = vand.u32 %v348, 4294901760
    %v5495 = vsub.f32 %v348, %v5494
    %5496 = vmatpush1.msra.mxu0 %v5495
    %v5497 = vand.u32 %v365, 4294901760
    %v5498 = vsub.f32 %v365, %v5497
    %5499 = vmatprep.subr.mxu0 %v5498
    %v5500 = vand.u32 %v364, 4294901760
    %v5501 = vsub.f32 %v364, %v5500
    %5502 = vmatpush1.msra.mxu0 %v5501
    %5503 = vmatprep.subr.mxu0 0.0
    %5504 = vmatpush1.msra.mxu0 0.0
    %5505 = vmatprep.subr.mxu0 0.0
    %5506 = vmatpush1.msra.mxu0 0.0
    %5507 = vmatprep.subr.mxu0 0.0
    %5508 = vmatpush1.msra.mxu0 0.0
    %5509 = vmatprep.subr.mxu0 0.0
    %5510 = vmatpush1.msra.mxu0 0.0
    %5511 = vmatprep.subr.mxu0 0.0
    %5512 = vmatpush1.msra.mxu0 0.0
    %5513 = vmatprep.subr.mxu0 0.0
    %5514 = vmatpush1.msra.mxu0 0.0
    %5515 = vmatprep.subr.mxu0 0.0
    %5516 = vmatpush1.msra.mxu0 0.0
    %5517 = vmatprep.subr.mxu0 0.0
    %5518 = vmatpush1.msra.mxu0 0.0
    %5519 = vmatprep.subr.mxu0 0.0
    %5520 = vmatpush1.msra.mxu0 0.0
    %5521 = vmatprep.subr.mxu0 0.0
    %5522 = vmatpush1.msra.mxu0 0.0
    %5523 = vmatprep.subr.mxu0 0.0
    %5524 = vmatpush1.msra.mxu0 0.0
    %5525 = vmatprep.subr.mxu0 0.0
    %5526 = vmatpush1.msra.mxu0 0.0
    %5527 = vmatprep.subr.mxu0 0.0
    %5528 = vmatpush1.msra.mxu0 0.0
    %5529 = vmatprep.subr.mxu0 0.0
    %5530 = vmatpush1.msra.mxu0 0.0
    %5531 = vmatprep.subr.mxu0 0.0
    %5532 = vmatpush1.msra.mxu0 0.0
    %5533 = vmatprep.subr.mxu0 0.0
    %5534 = vmatpush1.msra.mxu0 0.0
    %5535 = vmatprep.subr.mxu0 0.0
    %5536 = vmatpush1.msra.mxu0 0.0
    %5537 = vmatprep.subr.mxu0 0.0
    %5538 = vmatpush1.msra.mxu0 0.0
    %5539 = vmatprep.subr.mxu0 0.0
    %5540 = vmatpush1.msra.mxu0 0.0
    %5541 = vmatprep.subr.mxu0 0.0
    %5542 = vmatpush1.msra.mxu0 0.0
    %5543 = vmatprep.subr.mxu0 0.0
    %5544 = vmatpush1.msra.mxu0 0.0
    %5545 = vmatprep.subr.mxu0 0.0
    %5546 = vmatpush1.msra.mxu0 0.0
    %5547 = vmatprep.subr.mxu0 0.0
    %5548 = vmatpush1.msra.mxu0 0.0
    %5549 = vmatprep.subr.mxu0 0.0
    %5550 = vmatpush1.msra.mxu0 0.0
    %5551 = vmatprep.subr.mxu0 0.0
    %5552 = vmatpush1.msra.mxu0 0.0
    %5553 = vmatprep.subr.mxu0 0.0
    %5554 = vmatpush1.msra.mxu0 0.0
    %5555 = vmatprep.subr.mxu0 0.0
    %5556 = vmatpush1.msra.mxu0 0.0
    %5557 = vmatprep.subr.mxu0 0.0
    %5558 = vmatpush1.msra.mxu0 0.0
    %5559 = vmatprep.mubr.f32.mxu0 0.0
    %v5560 = vand.u32 %v388, 4294901760
    %v5561 = vsub.f32 %v388, %v5560
    %5562 = vmatmul.mubr.f32.gmra.mrb[0].mxu0 %v5561
    %v5563 = vpop.f32.mrb[0].mxu0
    %v5564 = vadd.f32 %v5454, %v5563
    %v5565 = vpop.f32.mrb[0].mxu0
    %v5566 = vadd.f32 %v5456, %v5565
    %5567 = vmatprep.mubr.f32.mxu0 0.0
    %v5568 = vand.u32 %v391, 4294901760
    %v5569 = vsub.f32 %v391, %v5568
    %5570 = vmatmul.mubr.f32.gmra.mrb[0].mxu0 %v5569
    %v5571 = vpop.f32.mrb[0].mxu0
    %v5572 = vadd.f32 %v5461, %v5571
    %v5573 = vpop.f32.mrb[0].mxu0
    %v5574 = vadd.f32 %v5463, %v5573
    %5575 = vmatprep.mubr.f32.mxu0 0.0
    %v5576 = vand.u32 %v394, 4294901760
    %v5577 = vsub.f32 %v394, %v5576
    %5578 = vmatmul.mubr.f32.gmra.mrb[0].mxu0 %v5577
    %v5579 = vpop.f32.mrb[0].mxu0
    %v5580 = vadd.f32 %v5468, %v5579
    %v5581 = vpop.f32.mrb[0].mxu0
    %v5582 = vadd.f32 %v5470, %v5581
    %5583 = vmatprep.mubr.f32.mxu0 0.0
    %v5584 = vand.u32 %v397, 4294901760
    %v5585 = vsub.f32 %v397, %v5584
    %5586 = vmatmul.mubr.f32.gmra.mrb[0].mxu0 %v5585
    %v5587 = vpop.f32.mrb[0].mxu0
    %v5588 = vadd.f32 %v5475, %v5587
    %v5589 = vpop.f32.mrb[0].mxu0
    %v5590 = vadd.f32 %v5477, %v5589
    %5591 = vdwg.mxu0
    %v5592 = vand.u32 %v317, 4294901760
    %5593 = vmatprep.subr.mxu0 %v5592
    %v5594 = vand.u32 %v316, 4294901760
    %5595 = vmatpush1.msra.mxu0 %v5594
    %v5596 = vand.u32 %v333, 4294901760
    %5597 = vmatprep.subr.mxu0 %v5596
    %v5598 = vand.u32 %v332, 4294901760
    %5599 = vmatpush1.msra.mxu0 %v5598
    %v5600 = vand.u32 %v349, 4294901760
    %5601 = vmatprep.subr.mxu0 %v5600
    %v5602 = vand.u32 %v348, 4294901760
    %5603 = vmatpush1.msra.mxu0 %v5602
    %v5604 = vand.u32 %v365, 4294901760
    %5605 = vmatprep.subr.mxu0 %v5604
    %v5606 = vand.u32 %v364, 4294901760
    %5607 = vmatpush1.msra.mxu0 %v5606
    %5608 = vmatprep.subr.mxu0 0.0
    %5609 = vmatpush1.msra.mxu0 0.0
    %5610 = vmatprep.subr.mxu0 0.0
    %5611 = vmatpush1.msra.mxu0 0.0
    %5612 = vmatprep.subr.mxu0 0.0
    %5613 = vmatpush1.msra.mxu0 0.0
    %5614 = vmatprep.subr.mxu0 0.0
    %5615 = vmatpush1.msra.mxu0 0.0
    %5616 = vmatprep.subr.mxu0 0.0
    %5617 = vmatpush1.msra.mxu0 0.0
    %5618 = vmatprep.subr.mxu0 0.0
    %5619 = vmatpush1.msra.mxu0 0.0
    %5620 = vmatprep.subr.mxu0 0.0
    %5621 = vmatpush1.msra.mxu0 0.0
    %5622 = vmatprep.subr.mxu0 0.0
    %5623 = vmatpush1.msra.mxu0 0.0
    %5624 = vmatprep.subr.mxu0 0.0
    %5625 = vmatpush1.msra.mxu0 0.0
    %5626 = vmatprep.subr.mxu0 0.0
    %5627 = vmatpush1.msra.mxu0 0.0
    %5628 = vmatprep.subr.mxu0 0.0
    %5629 = vmatpush1.msra.mxu0 0.0
    %5630 = vmatprep.subr.mxu0 0.0
    %5631 = vmatpush1.msra.mxu0 0.0
    %5632 = vmatprep.subr.mxu0 0.0
    %5633 = vmatpush1.msra.mxu0 0.0
    %5634 = vmatprep.subr.mxu0 0.0
    %5635 = vmatpush1.msra.mxu0 0.0
    %5636 = vmatprep.subr.mxu0 0.0
    %5637 = vmatpush1.msra.mxu0 0.0
    %5638 = vmatprep.subr.mxu0 0.0
    %5639 = vmatpush1.msra.mxu0 0.0
    %5640 = vmatprep.subr.mxu0 0.0
    %5641 = vmatpush1.msra.mxu0 0.0
    %5642 = vmatprep.subr.mxu0 0.0
    %5643 = vmatpush1.msra.mxu0 0.0
    %5644 = vmatprep.subr.mxu0 0.0
    %5645 = vmatpush1.msra.mxu0 0.0
    %5646 = vmatprep.subr.mxu0 0.0
    %5647 = vmatpush1.msra.mxu0 0.0
    %5648 = vmatprep.subr.mxu0 0.0
    %5649 = vmatpush1.msra.mxu0 0.0
    %5650 = vmatprep.subr.mxu0 0.0
    %5651 = vmatpush1.msra.mxu0 0.0
    %5652 = vmatprep.subr.mxu0 0.0
    %5653 = vmatpush1.msra.mxu0 0.0
    %5654 = vmatprep.subr.mxu0 0.0
    %5655 = vmatpush1.msra.mxu0 0.0
    %5656 = vmatprep.subr.mxu0 0.0
    %5657 = vmatpush1.msra.mxu0 0.0
    %5658 = vmatprep.subr.mxu0 0.0
    %5659 = vmatpush1.msra.mxu0 0.0
    %5660 = vmatprep.subr.mxu0 0.0
    %5661 = vmatpush1.msra.mxu0 0.0
    %5662 = vmatprep.subr.mxu0 0.0
    %5663 = vmatpush1.msra.mxu0 0.0
    %5664 = vmatprep.mubr.f32.mxu0 0.0
    %v5665 = vand.u32 %v388, 4294901760
    %v5666 = vsub.f32 %v388, %v5665
    %v5667 = vand.u32 %v5666, 4294901760
    %5668 = vmatmul.mubr.f32.gmra.mrb[0].mxu0 %v5667
    %v5669 = vpop.f32.mrb[0].mxu0
    %v5670 = vadd.f32 %v5564, %v5669
    %v5671 = vpop.f32.mrb[0].mxu0
    %v5672 = vadd.f32 %v5566, %v5671
    %5673 = vmatprep.mubr.f32.mxu0 0.0
    %v5674 = vand.u32 %v391, 4294901760
    %v5675 = vsub.f32 %v391, %v5674
    %v5676 = vand.u32 %v5675, 4294901760
    %5677 = vmatmul.mubr.f32.gmra.mrb[0].mxu0 %v5676
    %v5678 = vpop.f32.mrb[0].mxu0
    %v5679 = vadd.f32 %v5572, %v5678
    %v5680 = vpop.f32.mrb[0].mxu0
    %v5681 = vadd.f32 %v5574, %v5680
    %5682 = vmatprep.mubr.f32.mxu0 0.0
    %v5683 = vand.u32 %v394, 4294901760
    %v5684 = vsub.f32 %v394, %v5683
    %v5685 = vand.u32 %v5684, 4294901760
    %5686 = vmatmul.mubr.f32.gmra.mrb[0].mxu0 %v5685
    %v5687 = vpop.f32.mrb[0].mxu0
    %v5688 = vadd.f32 %v5580, %v5687
    %v5689 = vpop.f32.mrb[0].mxu0
    %v5690 = vadd.f32 %v5582, %v5689
    %5691 = vmatprep.mubr.f32.mxu0 0.0
    %v5692 = vand.u32 %v397, 4294901760
    %v5693 = vsub.f32 %v397, %v5692
    %v5694 = vand.u32 %v5693, 4294901760
    %5695 = vmatmul.mubr.f32.gmra.mrb[0].mxu0 %v5694
    %v5696 = vpop.f32.mrb[0].mxu0
    %v5697 = vadd.f32 %v5588, %v5696
    %v5698 = vpop.f32.mrb[0].mxu0
    %v5699 = vadd.f32 %v5590, %v5698
    %5700 = vdwg.mxu0
    %v5701 = vand.u32 %v317, 4294901760
    %v5702 = vsub.f32 %v317, %v5701
    %v5703 = vand.u32 %v5702, 4294901760
    %5704 = vmatprep.subr.mxu0 %v5703
    %v5705 = vand.u32 %v316, 4294901760
    %v5706 = vsub.f32 %v316, %v5705
    %v5707 = vand.u32 %v5706, 4294901760
    %5708 = vmatpush1.msra.mxu0 %v5707
    %v5709 = vand.u32 %v333, 4294901760
    %v5710 = vsub.f32 %v333, %v5709
    %v5711 = vand.u32 %v5710, 4294901760
    %5712 = vmatprep.subr.mxu0 %v5711
    %v5713 = vand.u32 %v332, 4294901760
    %v5714 = vsub.f32 %v332, %v5713
    %v5715 = vand.u32 %v5714, 4294901760
    %5716 = vmatpush1.msra.mxu0 %v5715
    %v5717 = vand.u32 %v349, 4294901760
    %v5718 = vsub.f32 %v349, %v5717
    %v5719 = vand.u32 %v5718, 4294901760
    %5720 = vmatprep.subr.mxu0 %v5719
    %v5721 = vand.u32 %v348, 4294901760
    %v5722 = vsub.f32 %v348, %v5721
    %v5723 = vand.u32 %v5722, 4294901760
    %5724 = vmatpush1.msra.mxu0 %v5723
    %v5725 = vand.u32 %v365, 4294901760
    %v5726 = vsub.f32 %v365, %v5725
    %v5727 = vand.u32 %v5726, 4294901760
    %5728 = vmatprep.subr.mxu0 %v5727
    %v5729 = vand.u32 %v364, 4294901760
    %v5730 = vsub.f32 %v364, %v5729
    %v5731 = vand.u32 %v5730, 4294901760
    %5732 = vmatpush1.msra.mxu0 %v5731
    %5733 = vmatprep.subr.mxu0 0.0
    %5734 = vmatpush1.msra.mxu0 0.0
    %5735 = vmatprep.subr.mxu0 0.0
    %5736 = vmatpush1.msra.mxu0 0.0
    %5737 = vmatprep.subr.mxu0 0.0
    %5738 = vmatpush1.msra.mxu0 0.0
    %5739 = vmatprep.subr.mxu0 0.0
    %5740 = vmatpush1.msra.mxu0 0.0
    %5741 = vmatprep.subr.mxu0 0.0
    %5742 = vmatpush1.msra.mxu0 0.0
    %5743 = vmatprep.subr.mxu0 0.0
    %5744 = vmatpush1.msra.mxu0 0.0
    %5745 = vmatprep.subr.mxu0 0.0
    %5746 = vmatpush1.msra.mxu0 0.0
    %5747 = vmatprep.subr.mxu0 0.0
    %5748 = vmatpush1.msra.mxu0 0.0
    %5749 = vmatprep.subr.mxu0 0.0
    %5750 = vmatpush1.msra.mxu0 0.0
    %5751 = vmatprep.subr.mxu0 0.0
    %5752 = vmatpush1.msra.mxu0 0.0
    %5753 = vmatprep.subr.mxu0 0.0
    %5754 = vmatpush1.msra.mxu0 0.0
    %5755 = vmatprep.subr.mxu0 0.0
    %5756 = vmatpush1.msra.mxu0 0.0
    %5757 = vmatprep.subr.mxu0 0.0
    %5758 = vmatpush1.msra.mxu0 0.0
    %5759 = vmatprep.subr.mxu0 0.0
    %5760 = vmatpush1.msra.mxu0 0.0
    %5761 = vmatprep.subr.mxu0 0.0
    %5762 = vmatpush1.msra.mxu0 0.0
    %5763 = vmatprep.subr.mxu0 0.0
    %5764 = vmatpush1.msra.mxu0 0.0
    %5765 = vmatprep.subr.mxu0 0.0
    %5766 = vmatpush1.msra.mxu0 0.0
    %5767 = vmatprep.subr.mxu0 0.0
    %5768 = vmatpush1.msra.mxu0 0.0
    %5769 = vmatprep.subr.mxu0 0.0
    %5770 = vmatpush1.msra.mxu0 0.0
    %5771 = vmatprep.subr.mxu0 0.0
    %5772 = vmatpush1.msra.mxu0 0.0
    %5773 = vmatprep.subr.mxu0 0.0
    %5774 = vmatpush1.msra.mxu0 0.0
    %5775 = vmatprep.subr.mxu0 0.0
    %5776 = vmatpush1.msra.mxu0 0.0
    %5777 = vmatprep.subr.mxu0 0.0
    %5778 = vmatpush1.msra.mxu0 0.0
    %5779 = vmatprep.subr.mxu0 0.0
    %5780 = vmatpush1.msra.mxu0 0.0
    %5781 = vmatprep.subr.mxu0 0.0
    %5782 = vmatpush1.msra.mxu0 0.0
    %5783 = vmatprep.subr.mxu0 0.0
    %5784 = vmatpush1.msra.mxu0 0.0
    %5785 = vmatprep.subr.mxu0 0.0
    %5786 = vmatpush1.msra.mxu0 0.0
    %5787 = vmatprep.subr.mxu0 0.0
    %5788 = vmatpush1.msra.mxu0 0.0
    %5789 = vmatprep.mubr.f32.mxu0 0.0
    %v5790 = vand.u32 %v388, 4294901760
    %5791 = vmatmul.mubr.f32.gmra.mrb[0].mxu0 %v5790
    %v5792 = vpop.f32.mrb[0].mxu0
    %v5793 = vadd.f32 %v5670, %v5792
    %v5794 = vpop.f32.mrb[0].mxu0
    %v5795 = vadd.f32 %v5672, %v5794
    %5796 = vmatprep.mubr.f32.mxu0 0.0
    %v5797 = vand.u32 %v391, 4294901760
    %5798 = vmatmul.mubr.f32.gmra.mrb[0].mxu0 %v5797
    %v5799 = vpop.f32.mrb[0].mxu0
    %v5800 = vadd.f32 %v5679, %v5799
    %v5801 = vpop.f32.mrb[0].mxu0
    %v5802 = vadd.f32 %v5681, %v5801
    %5803 = vmatprep.mubr.f32.mxu0 0.0
    %v5804 = vand.u32 %v394, 4294901760
    %5805 = vmatmul.mubr.f32.gmra.mrb[0].mxu0 %v5804
    %v5806 = vpop.f32.mrb[0].mxu0
    %v5807 = vadd.f32 %v5688, %v5806
    %v5808 = vpop.f32.mrb[0].mxu0
    %v5809 = vadd.f32 %v5690, %v5808
    %5810 = vmatprep.mubr.f32.mxu0 0.0
    %v5811 = vand.u32 %v397, 4294901760
    %5812 = vmatmul.mubr.f32.gmra.mrb[0].mxu0 %v5811
    %v5813 = vpop.f32.mrb[0].mxu0
    %v5814 = vadd.f32 %v5697, %v5813
    %v5815 = vpop.f32.mrb[0].mxu0
    %v5816 = vadd.f32 %v5699, %v5815
    %5817 = vdwg.mxu0
    %v5818 = vand.u32 %v317, 4294901760
    %5819 = vmatprep.subr.mxu0 %v5818
    %v5820 = vand.u32 %v316, 4294901760
    %5821 = vmatpush1.msra.mxu0 %v5820
    %v5822 = vand.u32 %v333, 4294901760
    %5823 = vmatprep.subr.mxu0 %v5822
    %v5824 = vand.u32 %v332, 4294901760
    %5825 = vmatpush1.msra.mxu0 %v5824
    %v5826 = vand.u32 %v349, 4294901760
    %5827 = vmatprep.subr.mxu0 %v5826
    %v5828 = vand.u32 %v348, 4294901760
    %5829 = vmatpush1.msra.mxu0 %v5828
    %v5830 = vand.u32 %v365, 4294901760
    %5831 = vmatprep.subr.mxu0 %v5830
    %v5832 = vand.u32 %v364, 4294901760
    %5833 = vmatpush1.msra.mxu0 %v5832
    %5834 = vmatprep.subr.mxu0 0.0
    %5835 = vmatpush1.msra.mxu0 0.0
    %5836 = vmatprep.subr.mxu0 0.0
    %5837 = vmatpush1.msra.mxu0 0.0
    %5838 = vmatprep.subr.mxu0 0.0
    %5839 = vmatpush1.msra.mxu0 0.0
    %5840 = vmatprep.subr.mxu0 0.0
    %5841 = vmatpush1.msra.mxu0 0.0
    %5842 = vmatprep.subr.mxu0 0.0
    %5843 = vmatpush1.msra.mxu0 0.0
    %5844 = vmatprep.subr.mxu0 0.0
    %5845 = vmatpush1.msra.mxu0 0.0
    %5846 = vmatprep.subr.mxu0 0.0
    %5847 = vmatpush1.msra.mxu0 0.0
    %5848 = vmatprep.subr.mxu0 0.0
    %5849 = vmatpush1.msra.mxu0 0.0
    %5850 = vmatprep.subr.mxu0 0.0
    %5851 = vmatpush1.msra.mxu0 0.0
    %5852 = vmatprep.subr.mxu0 0.0
    %5853 = vmatpush1.msra.mxu0 0.0
    %5854 = vmatprep.subr.mxu0 0.0
    %5855 = vmatpush1.msra.mxu0 0.0
    %5856 = vmatprep.subr.mxu0 0.0
    %5857 = vmatpush1.msra.mxu0 0.0
    %5858 = vmatprep.subr.mxu0 0.0
    %5859 = vmatpush1.msra.mxu0 0.0
    %5860 = vmatprep.subr.mxu0 0.0
    %5861 = vmatpush1.msra.mxu0 0.0
    %5862 = vmatprep.subr.mxu0 0.0
    %5863 = vmatpush1.msra.mxu0 0.0
    %5864 = vmatprep.subr.mxu0 0.0
    %5865 = vmatpush1.msra.mxu0 0.0
    %5866 = vmatprep.subr.mxu0 0.0
    %5867 = vmatpush1.msra.mxu0 0.0
    %5868 = vmatprep.subr.mxu0 0.0
    %5869 = vmatpush1.msra.mxu0 0.0
    %5870 = vmatprep.subr.mxu0 0.0
    %5871 = vmatpush1.msra.mxu0 0.0
    %5872 = vmatprep.subr.mxu0 0.0
    %5873 = vmatpush1.msra.mxu0 0.0
    %5874 = vmatprep.subr.mxu0 0.0
    %5875 = vmatpush1.msra.mxu0 0.0
    %5876 = vmatprep.subr.mxu0 0.0
    %5877 = vmatpush1.msra.mxu0 0.0
    %5878 = vmatprep.subr.mxu0 0.0
    %5879 = vmatpush1.msra.mxu0 0.0
    %5880 = vmatprep.subr.mxu0 0.0
    %5881 = vmatpush1.msra.mxu0 0.0
    %5882 = vmatprep.subr.mxu0 0.0
    %5883 = vmatpush1.msra.mxu0 0.0
    %5884 = vmatprep.subr.mxu0 0.0
    %5885 = vmatpush1.msra.mxu0 0.0
    %5886 = vmatprep.subr.mxu0 0.0
    %5887 = vmatpush1.msra.mxu0 0.0
    %5888 = vmatprep.subr.mxu0 0.0
    %5889 = vmatpush1.msra.mxu0 0.0
    %5890 = vmatprep.mubr.f32.mxu0 0.0
    %v5891 = vand.u32 %v388, 4294901760
    %5892 = vmatmul.mubr.f32.gmra.mrb[0].mxu0 %v5891
    %v5893 = vpop.f32.mrb[0].mxu0
    %v5894 = vadd.f32 %v5793, %v5893
    %v5895 = vpop.f32.mrb[0].mxu0
    %v5896 = vadd.f32 %v5795, %v5895
    %5897 = vmatprep.mubr.f32.mxu0 0.0
    %v5898 = vand.u32 %v391, 4294901760
    %5899 = vmatmul.mubr.f32.gmra.mrb[0].mxu0 %v5898
    %v5900 = vpop.f32.mrb[0].mxu0
    %v5901 = vadd.f32 %v5800, %v5900
    %v5902 = vpop.f32.mrb[0].mxu0
    %v5903 = vadd.f32 %v5802, %v5902
    %5904 = vmatprep.mubr.f32.mxu0 0.0
    %v5905 = vand.u32 %v394, 4294901760
    %5906 = vmatmul.mubr.f32.gmra.mrb[0].mxu0 %v5905
    %v5907 = vpop.f32.mrb[0].mxu0
    %v5908 = vadd.f32 %v5807, %v5907
    %v5909 = vpop.f32.mrb[0].mxu0
    %v5910 = vadd.f32 %v5809, %v5909
    %5911 = vmatprep.mubr.f32.mxu0 0.0
    %v5912 = vand.u32 %v397, 4294901760
    %5913 = vmatmul.mubr.f32.gmra.mrb[0].mxu0 %v5912
    %v5914 = vpop.f32.mrb[0].mxu0
    %v5915 = vadd.f32 %v5814, %v5914
    %v5916 = vpop.f32.mrb[0].mxu0
    %v5917 = vadd.f32 %v5816, %v5916
    %5918 = vdwg.mxu0
    %v5919 = vmax.f32 %v1064, 0.0
    %v5920 = vmax.f32 %v1066, 0.0
    %v5921 = vmax.f32 %v1754, 0.0
    %v5922 = vmax.f32 %v1756, 0.0
    %v5923 = vmax.f32 %v2444, 0.0
    %v5924 = vmax.f32 %v2446, 0.0
    %v5925 = vmax.f32 %v3134, 0.0
    %v5926 = vmax.f32 %v3136, 0.0
    %v5927 = vmax.f32 %v3824, 0.0
    %v5928 = vmax.f32 %v3826, 0.0
    %v5929 = vmax.f32 %v4514, 0.0
    %v5930 = vmax.f32 %v4516, 0.0
    %v5931 = vmax.f32 %v5204, 0.0
    %v5932 = vmax.f32 %v5206, 0.0
    %v5933 = vmax.f32 %v5894, 0.0
    %v5934 = vmax.f32 %v5896, 0.0
    %v5935 = vmax.f32 %v1071, 0.0
    %v5936 = vmax.f32 %v1073, 0.0
    %v5937 = vmax.f32 %v1761, 0.0
    %v5938 = vmax.f32 %v1763, 0.0
    %v5939 = vmax.f32 %v2451, 0.0
    %v5940 = vmax.f32 %v2453, 0.0
    %v5941 = vmax.f32 %v3141, 0.0
    %v5942 = vmax.f32 %v3143, 0.0
    %v5943 = vmax.f32 %v3831, 0.0
    %v5944 = vmax.f32 %v3833, 0.0
    %v5945 = vmax.f32 %v4521, 0.0
    %v5946 = vmax.f32 %v4523, 0.0
    %v5947 = vmax.f32 %v5211, 0.0
    %v5948 = vmax.f32 %v5213, 0.0
    %v5949 = vmax.f32 %v5901, 0.0
    %v5950 = vmax.f32 %v5903, 0.0
    %v5951 = vmax.f32 %v1078, 0.0
    %v5952 = vmax.f32 %v1080, 0.0
    %v5953 = vmax.f32 %v1768, 0.0
    %v5954 = vmax.f32 %v1770, 0.0
    %v5955 = vmax.f32 %v2458, 0.0
    %v5956 = vmax.f32 %v2460, 0.0
    %v5957 = vmax.f32 %v3148, 0.0
    %v5958 = vmax.f32 %v3150, 0.0
    %v5959 = vmax.f32 %v3838, 0.0
    %v5960 = vmax.f32 %v3840, 0.0
    %v5961 = vmax.f32 %v4528, 0.0
    %v5962 = vmax.f32 %v4530, 0.0
    %v5963 = vmax.f32 %v5218, 0.0
    %v5964 = vmax.f32 %v5220, 0.0
    %v5965 = vmax.f32 %v5908, 0.0
    %v5966 = vmax.f32 %v5910, 0.0
    %v5967 = vmax.f32 %v1085, 0.0
    %v5968 = vmax.f32 %v1087, 0.0
    %v5969 = vmax.f32 %v1775, 0.0
    %v5970 = vmax.f32 %v1777, 0.0
    %v5971 = vmax.f32 %v2465, 0.0
    %v5972 = vmax.f32 %v2467, 0.0
    %v5973 = vmax.f32 %v3155, 0.0
    %v5974 = vmax.f32 %v3157, 0.0
    %v5975 = vmax.f32 %v3845, 0.0
    %v5976 = vmax.f32 %v3847, 0.0
    %v5977 = vmax.f32 %v4535, 0.0
    %v5978 = vmax.f32 %v4537, 0.0
    %v5979 = vmax.f32 %v5225, 0.0
    %v5980 = vmax.f32 %v5227, 0.0
    %v5981 = vmax.f32 %v5915, 0.0
    %v5982 = vmax.f32 %v5917, 0.0
    %5984 = vset.pattern.permute.xlu0 0
    %5985 = vperm.xlu0 %5984, %v37
    %v5986 = vpop.permute.xlu0 %5985
    %5989 = vset.pattern.permute.xlu0 0
    %5990 = vperm.xlu0 %5989, %v38
    %v5991 = vpop.permute.xlu0 %5990
    %5994 = vset.pattern.permute.xlu0 0
    %5995 = vperm.xlu0 %5994, %v39
    %v5996 = vpop.permute.xlu0 %5995
    %5999 = vset.pattern.permute.xlu0 0
    %6000 = vperm.xlu0 %5999, %v40
    %v6001 = vpop.permute.xlu0 %6000
    %v6003 = vmul.f32 %v5919, %v5986
    %v6004 = vmul.f32 %v5920, %v5986
    %v6005 = vmul.f32 %v5921, %v5986
    %v6006 = vmul.f32 %v5922, %v5986
    %v6007 = vmul.f32 %v5923, %v5986
    %v6008 = vmul.f32 %v5924, %v5986
    %v6009 = vmul.f32 %v5925, %v5986
    %v6010 = vmul.f32 %v5926, %v5986
    %v6011 = vmul.f32 %v5927, %v5986
    %v6012 = vmul.f32 %v5928, %v5986
    %v6013 = vmul.f32 %v5929, %v5986
    %v6014 = vmul.f32 %v5930, %v5986
    %v6015 = vmul.f32 %v5931, %v5986
    %v6016 = vmul.f32 %v5932, %v5986
    %v6017 = vmul.f32 %v5933, %v5986
    %v6018 = vmul.f32 %v5934, %v5986
    %v6019 = vmul.f32 %v5935, %v5991
    %v6020 = vmul.f32 %v5936, %v5991
    %v6021 = vmul.f32 %v5937, %v5991
    %v6022 = vmul.f32 %v5938, %v5991
    %v6023 = vmul.f32 %v5939, %v5991
    %v6024 = vmul.f32 %v5940, %v5991
    %v6025 = vmul.f32 %v5941, %v5991
    %v6026 = vmul.f32 %v5942, %v5991
    %v6027 = vmul.f32 %v5943, %v5991
    %v6028 = vmul.f32 %v5944, %v5991
    %v6029 = vmul.f32 %v5945, %v5991
    %v6030 = vmul.f32 %v5946, %v5991
    %v6031 = vmul.f32 %v5947, %v5991
    %v6032 = vmul.f32 %v5948, %v5991
    %v6033 = vmul.f32 %v5949, %v5991
    %v6034 = vmul.f32 %v5950, %v5991
    %v6035 = vmul.f32 %v5951, %v5996
    %v6036 = vmul.f32 %v5952, %v5996
    %v6037 = vmul.f32 %v5953, %v5996
    %v6038 = vmul.f32 %v5954, %v5996
    %v6039 = vmul.f32 %v5955, %v5996
    %v6040 = vmul.f32 %v5956, %v5996
    %v6041 = vmul.f32 %v5957, %v5996
    %v6042 = vmul.f32 %v5958, %v5996
    %v6043 = vmul.f32 %v5959, %v5996
    %v6044 = vmul.f32 %v5960, %v5996
    %v6045 = vmul.f32 %v5961, %v5996
    %v6046 = vmul.f32 %v5962, %v5996
    %v6047 = vmul.f32 %v5963, %v5996
    %v6048 = vmul.f32 %v5964, %v5996
    %v6049 = vmul.f32 %v5965, %v5996
    %v6050 = vmul.f32 %v5966, %v5996
    %v6051 = vmul.f32 %v5967, %v6001
    %v6052 = vmul.f32 %v5968, %v6001
    %v6053 = vmul.f32 %v5969, %v6001
    %v6054 = vmul.f32 %v5970, %v6001
    %v6055 = vmul.f32 %v5971, %v6001
    %v6056 = vmul.f32 %v5972, %v6001
    %v6057 = vmul.f32 %v5973, %v6001
    %v6058 = vmul.f32 %v5974, %v6001
    %v6059 = vmul.f32 %v5975, %v6001
    %v6060 = vmul.f32 %v5976, %v6001
    %v6061 = vmul.f32 %v5977, %v6001
    %v6062 = vmul.f32 %v5978, %v6001
    %v6063 = vmul.f32 %v5979, %v6001
    %v6064 = vmul.f32 %v5980, %v6001
    %v6065 = vmul.f32 %v5981, %v6001
    %v6066 = vmul.f32 %v5982, %v6001
    %v6067 = vadd.f32 %v6003, %v6019
    %v6068 = vadd.f32 %v6067, %v6035
    %v6069 = vadd.f32 %v6068, %v6051
    %v6070 = vrot.slane %v6069, 4
    %v6071 = vadd.f32 %v6069, %v6070
    %v6072 = vrot.slane %v6071, 2
    %v6073 = vadd.f32 %v6071, %v6072
    %v6074 = vrot.slane %v6073, 1
    %v6075 = vadd.f32 %v6073, %v6074
    %v6076 = vadd.f32 %v6004, %v6020
    %v6077 = vadd.f32 %v6076, %v6036
    %v6078 = vadd.f32 %v6077, %v6052
    %v6079 = vrot.slane %v6078, 4
    %v6080 = vadd.f32 %v6078, %v6079
    %v6081 = vrot.slane %v6080, 2
    %v6082 = vadd.f32 %v6080, %v6081
    %v6083 = vrot.slane %v6082, 1
    %v6084 = vadd.f32 %v6082, %v6083
    %v6085 = vadd.f32 %v6005, %v6021
    %v6086 = vadd.f32 %v6085, %v6037
    %v6087 = vadd.f32 %v6086, %v6053
    %v6088 = vrot.slane %v6087, 4
    %v6089 = vadd.f32 %v6087, %v6088
    %v6090 = vrot.slane %v6089, 2
    %v6091 = vadd.f32 %v6089, %v6090
    %v6092 = vrot.slane %v6091, 1
    %v6093 = vadd.f32 %v6091, %v6092
    %v6094 = vadd.f32 %v6006, %v6022
    %v6095 = vadd.f32 %v6094, %v6038
    %v6096 = vadd.f32 %v6095, %v6054
    %v6097 = vrot.slane %v6096, 4
    %v6098 = vadd.f32 %v6096, %v6097
    %v6099 = vrot.slane %v6098, 2
    %v6100 = vadd.f32 %v6098, %v6099
    %v6101 = vrot.slane %v6100, 1
    %v6102 = vadd.f32 %v6100, %v6101
    %v6103 = vadd.f32 %v6007, %v6023
    %v6104 = vadd.f32 %v6103, %v6039
    %v6105 = vadd.f32 %v6104, %v6055
    %v6106 = vrot.slane %v6105, 4
    %v6107 = vadd.f32 %v6105, %v6106
    %v6108 = vrot.slane %v6107, 2
    %v6109 = vadd.f32 %v6107, %v6108
    %v6110 = vrot.slane %v6109, 1
    %v6111 = vadd.f32 %v6109, %v6110
    %v6112 = vadd.f32 %v6008, %v6024
    %v6113 = vadd.f32 %v6112, %v6040
    %v6114 = vadd.f32 %v6113, %v6056
    %v6115 = vrot.slane %v6114, 4
    %v6116 = vadd.f32 %v6114, %v6115
    %v6117 = vrot.slane %v6116, 2
    %v6118 = vadd.f32 %v6116, %v6117
    %v6119 = vrot.slane %v6118, 1
    %v6120 = vadd.f32 %v6118, %v6119
    %v6121 = vadd.f32 %v6009, %v6025
    %v6122 = vadd.f32 %v6121, %v6041
    %v6123 = vadd.f32 %v6122, %v6057
    %v6124 = vrot.slane %v6123, 4
    %v6125 = vadd.f32 %v6123, %v6124
    %v6126 = vrot.slane %v6125, 2
    %v6127 = vadd.f32 %v6125, %v6126
    %v6128 = vrot.slane %v6127, 1
    %v6129 = vadd.f32 %v6127, %v6128
    %v6130 = vadd.f32 %v6010, %v6026
    %v6131 = vadd.f32 %v6130, %v6042
    %v6132 = vadd.f32 %v6131, %v6058
    %v6133 = vrot.slane %v6132, 4
    %v6134 = vadd.f32 %v6132, %v6133
    %v6135 = vrot.slane %v6134, 2
    %v6136 = vadd.f32 %v6134, %v6135
    %v6137 = vrot.slane %v6136, 1
    %v6138 = vadd.f32 %v6136, %v6137
    %v6139 = vadd.f32 %v6011, %v6027
    %v6140 = vadd.f32 %v6139, %v6043
    %v6141 = vadd.f32 %v6140, %v6059
    %v6142 = vrot.slane %v6141, 4
    %v6143 = vadd.f32 %v6141, %v6142
    %v6144 = vrot.slane %v6143, 2
    %v6145 = vadd.f32 %v6143, %v6144
    %v6146 = vrot.slane %v6145, 1
    %v6147 = vadd.f32 %v6145, %v6146
    %v6148 = vadd.f32 %v6012, %v6028
    %v6149 = vadd.f32 %v6148, %v6044
    %v6150 = vadd.f32 %v6149, %v6060
    %v6151 = vrot.slane %v6150, 4
    %v6152 = vadd.f32 %v6150, %v6151
    %v6153 = vrot.slane %v6152, 2
    %v6154 = vadd.f32 %v6152, %v6153
    %v6155 = vrot.slane %v6154, 1
    %v6156 = vadd.f32 %v6154, %v6155
    %v6157 = vadd.f32 %v6013, %v6029
    %v6158 = vadd.f32 %v6157, %v6045
    %v6159 = vadd.f32 %v6158, %v6061
    %v6160 = vrot.slane %v6159, 4
    %v6161 = vadd.f32 %v6159, %v6160
    %v6162 = vrot.slane %v6161, 2
    %v6163 = vadd.f32 %v6161, %v6162
    %v6164 = vrot.slane %v6163, 1
    %v6165 = vadd.f32 %v6163, %v6164
    %v6166 = vadd.f32 %v6014, %v6030
    %v6167 = vadd.f32 %v6166, %v6046
    %v6168 = vadd.f32 %v6167, %v6062
    %v6169 = vrot.slane %v6168, 4
    %v6170 = vadd.f32 %v6168, %v6169
    %v6171 = vrot.slane %v6170, 2
    %v6172 = vadd.f32 %v6170, %v6171
    %v6173 = vrot.slane %v6172, 1
    %v6174 = vadd.f32 %v6172, %v6173
    %v6175 = vadd.f32 %v6015, %v6031
    %v6176 = vadd.f32 %v6175, %v6047
    %v6177 = vadd.f32 %v6176, %v6063
    %v6178 = vrot.slane %v6177, 4
    %v6179 = vadd.f32 %v6177, %v6178
    %v6180 = vrot.slane %v6179, 2
    %v6181 = vadd.f32 %v6179, %v6180
    %v6182 = vrot.slane %v6181, 1
    %v6183 = vadd.f32 %v6181, %v6182
    %v6184 = vadd.f32 %v6016, %v6032
    %v6185 = vadd.f32 %v6184, %v6048
    %v6186 = vadd.f32 %v6185, %v6064
    %v6187 = vrot.slane %v6186, 4
    %v6188 = vadd.f32 %v6186, %v6187
    %v6189 = vrot.slane %v6188, 2
    %v6190 = vadd.f32 %v6188, %v6189
    %v6191 = vrot.slane %v6190, 1
    %v6192 = vadd.f32 %v6190, %v6191
    %v6193 = vadd.f32 %v6017, %v6033
    %v6194 = vadd.f32 %v6193, %v6049
    %v6195 = vadd.f32 %v6194, %v6065
    %v6196 = vrot.slane %v6195, 4
    %v6197 = vadd.f32 %v6195, %v6196
    %v6198 = vrot.slane %v6197, 2
    %v6199 = vadd.f32 %v6197, %v6198
    %v6200 = vrot.slane %v6199, 1
    %v6201 = vadd.f32 %v6199, %v6200
    %v6202 = vadd.f32 %v6018, %v6034
    %v6203 = vadd.f32 %v6202, %v6050
    %v6204 = vadd.f32 %v6203, %v6066
    %v6205 = vrot.slane %v6204, 4
    %v6206 = vadd.f32 %v6204, %v6205
    %v6207 = vrot.slane %v6206, 2
    %v6208 = vadd.f32 %v6206, %v6207
    %v6209 = vrot.slane %v6208, 1
    %v6210 = vadd.f32 %v6208, %v6209
    %6212 = vset.pattern.permute.xlu0 0
    %6213 = vperm.xlu0 %6212, %v49
    %v6214 = vpop.permute.xlu0 %6213
    %v6216 = vlaneseq
    %v6217 = vshrl.u32 %v6216, 7
    %v6218 = vsub.s32 0, %v6217
    %v6219 = vrot.slane %v6214, %v6218
    %v6220 = vadd.f32 %v6075, %v6219
    %v6221 = vadd.f32 %v6084, %v6219
    %v6222 = vadd.f32 %v6093, %v6219
    %v6223 = vadd.f32 %v6102, %v6219
    %v6224 = vadd.f32 %v6111, %v6219
    %v6225 = vadd.f32 %v6120, %v6219
    %v6226 = vadd.f32 %v6129, %v6219
    %v6227 = vadd.f32 %v6138, %v6219
    %v6228 = vadd.f32 %v6147, %v6219
    %v6229 = vadd.f32 %v6156, %v6219
    %v6230 = vadd.f32 %v6165, %v6219
    %v6231 = vadd.f32 %v6174, %v6219
    %v6232 = vadd.f32 %v6183, %v6219
    %v6233 = vadd.f32 %v6192, %v6219
    %v6234 = vadd.f32 %v6201, %v6219
    %v6235 = vadd.f32 %v6210, %v6219
    %v6252 = vcombine.low %v6220, %v6221
    %v6253 = vcombine.low %v6222, %v6223
    %v6254 = vcombine.low %v6224, %v6225
    %v6255 = vcombine.low %v6226, %v6227
    %v6257 = vunpack.c.l.s4 1966171168
    %v6258 = vunpack.c.0.s8 %v6257
    %v6259 = vlaneseq
    %v6260 = vshrl.u32 %v6259, 7
    %v6261 = vsub.s32 %v6258, %v6260
    %v6262 = vrot.slane %v6252, %v6261
    %v6264 = vunpack.c.l.s4 1966171168
    %v6265 = vunpack.c.0.s8 %v6264
    %v6266 = vlaneseq
    %v6267 = vshrl.u32 %v6266, 7
    %v6268 = vsub.s32 %v6265, %v6267
    %v6269 = vrot.slane %v6253, %v6268
    %v6271 = vunpack.c.l.s4 1966171168
    %v6272 = vunpack.c.0.s8 %v6271
    %v6273 = vlaneseq
    %v6274 = vshrl.u32 %v6273, 7
    %v6275 = vsub.s32 %v6272, %v6274
    %v6276 = vrot.slane %v6254, %v6275
    %v6278 = vunpack.c.l.s4 1966171168
    %v6279 = vunpack.c.0.s8 %v6278
    %v6280 = vlaneseq
    %v6281 = vshrl.u32 %v6280, 7
    %v6282 = vsub.s32 %v6279, %v6281
    %v6283 = vrot.slane %v6255, %v6282
    %v6284 = vcombine.low %v6262, %v6269
    %v6285 = vcombine.low %v6276, %v6283
    %v6287 = vunpack.c.l.s4 1966171168
    %v6288 = vunpack.c.0.s8 %v6287
    %v6289 = vlaneseq
    %v6290 = vshrl.u32 %v6289, 7
    %v6291 = vsub.s32 %v6288, %v6290
    %v6292 = vrot.slane %v6284, %v6291
    %v6294 = vunpack.c.l.s4 1966171168
    %v6295 = vunpack.c.0.s8 %v6294
    %v6296 = vlaneseq
    %v6297 = vshrl.u32 %v6296, 7
    %v6298 = vsub.s32 %v6295, %v6297
    %v6299 = vrot.slane %v6285, %v6298
    %v6300 = vcombine.low %v6292, %v6299
    %v6301 = vcombine.low %v6228, %v6229
    %v6302 = vcombine.low %v6230, %v6231
    %v6303 = vcombine.low %v6232, %v6233
    %v6304 = vcombine.low %v6234, %v6235
    %v6306 = vunpack.c.l.s4 1966171168
    %v6307 = vunpack.c.0.s8 %v6306
    %v6308 = vlaneseq
    %v6309 = vshrl.u32 %v6308, 7
    %v6310 = vsub.s32 %v6307, %v6309
    %v6311 = vrot.slane %v6301, %v6310
    %v6313 = vunpack.c.l.s4 1966171168
    %v6314 = vunpack.c.0.s8 %v6313
    %v6315 = vlaneseq
    %v6316 = vshrl.u32 %v6315, 7
    %v6317 = vsub.s32 %v6314, %v6316
    %v6318 = vrot.slane %v6302, %v6317
    %v6320 = vunpack.c.l.s4 1966171168
    %v6321 = vunpack.c.0.s8 %v6320
    %v6322 = vlaneseq
    %v6323 = vshrl.u32 %v6322, 7
    %v6324 = vsub.s32 %v6321, %v6323
    %v6325 = vrot.slane %v6303, %v6324
    %v6327 = vunpack.c.l.s4 1966171168
    %v6328 = vunpack.c.0.s8 %v6327
    %v6329 = vlaneseq
    %v6330 = vshrl.u32 %v6329, 7
    %v6331 = vsub.s32 %v6328, %v6330
    %v6332 = vrot.slane %v6304, %v6331
    %v6333 = vcombine.low %v6311, %v6318
    %v6334 = vcombine.low %v6325, %v6332
    %v6336 = vunpack.c.l.s4 1966171168
    %v6337 = vunpack.c.0.s8 %v6336
    %v6338 = vlaneseq
    %v6339 = vshrl.u32 %v6338, 7
    %v6340 = vsub.s32 %v6337, %v6339
    %v6341 = vrot.slane %v6333, %v6340
    %v6343 = vunpack.c.l.s4 1966171168
    %v6344 = vunpack.c.0.s8 %v6343
    %v6345 = vlaneseq
    %v6346 = vshrl.u32 %v6345, 7
    %v6347 = vsub.s32 %v6344, %v6346
    %v6348 = vrot.slane %v6334, %v6347
    %v6349 = vcombine.low %v6341, %v6348
    %6352 = vst [vmem:[#allocation3] sm:$0xff] %v6300
    %6353 = vst [vmem:[#allocation3 + $0x8] sm:$0xff] %v6349
    // Predicated region
    $region30: #{_value_layer_pallas_flat.1} parent=1 // pred_check
      _
    $region31: #{_value_layer_pallas_flat.1} parent=1 // pred_check_branch
      %6355 = sbr.rel (0) target = $region33
    $region32: #{_value_layer_pallas_flat.1} parent=1 // pred_region
      %s6357 = ssub.s32 256, 256
      %6358 = vsyncadd [#allocation4], %s6357
      %s6360 = sshll.u32 [#allocation3], 4
      %s6361 = int_to_ptr.vmem [resolvable:$true] %s6360
      %6363 = dma.vmem_to_hbm [thread:$0]  %s6361, 256, %s7, [#allocation4]
    $region33: #{_value_layer_pallas_flat.1} parent=1 // pred_fallthru
      _
    // Predicated region
    $region34: #{_value_layer_pallas_flat.1} parent=1 // pred_check
      _
    $region35: #{_value_layer_pallas_flat.1} parent=1 // pred_check_branch
      %6365 = sbr.rel (0) target = $region37
    $region36: #{_value_layer_pallas_flat.1} parent=1 // pred_region
      %6366 = dma.done [#allocation4], 256
    $region37: #{_value_layer_pallas_flat.1} parent=1 // pred_fallthru
      _
    %6367 = vsyncpa [#allocation4], 1

</llo_original>
